<compile_context>
chip_gen: v6e
topology: v6e:2x2x1
jax: 0.10.0
libtpu: 0.0.40
codegen_flags: <defaults>
</compile_context>

<pallas_src>
import math

import jax
import jax.numpy as jnp
from jax.experimental import pallas as pl
from jax.experimental.pallas import tpu as pltpu

EPS = 1e-5


def _round_up(x, m):
    return ((x + m - 1) // m) * m


# ----------------------------------------------------------------------------
# Kernel bodies (built per-cell via closure over static Ho/Wo)
# ----------------------------------------------------------------------------
def _make_cell_kernel(Ho, Wo, Wp, fused_head):
    """Per-image reduction-cell kernel: 25-tap direct conv + ReLU + folded BN.

    Inputs are 4 phase tensors (even/odd input rows x cols), pre-flattened to
    (rows, Cx) in the wrapper, so every tap is a contiguous row-slice -> one
    (R, Cx)@(Cx, Cpad) MXU dot, accumulated in f32 in VMEM.  Accumulator rows
    follow an (Ho, Wo+2) flattened layout; the 2 extra columns per row are junk
    and are masked (fused head) or dropped by the wrapper (intermediate cells).
    """
    R = Ho * Wp                       # accumulator rows (valid + junk columns)
    inv_pool = 1.0 / float(Ho * Wo)

    taps = []
    for kh in range(5):
        for kw in range(5):
            phase_idx = (kh % 2) * 2 + (kw % 2)
            row_off = (kh // 2) * Wp + (kw // 2)
            taps.append((phase_idx, row_off, kh * 5 + kw))

    def conv_relu_bn(phase_refs, w_ref, b_ref, s_ref, t_ref):
        acc = None
        for phase_idx, off, t in taps:
            lhs = phase_refs[phase_idx][0, pl.ds(off, R), :]          # (R, Cx) bf16
            part = jnp.dot(lhs, w_ref[t], preferred_element_type=jnp.float32)
            acc = part if acc is None else acc + part
        h = jnp.maximum(acc + b_ref[...], 0.0)                        # conv bias + ReLU
        return h * s_ref[...] + t_ref[...]                            # folded BN (eval)

    if not fused_head:
        def kernel(p00, p01, p10, p11, w_ref, b_ref, s_ref, t_ref, o_ref):
            y = conv_relu_bn((p00, p01, p10, p11), w_ref, b_ref, s_ref, t_ref)
            o_ref[0] = y.astype(o_ref.dtype)                          # bf16 writeback
        return kernel

    def kernel(p00, p01, p10, p11, w_ref, b_ref, s_ref, t_ref,
               mask_ref, wh_ref, bh_ref, o_ref):
        y = conv_relu_bn((p00, p01, p10, p11), w_ref, b_ref, s_ref, t_ref)
        # Global average pool over the VALID rows only, accumulated in f32.
        pooled = jnp.sum(y * mask_ref[0], axis=0, keepdims=True) * inv_pool  # (1, Cpad)
        # Folded (1x1 conv + BN + FC) affine head: one tiny MXU dot per image.
        o_ref[0] = (jnp.dot(pooled.astype(jnp.bfloat16), wh_ref[...],
                            preferred_element_type=jnp.float32) + bh_ref[...])
    return kernel


# ----------------------------------------------------------------------------
# One reduction cell (optionally fused with the affine head)
# ----------------------------------------------------------------------------
def _run_cell(x, cell_params, head=None):
    """x: (N, H, W, Cx) NHWC activation (channels may be zero-padded beyond Cin).
       cell_params = (w, b, gamma, beta, rmean, rvar), w: (5, 5, Cin, Cout) HWIO.
       head = None -> returns next activation (N, Ho, Wo, Cpad) bf16.
       head = (W_head, b_head, num_classes) -> returns logits (N, num_classes) f32."""
    w, b, gamma, beta, rmean, rvar = cell_params
    N, H, W, Cx = x.shape
    Cin, Cout = w.shape[2], w.shape[3]
    assert Cx >= Cin
    Ho = (H - 1) // 2 + 1
    Wo = (W - 1) // 2 + 1
    Hp, Wp = Ho + 2, Wo + 2
    R = Ho * Wp                                   # accumulator rows per image
    Cpad = _round_up(Cout, 128)

    # --- wrapper-side phase split (even/odd rows x cols of the padded input) -------
    xp = jnp.pad(x, ((0, 0), (2, 2 * Hp - H - 2), (2, 2 * Wp - W - 2), (0, 0)))
    phases = []
    for p in (0, 1):
        for q in (0, 1):
            ph = xp[:, p::2, q::2, :].reshape(N, Hp * Wp, Cx)
            ph = jnp.pad(ph, ((0, 0), (0, 2), (0, 0)))   # guard rows for max tap offset
            phases.append(ph.astype(jnp.bfloat16))
    P_rows = Hp * Wp + 2

    # --- weights & folded BatchNorm affine -----------------------------------------
    w_full = jnp.pad(w, ((0, 0), (0, 0), (0, Cx - Cin), (0, Cpad - Cout)))
    wmat = w_full.reshape(25, Cx, Cpad).astype(jnp.bfloat16)
    scale = gamma / jnp.sqrt(rvar + EPS)
    shift = beta - rmean * scale
    bp = jnp.pad(b, (0, Cpad - Cout)).reshape(1, Cpad)
    sp = jnp.pad(scale, (0, Cpad - Cout)).reshape(1, Cpad)
    tp = jnp.pad(shift, (0, Cpad - Cout)).reshape(1, Cpad)

    in_specs = [pl.BlockSpec((1, P_rows, Cx), lambda n: (n, 0, 0)) for _ in range(4)]
    in_specs += [
        pl.BlockSpec((25, Cx, Cpad), lambda n: (0, 0, 0)),
        pl.BlockSpec((1, Cpad), lambda n: (0, 0)),
        pl.BlockSpec((1, Cpad), lambda n: (0, 0)),
        pl.BlockSpec((1, Cpad), lambda n: (0, 0)),
    ]
    args = phases + [wmat, bp, sp, tp]

    flops = 2 * N * R * Cx * Cpad * 25
    base_bytes = 4 * N * P_rows * Cx * 2 + 25 * Cx * Cpad * 2 + 3 * Cpad * 4
    cparams = pltpu.CompilerParams(dimension_semantics=("parallel",),
                                   vmem_limit_bytes=32 * 1024 * 1024)

    if head is None:
        kernel = _make_cell_kernel(Ho, Wo, Wp, fused_head=False)
        out = pl.pallas_call(
            kernel,
            out_shape=jax.ShapeDtypeStruct((N, R, Cpad), jnp.bfloat16),
            grid=(N,),
            in_specs=in_specs,
            out_specs=pl.BlockSpec((1, R, Cpad), lambda n: (n, 0, 0)),
            compiler_params=cparams,
            cost_estimate=pl.CostEstimate(
                flops=flops, transcendentals=0,
                bytes_accessed=base_bytes + N * R * Cpad * 2),
        )(*args)
        # Drop the junk columns (conv evaluated past the right edge) kept for layout.
        return out.reshape(N, Ho, Wp, Cpad)[:, :, :Wo, :]

    # Fused final cell: conv + ReLU + BN + global-avg-pool + folded affine head.
    W_head, b_head, num_classes = head
    NCpad = _round_up(num_classes, 128)
    Whp = jnp.pad(W_head, ((0, Cpad - W_head.shape[0]),
                           (0, NCpad - num_classes))).astype(jnp.bfloat16)
    bhp = jnp.pad(b_head, (0, NCpad - num_classes)).reshape(1, NCpad)
    # Row-validity mask for the (Ho, Wo+2)-flattened accumulator layout.
    mask = (jnp.arange(R) % Wp < Wo).astype(jnp.float32).reshape(1, R, 1)

    in_specs += [
        pl.BlockSpec((1, R, 1), lambda n: (0, 0, 0)),
        pl.BlockSpec((Cpad, NCpad), lambda n: (0, 0)),
        pl.BlockSpec((1, NCpad), lambda n: (0, 0)),
    ]
    args += [mask, Whp, bhp]

    kernel = _make_cell_kernel(Ho, Wo, Wp, fused_head=True)
    out = pl.pallas_call(
        kernel,
        out_shape=jax.ShapeDtypeStruct((N, 1, NCpad), jnp.float32),
        grid=(N,),
        in_specs=in_specs,
        out_specs=pl.BlockSpec((1, 1, NCpad), lambda n: (n, 0, 0)),
        compiler_params=cparams,
        cost_estimate=pl.CostEstimate(
            flops=flops + 2 * N * Cpad * NCpad, transcendentals=0,
            bytes_accessed=base_bytes + Cpad * NCpad * 2 + N * NCpad * 4),
    )(*args)
    return out.reshape(N, NCpad)[:, :num_classes]


# ----------------------------------------------------------------------------
# Full Foo forward (Pallas) and parameter init
# ----------------------------------------------------------------------------
def foo_forward(x_nchw, params, num_classes):
    y = jnp.transpose(x_nchw, (0, 2, 3, 1))        # NCHW -> NHWC (channels on lanes)
    cells = params["cells"]
    for cell in cells[:-1]:
        y = _run_cell(y, cell)
    # Fold conv1(1x1) + bn1 + fc1 into one affine map on the pooled features
    # (exact: everything after the last ReLU is affine and pooling is linear).
    s1 = params["g1"] / jnp.sqrt(params["rv1"] + EPS)
    t1 = params["be1"] - params["rm1"] * s1
    W_head = jnp.dot(params["w1"] * s1[None, :], params["wfc"],
                     precision=jax.lax.Precision.HIGHEST)
    b_head = jnp.dot(params["b1"] * s1 + t1, params["wfc"],
                     precision=jax.lax.Precision.HIGHEST) + params["bfc"]
    return _run_cell(y, cells[-1], head=(W_head, b_head, num_classes))


def init_params(key, num_classes, input_channels, input_size):
    reduced = 100
    steps = max(math.floor(math.log2(input_size)) - 5, 1)
    cells = []
    cin = input_channels
    for _ in range(steps):
        key, k1, k2, k3, k4, k5, k6 = jax.random.split(key, 7)
        w = 0.1 * jax.random.normal(k1, (5, 5, cin, reduced), jnp.float32)
        b = 0.1 * jax.random.normal(k2, (reduced,), jnp.float32)
        g = 1.0 + 0.1 * jax.random.normal(k3, (reduced,), jnp.float32)
        be = 0.1 * jax.random.normal(k4, (reduced,), jnp.float32)
        rm = 0.1 * jax.random.normal(k5, (reduced,), jnp.float32)
        rv = 1.0 + jnp.abs(jax.random.normal(k6, (reduced,), jnp.float32))
        cells.append((w, b, g, be, rm, rv))
        cin = reduced
    key, k1, k2, k3, k4, k5, k6, k7, k8 = jax.random.split(key, 9)
    params = {
        "cells": cells,
        "w1": 0.1 * jax.random.normal(k1, (reduced, reduced), jnp.float32),
        "b1": 0.1 * jax.random.normal(k2, (reduced,), jnp.float32),
        "g1": 1.0 + 0.1 * jax.random.normal(k3, (reduced,), jnp.float32),
        "be1": 0.1 * jax.random.normal(k4, (reduced,), jnp.float32),
        "rm1": 0.1 * jax.random.normal(k5, (reduced,), jnp.float32),
        "rv1": 1.0 + jnp.abs(jax.random.normal(k6, (reduced,), jnp.float32)),
        "wfc": 0.1 * jax.random.normal(k7, (reduced, num_classes), jnp.float32),
        "bfc": 0.1 * jax.random.normal(k8, (num_classes,), jnp.float32),
    }
    return params


# Pure-JAX reference (correctness check only; HIGHEST precision, f32 throughout)
def ref_forward(x_nchw, params):
    y = jnp.transpose(x_nchw, (0, 2, 3, 1))
    for (w, b, g, be, rm, rv) in params["cells"]:
        y = jax.lax.conv_general_dilated(
            y, w, window_strides=(2, 2), padding=((2, 2), (2, 2)),
            dimension_numbers=("NHWC", "HWIO", "NHWC"),
            precision=jax.lax.Precision.HIGHEST)
        y = jnp.maximum(y + b, 0.0)
        y = (y - rm) / jnp.sqrt(rv + EPS) * g + be
    y = jnp.einsum("nhwc,cd->nhwd", y, params["w1"],
                   precision=jax.lax.Precision.HIGHEST) + params["b1"]
    y = (y - params["rm1"]) / jnp.sqrt(params["rv1"] + EPS) * params["g1"] + params["be1"]
    y = jnp.mean(y, axis=(1, 2))
    return y @ params["wfc"] + params["bfc"]


if __name__ == "__main__":
    num_classes = 10
    input_channels = 4
    input_size = 16
    batch = 2

    key = jax.random.PRNGKey(0)
    key, xkey = jax.random.split(key)
    x = jax.random.normal(xkey, (batch, input_channels, input_size, input_size),
                          jnp.float32)

    params = init_params(key, num_classes, input_channels, input_size)

    fwd = jax.jit(foo_forward, static_argnums=2)
    out = fwd(x, params, num_classes)
    out = jax.block_until_ready(out)

    assert out.shape == (batch, num_classes), out.shape
    ref = ref_forward(x, params)
    # bf16 MXU inputs (f32 accumulation/pooling) vs a HIGHEST-precision f32 reference.
    assert jnp.allclose(out, ref, atol=2e-2, rtol=2e-2), (out, ref)

    print("KERNEL_OK")
</pallas_src>

<mosaic_0001>
module attributes {stable_mosaic.version = 11 : i64} {
  func.func @kernel(%arg0: i32, %arg1: memref<1x102x4xbf16, #tpu.memory_space<vmem>>, %arg2: memref<1x102x4xbf16, #tpu.memory_space<vmem>>, %arg3: memref<1x102x4xbf16, #tpu.memory_space<vmem>>, %arg4: memref<1x102x4xbf16, #tpu.memory_space<vmem>>, %arg5: memref<25x4x128xbf16, #tpu.memory_space<vmem>>, %arg6: memref<1x128xf32, #tpu.memory_space<vmem>>, %arg7: memref<1x128xf32, #tpu.memory_space<vmem>>, %arg8: memref<1x128xf32, #tpu.memory_space<vmem>>, %arg9: memref<1x80x1xf32, #tpu.memory_space<vmem>>, %arg10: memref<128x128xbf16, #tpu.memory_space<vmem>>, %arg11: memref<1x128xf32, #tpu.memory_space<vmem>>, %arg12: memref<1x1x128xf32, #tpu.memory_space<vmem>>) attributes {dimension_semantics = [#tpu.dimension_semantics<parallel>], iteration_bounds = array<i64: 2>, scalar_prefetch = 0 : i64, scratch_operands = 0 : i64, tpu.core_type = #tpu.core_type<tc>, window_params = [{transform_indices = @transform_0, window_bounds = array<i64: 1, 102, 4>}, {transform_indices = @transform_1, window_bounds = array<i64: 1, 102, 4>}, {transform_indices = @transform_2, window_bounds = array<i64: 1, 102, 4>}, {transform_indices = @transform_3, window_bounds = array<i64: 1, 102, 4>}, {pipeline_mode = #tpu.pipeline_mode<synchronous>, transform_indices = @transform_4, window_bounds = array<i64: 25, 4, 128>}, {pipeline_mode = #tpu.pipeline_mode<synchronous>, transform_indices = @transform_5, window_bounds = array<i64: 1, 128>}, {pipeline_mode = #tpu.pipeline_mode<synchronous>, transform_indices = @transform_6, window_bounds = array<i64: 1, 128>}, {pipeline_mode = #tpu.pipeline_mode<synchronous>, transform_indices = @transform_7, window_bounds = array<i64: 1, 128>}, {pipeline_mode = #tpu.pipeline_mode<synchronous>, transform_indices = @transform_8, window_bounds = array<i64: 1, 80, 1>}, {pipeline_mode = #tpu.pipeline_mode<synchronous>, transform_indices = @transform_9, window_bounds = array<i64: 128, 128>}, {pipeline_mode = #tpu.pipeline_mode<synchronous>, transform_indices = @transform_10, window_bounds = array<i64: 1, 128>}, {transform_indices = @transform_11, window_bounds = array<i64: 1, 1, 128>}]} {
    %c0 = arith.constant 0 : index
    %c0_0 = arith.constant 0 : index
    %c0_1 = arith.constant 0 : index
    %0 = vector.load %arg1[%c0, %c0_0, %c0_1] : memref<1x102x4xbf16, #tpu.memory_space<vmem>>, vector<1x80x4xbf16>
    %1 = vector.shape_cast %0 : vector<1x80x4xbf16> to vector<80x4xbf16>
    %c0_2 = arith.constant 0 : index
    %c0_3 = arith.constant 0 : index
    %c0_4 = arith.constant 0 : index
    %2 = vector.load %arg5[%c0_2, %c0_3, %c0_4] : memref<25x4x128xbf16, #tpu.memory_space<vmem>>, vector<1x4x128xbf16>
    %3 = vector.shape_cast %2 : vector<1x4x128xbf16> to vector<4x128xbf16>
    %cst = arith.constant dense<0.000000e+00> : vector<80x128xf32>
    %4 = tpu.matmul %1, %3, %cst {dimension_numbers = #tpu.dot_dimension_numbers<[1], [0], [0], [1], [0, 0, 1, 1], [], []>} : vector<80x4xbf16>, vector<4x128xbf16>, vector<80x128xf32> -> vector<80x128xf32>
    %c0_5 = arith.constant 0 : index
    %c0_6 = arith.constant 0 : index
    %c0_7 = arith.constant 0 : index
    %5 = vector.load %arg2[%c0_5, %c0_6, %c0_7] : memref<1x102x4xbf16, #tpu.memory_space<vmem>>, vector<1x80x4xbf16>
    %6 = vector.shape_cast %5 : vector<1x80x4xbf16> to vector<80x4xbf16>
    %c1 = arith.constant 1 : index
    %c0_8 = arith.constant 0 : index
    %c0_9 = arith.constant 0 : index
    %7 = vector.load %arg5[%c1, %c0_8, %c0_9] : memref<25x4x128xbf16, #tpu.memory_space<vmem>>, vector<1x4x128xbf16>
    %8 = vector.shape_cast %7 : vector<1x4x128xbf16> to vector<4x128xbf16>
    %cst_10 = arith.constant dense<0.000000e+00> : vector<80x128xf32>
    %9 = tpu.matmul %6, %8, %cst_10 {dimension_numbers = #tpu.dot_dimension_numbers<[1], [0], [0], [1], [0, 0, 1, 1], [], []>} : vector<80x4xbf16>, vector<4x128xbf16>, vector<80x128xf32> -> vector<80x128xf32>
    %10 = arith.addf %4, %9 : vector<80x128xf32>
    %c0_11 = arith.constant 0 : index
    %c1_12 = arith.constant 1 : index
    %c0_13 = arith.constant 0 : index
    %11 = vector.load %arg1[%c0_11, %c1_12, %c0_13] : memref<1x102x4xbf16, #tpu.memory_space<vmem>>, vector<1x80x4xbf16>
    %12 = vector.shape_cast %11 : vector<1x80x4xbf16> to vector<80x4xbf16>
    %c2 = arith.constant 2 : index
    %c0_14 = arith.constant 0 : index
    %c0_15 = arith.constant 0 : index
    %13 = vector.load %arg5[%c2, %c0_14, %c0_15] : memref<25x4x128xbf16, #tpu.memory_space<vmem>>, vector<1x4x128xbf16>
    %14 = vector.shape_cast %13 : vector<1x4x128xbf16> to vector<4x128xbf16>
    %cst_16 = arith.constant dense<0.000000e+00> : vector<80x128xf32>
    %15 = tpu.matmul %12, %14, %cst_16 {dimension_numbers = #tpu.dot_dimension_numbers<[1], [0], [0], [1], [0, 0, 1, 1], [], []>} : vector<80x4xbf16>, vector<4x128xbf16>, vector<80x128xf32> -> vector<80x128xf32>
    %16 = arith.addf %10, %15 : vector<80x128xf32>
    %c0_17 = arith.constant 0 : index
    %c1_18 = arith.constant 1 : index
    %c0_19 = arith.constant 0 : index
    %17 = vector.load %arg2[%c0_17, %c1_18, %c0_19] : memref<1x102x4xbf16, #tpu.memory_space<vmem>>, vector<1x80x4xbf16>
    %18 = vector.shape_cast %17 : vector<1x80x4xbf16> to vector<80x4xbf16>
    %c3 = arith.constant 3 : index
    %c0_20 = arith.constant 0 : index
    %c0_21 = arith.constant 0 : index
    %19 = vector.load %arg5[%c3, %c0_20, %c0_21] : memref<25x4x128xbf16, #tpu.memory_space<vmem>>, vector<1x4x128xbf16>
    %20 = vector.shape_cast %19 : vector<1x4x128xbf16> to vector<4x128xbf16>
    %cst_22 = arith.constant dense<0.000000e+00> : vector<80x128xf32>
    %21 = tpu.matmul %18, %20, %cst_22 {dimension_numbers = #tpu.dot_dimension_numbers<[1], [0], [0], [1], [0, 0, 1, 1], [], []>} : vector<80x4xbf16>, vector<4x128xbf16>, vector<80x128xf32> -> vector<80x128xf32>
    %22 = arith.addf %16, %21 : vector<80x128xf32>
    %c0_23 = arith.constant 0 : index
    %c2_24 = arith.constant 2 : index
    %c0_25 = arith.constant 0 : index
    %23 = vector.load %arg1[%c0_23, %c2_24, %c0_25] : memref<1x102x4xbf16, #tpu.memory_space<vmem>>, vector<1x80x4xbf16>
    %24 = vector.shape_cast %23 : vector<1x80x4xbf16> to vector<80x4xbf16>
    %c4 = arith.constant 4 : index
    %c0_26 = arith.constant 0 : index
    %c0_27 = arith.constant 0 : index
    %25 = vector.load %arg5[%c4, %c0_26, %c0_27] : memref<25x4x128xbf16, #tpu.memory_space<vmem>>, vector<1x4x128xbf16>
    %26 = vector.shape_cast %25 : vector<1x4x128xbf16> to vector<4x128xbf16>
    %cst_28 = arith.constant dense<0.000000e+00> : vector<80x128xf32>
    %27 = tpu.matmul %24, %26, %cst_28 {dimension_numbers = #tpu.dot_dimension_numbers<[1], [0], [0], [1], [0, 0, 1, 1], [], []>} : vector<80x4xbf16>, vector<4x128xbf16>, vector<80x128xf32> -> vector<80x128xf32>
    %28 = arith.addf %22, %27 : vector<80x128xf32>
    %c0_29 = arith.constant 0 : index
    %c0_30 = arith.constant 0 : index
    %c0_31 = arith.constant 0 : index
    %29 = vector.load %arg3[%c0_29, %c0_30, %c0_31] : memref<1x102x4xbf16, #tpu.memory_space<vmem>>, vector<1x80x4xbf16>
    %30 = vector.shape_cast %29 : vector<1x80x4xbf16> to vector<80x4xbf16>
    %c5 = arith.constant 5 : index
    %c0_32 = arith.constant 0 : index
    %c0_33 = arith.constant 0 : index
    %31 = vector.load %arg5[%c5, %c0_32, %c0_33] : memref<25x4x128xbf16, #tpu.memory_space<vmem>>, vector<1x4x128xbf16>
    %32 = vector.shape_cast %31 : vector<1x4x128xbf16> to vector<4x128xbf16>
    %cst_34 = arith.constant dense<0.000000e+00> : vector<80x128xf32>
    %33 = tpu.matmul %30, %32, %cst_34 {dimension_numbers = #tpu.dot_dimension_numbers<[1], [0], [0], [1], [0, 0, 1, 1], [], []>} : vector<80x4xbf16>, vector<4x128xbf16>, vector<80x128xf32> -> vector<80x128xf32>
    %34 = arith.addf %28, %33 : vector<80x128xf32>
    %c0_35 = arith.constant 0 : index
    %c0_36 = arith.constant 0 : index
    %c0_37 = arith.constant 0 : index
    %35 = vector.load %arg4[%c0_35, %c0_36, %c0_37] : memref<1x102x4xbf16, #tpu.memory_space<vmem>>, vector<1x80x4xbf16>
    %36 = vector.shape_cast %35 : vector<1x80x4xbf16> to vector<80x4xbf16>
    %c6 = arith.constant 6 : index
    %c0_38 = arith.constant 0 : index
    %c0_39 = arith.constant 0 : index
    %37 = vector.load %arg5[%c6, %c0_38, %c0_39] : memref<25x4x128xbf16, #tpu.memory_space<vmem>>, vector<1x4x128xbf16>
    %38 = vector.shape_cast %37 : vector<1x4x128xbf16> to vector<4x128xbf16>
    %cst_40 = arith.constant dense<0.000000e+00> : vector<80x128xf32>
    %39 = tpu.matmul %36, %38, %cst_40 {dimension_numbers = #tpu.dot_dimension_numbers<[1], [0], [0], [1], [0, 0, 1, 1], [], []>} : vector<80x4xbf16>, vector<4x128xbf16>, vector<80x128xf32> -> vector<80x128xf32>
    %40 = arith.addf %34, %39 : vector<80x128xf32>
    %c0_41 = arith.constant 0 : index
    %c1_42 = arith.constant 1 : index
    %c0_43 = arith.constant 0 : index
    %41 = vector.load %arg3[%c0_41, %c1_42, %c0_43] : memref<1x102x4xbf16, #tpu.memory_space<vmem>>, vector<1x80x4xbf16>
    %42 = vector.shape_cast %41 : vector<1x80x4xbf16> to vector<80x4xbf16>
    %c7 = arith.constant 7 : index
    %c0_44 = arith.constant 0 : index
    %c0_45 = arith.constant 0 : index
    %43 = vector.load %arg5[%c7, %c0_44, %c0_45] : memref<25x4x128xbf16, #tpu.memory_space<vmem>>, vector<1x4x128xbf16>
    %44 = vector.shape_cast %43 : vector<1x4x128xbf16> to vector<4x128xbf16>
    %cst_46 = arith.constant dense<0.000000e+00> : vector<80x128xf32>
    %45 = tpu.matmul %42, %44, %cst_46 {dimension_numbers = #tpu.dot_dimension_numbers<[1], [0], [0], [1], [0, 0, 1, 1], [], []>} : vector<80x4xbf16>, vector<4x128xbf16>, vector<80x128xf32> -> vector<80x128xf32>
    %46 = arith.addf %40, %45 : vector<80x128xf32>
    %c0_47 = arith.constant 0 : index
    %c1_48 = arith.constant 1 : index
    %c0_49 = arith.constant 0 : index
    %47 = vector.load %arg4[%c0_47, %c1_48, %c0_49] : memref<1x102x4xbf16, #tpu.memory_space<vmem>>, vector<1x80x4xbf16>
    %48 = vector.shape_cast %47 : vector<1x80x4xbf16> to vector<80x4xbf16>
    %c8 = arith.constant 8 : index
    %c0_50 = arith.constant 0 : index
    %c0_51 = arith.constant 0 : index
    %49 = vector.load %arg5[%c8, %c0_50, %c0_51] : memref<25x4x128xbf16, #tpu.memory_space<vmem>>, vector<1x4x128xbf16>
    %50 = vector.shape_cast %49 : vector<1x4x128xbf16> to vector<4x128xbf16>
    %cst_52 = arith.constant dense<0.000000e+00> : vector<80x128xf32>
    %51 = tpu.matmul %48, %50, %cst_52 {dimension_numbers = #tpu.dot_dimension_numbers<[1], [0], [0], [1], [0, 0, 1, 1], [], []>} : vector<80x4xbf16>, vector<4x128xbf16>, vector<80x128xf32> -> vector<80x128xf32>
    %52 = arith.addf %46, %51 : vector<80x128xf32>
    %c0_53 = arith.constant 0 : index
    %c2_54 = arith.constant 2 : index
    %c0_55 = arith.constant 0 : index
    %53 = vector.load %arg3[%c0_53, %c2_54, %c0_55] : memref<1x102x4xbf16, #tpu.memory_space<vmem>>, vector<1x80x4xbf16>
    %54 = vector.shape_cast %53 : vector<1x80x4xbf16> to vector<80x4xbf16>
    %c9 = arith.constant 9 : index
    %c0_56 = arith.constant 0 : index
    %c0_57 = arith.constant 0 : index
    %55 = vector.load %arg5[%c9, %c0_56, %c0_57] : memref<25x4x128xbf16, #tpu.memory_space<vmem>>, vector<1x4x128xbf16>
    %56 = vector.shape_cast %55 : vector<1x4x128xbf16> to vector<4x128xbf16>
    %cst_58 = arith.constant dense<0.000000e+00> : vector<80x128xf32>
    %57 = tpu.matmul %54, %56, %cst_58 {dimension_numbers = #tpu.dot_dimension_numbers<[1], [0], [0], [1], [0, 0, 1, 1], [], []>} : vector<80x4xbf16>, vector<4x128xbf16>, vector<80x128xf32> -> vector<80x128xf32>
    %58 = arith.addf %52, %57 : vector<80x128xf32>
    %c0_59 = arith.constant 0 : index
    %c10 = arith.constant 10 : index
    %c0_60 = arith.constant 0 : index
    %59 = vector.load %arg1[%c0_59, %c10, %c0_60] : memref<1x102x4xbf16, #tpu.memory_space<vmem>>, vector<1x80x4xbf16>
    %60 = vector.shape_cast %59 : vector<1x80x4xbf16> to vector<80x4xbf16>
    %c10_61 = arith.constant 10 : index
    %c0_62 = arith.constant 0 : index
    %c0_63 = arith.constant 0 : index
    %61 = vector.load %arg5[%c10_61, %c0_62, %c0_63] : memref<25x4x128xbf16, #tpu.memory_space<vmem>>, vector<1x4x128xbf16>
    %62 = vector.shape_cast %61 : vector<1x4x128xbf16> to vector<4x128xbf16>
    %cst_64 = arith.constant dense<0.000000e+00> : vector<80x128xf32>
    %63 = tpu.matmul %60, %62, %cst_64 {dimension_numbers = #tpu.dot_dimension_numbers<[1], [0], [0], [1], [0, 0, 1, 1], [], []>} : vector<80x4xbf16>, vector<4x128xbf16>, vector<80x128xf32> -> vector<80x128xf32>
    %64 = arith.addf %58, %63 : vector<80x128xf32>
    %c0_65 = arith.constant 0 : index
    %c10_66 = arith.constant 10 : index
    %c0_67 = arith.constant 0 : index
    %65 = vector.load %arg2[%c0_65, %c10_66, %c0_67] : memref<1x102x4xbf16, #tpu.memory_space<vmem>>, vector<1x80x4xbf16>
    %66 = vector.shape_cast %65 : vector<1x80x4xbf16> to vector<80x4xbf16>
    %c11 = arith.constant 11 : index
    %c0_68 = arith.constant 0 : index
    %c0_69 = arith.constant 0 : index
    %67 = vector.load %arg5[%c11, %c0_68, %c0_69] : memref<25x4x128xbf16, #tpu.memory_space<vmem>>, vector<1x4x128xbf16>
    %68 = vector.shape_cast %67 : vector<1x4x128xbf16> to vector<4x128xbf16>
    %cst_70 = arith.constant dense<0.000000e+00> : vector<80x128xf32>
    %69 = tpu.matmul %66, %68, %cst_70 {dimension_numbers = #tpu.dot_dimension_numbers<[1], [0], [0], [1], [0, 0, 1, 1], [], []>} : vector<80x4xbf16>, vector<4x128xbf16>, vector<80x128xf32> -> vector<80x128xf32>
    %70 = arith.addf %64, %69 : vector<80x128xf32>
    %c0_71 = arith.constant 0 : index
    %c11_72 = arith.constant 11 : index
    %c0_73 = arith.constant 0 : index
    %71 = vector.load %arg1[%c0_71, %c11_72, %c0_73] : memref<1x102x4xbf16, #tpu.memory_space<vmem>>, vector<1x80x4xbf16>
    %72 = vector.shape_cast %71 : vector<1x80x4xbf16> to vector<80x4xbf16>
    %c12 = arith.constant 12 : index
    %c0_74 = arith.constant 0 : index
    %c0_75 = arith.constant 0 : index
    %73 = vector.load %arg5[%c12, %c0_74, %c0_75] : memref<25x4x128xbf16, #tpu.memory_space<vmem>>, vector<1x4x128xbf16>
    %74 = vector.shape_cast %73 : vector<1x4x128xbf16> to vector<4x128xbf16>
    %cst_76 = arith.constant dense<0.000000e+00> : vector<80x128xf32>
    %75 = tpu.matmul %72, %74, %cst_76 {dimension_numbers = #tpu.dot_dimension_numbers<[1], [0], [0], [1], [0, 0, 1, 1], [], []>} : vector<80x4xbf16>, vector<4x128xbf16>, vector<80x128xf32> -> vector<80x128xf32>
    %76 = arith.addf %70, %75 : vector<80x128xf32>
    %c0_77 = arith.constant 0 : index
    %c11_78 = arith.constant 11 : index
    %c0_79 = arith.constant 0 : index
    %77 = vector.load %arg2[%c0_77, %c11_78, %c0_79] : memref<1x102x4xbf16, #tpu.memory_space<vmem>>, vector<1x80x4xbf16>
    %78 = vector.shape_cast %77 : vector<1x80x4xbf16> to vector<80x4xbf16>
    %c13 = arith.constant 13 : index
    %c0_80 = arith.constant 0 : index
    %c0_81 = arith.constant 0 : index
    %79 = vector.load %arg5[%c13, %c0_80, %c0_81] : memref<25x4x128xbf16, #tpu.memory_space<vmem>>, vector<1x4x128xbf16>
    %80 = vector.shape_cast %79 : vector<1x4x128xbf16> to vector<4x128xbf16>
    %cst_82 = arith.constant dense<0.000000e+00> : vector<80x128xf32>
    %81 = tpu.matmul %78, %80, %cst_82 {dimension_numbers = #tpu.dot_dimension_numbers<[1], [0], [0], [1], [0, 0, 1, 1], [], []>} : vector<80x4xbf16>, vector<4x128xbf16>, vector<80x128xf32> -> vector<80x128xf32>
    %82 = arith.addf %76, %81 : vector<80x128xf32>
    %c0_83 = arith.constant 0 : index
    %c12_84 = arith.constant 12 : index
    %c0_85 = arith.constant 0 : index
    %83 = vector.load %arg1[%c0_83, %c12_84, %c0_85] : memref<1x102x4xbf16, #tpu.memory_space<vmem>>, vector<1x80x4xbf16>
    %84 = vector.shape_cast %83 : vector<1x80x4xbf16> to vector<80x4xbf16>
    %c14 = arith.constant 14 : index
    %c0_86 = arith.constant 0 : index
    %c0_87 = arith.constant 0 : index
    %85 = vector.load %arg5[%c14, %c0_86, %c0_87] : memref<25x4x128xbf16, #tpu.memory_space<vmem>>, vector<1x4x128xbf16>
    %86 = vector.shape_cast %85 : vector<1x4x128xbf16> to vector<4x128xbf16>
    %cst_88 = arith.constant dense<0.000000e+00> : vector<80x128xf32>
    %87 = tpu.matmul %84, %86, %cst_88 {dimension_numbers = #tpu.dot_dimension_numbers<[1], [0], [0], [1], [0, 0, 1, 1], [], []>} : vector<80x4xbf16>, vector<4x128xbf16>, vector<80x128xf32> -> vector<80x128xf32>
    %88 = arith.addf %82, %87 : vector<80x128xf32>
    %c0_89 = arith.constant 0 : index
    %c10_90 = arith.constant 10 : index
    %c0_91 = arith.constant 0 : index
    %89 = vector.load %arg3[%c0_89, %c10_90, %c0_91] : memref<1x102x4xbf16, #tpu.memory_space<vmem>>, vector<1x80x4xbf16>
    %90 = vector.shape_cast %89 : vector<1x80x4xbf16> to vector<80x4xbf16>
    %c15 = arith.constant 15 : index
    %c0_92 = arith.constant 0 : index
    %c0_93 = arith.constant 0 : index
    %91 = vector.load %arg5[%c15, %c0_92, %c0_93] : memref<25x4x128xbf16, #tpu.memory_space<vmem>>, vector<1x4x128xbf16>
    %92 = vector.shape_cast %91 : vector<1x4x128xbf16> to vector<4x128xbf16>
    %cst_94 = arith.constant dense<0.000000e+00> : vector<80x128xf32>
    %93 = tpu.matmul %90, %92, %cst_94 {dimension_numbers = #tpu.dot_dimension_numbers<[1], [0], [0], [1], [0, 0, 1, 1], [], []>} : vector<80x4xbf16>, vector<4x128xbf16>, vector<80x128xf32> -> vector<80x128xf32>
    %94 = arith.addf %88, %93 : vector<80x128xf32>
    %c0_95 = arith.constant 0 : index
    %c10_96 = arith.constant 10 : index
    %c0_97 = arith.constant 0 : index
    %95 = vector.load %arg4[%c0_95, %c10_96, %c0_97] : memref<1x102x4xbf16, #tpu.memory_space<vmem>>, vector<1x80x4xbf16>
    %96 = vector.shape_cast %95 : vector<1x80x4xbf16> to vector<80x4xbf16>
    %c16 = arith.constant 16 : index
    %c0_98 = arith.constant 0 : index
    %c0_99 = arith.constant 0 : index
    %97 = vector.load %arg5[%c16, %c0_98, %c0_99] : memref<25x4x128xbf16, #tpu.memory_space<vmem>>, vector<1x4x128xbf16>
    %98 = vector.shape_cast %97 : vector<1x4x128xbf16> to vector<4x128xbf16>
    %cst_100 = arith.constant dense<0.000000e+00> : vector<80x128xf32>
    %99 = tpu.matmul %96, %98, %cst_100 {dimension_numbers = #tpu.dot_dimension_numbers<[1], [0], [0], [1], [0, 0, 1, 1], [], []>} : vector<80x4xbf16>, vector<4x128xbf16>, vector<80x128xf32> -> vector<80x128xf32>
    %100 = arith.addf %94, %99 : vector<80x128xf32>
    %c0_101 = arith.constant 0 : index
    %c11_102 = arith.constant 11 : index
    %c0_103 = arith.constant 0 : index
    %101 = vector.load %arg3[%c0_101, %c11_102, %c0_103] : memref<1x102x4xbf16, #tpu.memory_space<vmem>>, vector<1x80x4xbf16>
    %102 = vector.shape_cast %101 : vector<1x80x4xbf16> to vector<80x4xbf16>
    %c17 = arith.constant 17 : index
    %c0_104 = arith.constant 0 : index
    %c0_105 = arith.constant 0 : index
    %103 = vector.load %arg5[%c17, %c0_104, %c0_105] : memref<25x4x128xbf16, #tpu.memory_space<vmem>>, vector<1x4x128xbf16>
    %104 = vector.shape_cast %103 : vector<1x4x128xbf16> to vector<4x128xbf16>
    %cst_106 = arith.constant dense<0.000000e+00> : vector<80x128xf32>
    %105 = tpu.matmul %102, %104, %cst_106 {dimension_numbers = #tpu.dot_dimension_numbers<[1], [0], [0], [1], [0, 0, 1, 1], [], []>} : vector<80x4xbf16>, vector<4x128xbf16>, vector<80x128xf32> -> vector<80x128xf32>
    %106 = arith.addf %100, %105 : vector<80x128xf32>
    %c0_107 = arith.constant 0 : index
    %c11_108 = arith.constant 11 : index
    %c0_109 = arith.constant 0 : index
    %107 = vector.load %arg4[%c0_107, %c11_108, %c0_109] : memref<1x102x4xbf16, #tpu.memory_space<vmem>>, vector<1x80x4xbf16>
    %108 = vector.shape_cast %107 : vector<1x80x4xbf16> to vector<80x4xbf16>
    %c18 = arith.constant 18 : index
    %c0_110 = arith.constant 0 : index
    %c0_111 = arith.constant 0 : index
    %109 = vector.load %arg5[%c18, %c0_110, %c0_111] : memref<25x4x128xbf16, #tpu.memory_space<vmem>>, vector<1x4x128xbf16>
    %110 = vector.shape_cast %109 : vector<1x4x128xbf16> to vector<4x128xbf16>
    %cst_112 = arith.constant dense<0.000000e+00> : vector<80x128xf32>
    %111 = tpu.matmul %108, %110, %cst_112 {dimension_numbers = #tpu.dot_dimension_numbers<[1], [0], [0], [1], [0, 0, 1, 1], [], []>} : vector<80x4xbf16>, vector<4x128xbf16>, vector<80x128xf32> -> vector<80x128xf32>
    %112 = arith.addf %106, %111 : vector<80x128xf32>
    %c0_113 = arith.constant 0 : index
    %c12_114 = arith.constant 12 : index
    %c0_115 = arith.constant 0 : index
    %113 = vector.load %arg3[%c0_113, %c12_114, %c0_115] : memref<1x102x4xbf16, #tpu.memory_space<vmem>>, vector<1x80x4xbf16>
    %114 = vector.shape_cast %113 : vector<1x80x4xbf16> to vector<80x4xbf16>
    %c19 = arith.constant 19 : index
    %c0_116 = arith.constant 0 : index
    %c0_117 = arith.constant 0 : index
    %115 = vector.load %arg5[%c19, %c0_116, %c0_117] : memref<25x4x128xbf16, #tpu.memory_space<vmem>>, vector<1x4x128xbf16>
    %116 = vector.shape_cast %115 : vector<1x4x128xbf16> to vector<4x128xbf16>
    %cst_118 = arith.constant dense<0.000000e+00> : vector<80x128xf32>
    %117 = tpu.matmul %114, %116, %cst_118 {dimension_numbers = #tpu.dot_dimension_numbers<[1], [0], [0], [1], [0, 0, 1, 1], [], []>} : vector<80x4xbf16>, vector<4x128xbf16>, vector<80x128xf32> -> vector<80x128xf32>
    %118 = arith.addf %112, %117 : vector<80x128xf32>
    %c0_119 = arith.constant 0 : index
    %c20 = arith.constant 20 : index
    %c0_120 = arith.constant 0 : index
    %119 = vector.load %arg1[%c0_119, %c20, %c0_120] : memref<1x102x4xbf16, #tpu.memory_space<vmem>>, vector<1x80x4xbf16>
    %120 = vector.shape_cast %119 : vector<1x80x4xbf16> to vector<80x4xbf16>
    %c20_121 = arith.constant 20 : index
    %c0_122 = arith.constant 0 : index
    %c0_123 = arith.constant 0 : index
    %121 = vector.load %arg5[%c20_121, %c0_122, %c0_123] : memref<25x4x128xbf16, #tpu.memory_space<vmem>>, vector<1x4x128xbf16>
    %122 = vector.shape_cast %121 : vector<1x4x128xbf16> to vector<4x128xbf16>
    %cst_124 = arith.constant dense<0.000000e+00> : vector<80x128xf32>
    %123 = tpu.matmul %120, %122, %cst_124 {dimension_numbers = #tpu.dot_dimension_numbers<[1], [0], [0], [1], [0, 0, 1, 1], [], []>} : vector<80x4xbf16>, vector<4x128xbf16>, vector<80x128xf32> -> vector<80x128xf32>
    %124 = arith.addf %118, %123 : vector<80x128xf32>
    %c0_125 = arith.constant 0 : index
    %c20_126 = arith.constant 20 : index
    %c0_127 = arith.constant 0 : index
    %125 = vector.load %arg2[%c0_125, %c20_126, %c0_127] : memref<1x102x4xbf16, #tpu.memory_space<vmem>>, vector<1x80x4xbf16>
    %126 = vector.shape_cast %125 : vector<1x80x4xbf16> to vector<80x4xbf16>
    %c21 = arith.constant 21 : index
    %c0_128 = arith.constant 0 : index
    %c0_129 = arith.constant 0 : index
    %127 = vector.load %arg5[%c21, %c0_128, %c0_129] : memref<25x4x128xbf16, #tpu.memory_space<vmem>>, vector<1x4x128xbf16>
    %128 = vector.shape_cast %127 : vector<1x4x128xbf16> to vector<4x128xbf16>
    %cst_130 = arith.constant dense<0.000000e+00> : vector<80x128xf32>
    %129 = tpu.matmul %126, %128, %cst_130 {dimension_numbers = #tpu.dot_dimension_numbers<[1], [0], [0], [1], [0, 0, 1, 1], [], []>} : vector<80x4xbf16>, vector<4x128xbf16>, vector<80x128xf32> -> vector<80x128xf32>
    %130 = arith.addf %124, %129 : vector<80x128xf32>
    %c0_131 = arith.constant 0 : index
    %c21_132 = arith.constant 21 : index
    %c0_133 = arith.constant 0 : index
    %131 = vector.load %arg1[%c0_131, %c21_132, %c0_133] : memref<1x102x4xbf16, #tpu.memory_space<vmem>>, vector<1x80x4xbf16>
    %132 = vector.shape_cast %131 : vector<1x80x4xbf16> to vector<80x4xbf16>
    %c22 = arith.constant 22 : index
    %c0_134 = arith.constant 0 : index
    %c0_135 = arith.constant 0 : index
    %133 = vector.load %arg5[%c22, %c0_134, %c0_135] : memref<25x4x128xbf16, #tpu.memory_space<vmem>>, vector<1x4x128xbf16>
    %134 = vector.shape_cast %133 : vector<1x4x128xbf16> to vector<4x128xbf16>
    %cst_136 = arith.constant dense<0.000000e+00> : vector<80x128xf32>
    %135 = tpu.matmul %132, %134, %cst_136 {dimension_numbers = #tpu.dot_dimension_numbers<[1], [0], [0], [1], [0, 0, 1, 1], [], []>} : vector<80x4xbf16>, vector<4x128xbf16>, vector<80x128xf32> -> vector<80x128xf32>
    %136 = arith.addf %130, %135 : vector<80x128xf32>
    %c0_137 = arith.constant 0 : index
    %c21_138 = arith.constant 21 : index
    %c0_139 = arith.constant 0 : index
    %137 = vector.load %arg2[%c0_137, %c21_138, %c0_139] : memref<1x102x4xbf16, #tpu.memory_space<vmem>>, vector<1x80x4xbf16>
    %138 = vector.shape_cast %137 : vector<1x80x4xbf16> to vector<80x4xbf16>
    %c23 = arith.constant 23 : index
    %c0_140 = arith.constant 0 : index
    %c0_141 = arith.constant 0 : index
    %139 = vector.load %arg5[%c23, %c0_140, %c0_141] : memref<25x4x128xbf16, #tpu.memory_space<vmem>>, vector<1x4x128xbf16>
    %140 = vector.shape_cast %139 : vector<1x4x128xbf16> to vector<4x128xbf16>
    %cst_142 = arith.constant dense<0.000000e+00> : vector<80x128xf32>
    %141 = tpu.matmul %138, %140, %cst_142 {dimension_numbers = #tpu.dot_dimension_numbers<[1], [0], [0], [1], [0, 0, 1, 1], [], []>} : vector<80x4xbf16>, vector<4x128xbf16>, vector<80x128xf32> -> vector<80x128xf32>
    %142 = arith.addf %136, %141 : vector<80x128xf32>
    %c0_143 = arith.constant 0 : index
    %c22_144 = arith.constant 22 : index
    %c0_145 = arith.constant 0 : index
    %143 = vector.load %arg1[%c0_143, %c22_144, %c0_145] : memref<1x102x4xbf16, #tpu.memory_space<vmem>>, vector<1x80x4xbf16>
    %144 = vector.shape_cast %143 : vector<1x80x4xbf16> to vector<80x4xbf16>
    %c24 = arith.constant 24 : index
    %c0_146 = arith.constant 0 : index
    %c0_147 = arith.constant 0 : index
    %145 = vector.load %arg5[%c24, %c0_146, %c0_147] : memref<25x4x128xbf16, #tpu.memory_space<vmem>>, vector<1x4x128xbf16>
    %146 = vector.shape_cast %145 : vector<1x4x128xbf16> to vector<4x128xbf16>
    %cst_148 = arith.constant dense<0.000000e+00> : vector<80x128xf32>
    %147 = tpu.matmul %144, %146, %cst_148 {dimension_numbers = #tpu.dot_dimension_numbers<[1], [0], [0], [1], [0, 0, 1, 1], [], []>} : vector<80x4xbf16>, vector<4x128xbf16>, vector<80x128xf32> -> vector<80x128xf32>
    %148 = arith.addf %142, %147 : vector<80x128xf32>
    %c0_149 = arith.constant 0 : index
    %c0_150 = arith.constant 0 : index
    %149 = vector.load %arg6[%c0_149, %c0_150] : memref<1x128xf32, #tpu.memory_space<vmem>>, vector<1x128xf32>
    %150 = vector.broadcast %149 : vector<1x128xf32> to vector<80x128xf32>
    %151 = arith.addf %148, %150 : vector<80x128xf32>
    %cst_151 = arith.constant 0.000000e+00 : f32
    %152 = vector.broadcast %cst_151 : f32 to vector<80x128xf32>
    %153 = arith.maximumf %151, %152 : vector<80x128xf32>
    %c0_152 = arith.constant 0 : index
    %c0_153 = arith.constant 0 : index
    %154 = vector.load %arg7[%c0_152, %c0_153] : memref<1x128xf32, #tpu.memory_space<vmem>>, vector<1x128xf32>
    %155 = vector.broadcast %154 : vector<1x128xf32> to vector<80x128xf32>
    %156 = arith.mulf %153, %155 : vector<80x128xf32>
    %c0_154 = arith.constant 0 : index
    %c0_155 = arith.constant 0 : index
    %157 = vector.load %arg8[%c0_154, %c0_155] : memref<1x128xf32, #tpu.memory_space<vmem>>, vector<1x128xf32>
    %158 = vector.broadcast %157 : vector<1x128xf32> to vector<80x128xf32>
    %159 = arith.addf %156, %158 : vector<80x128xf32>
    %c0_156 = arith.constant 0 : index
    %c0_157 = arith.constant 0 : index
    %c0_158 = arith.constant 0 : index
    %160 = vector.load %arg9[%c0_156, %c0_157, %c0_158] : memref<1x80x1xf32, #tpu.memory_space<vmem>>, vector<1x80x1xf32>
    %161 = vector.shape_cast %160 : vector<1x80x1xf32> to vector<80x1xf32>
    %162 = vector.broadcast %161 : vector<80x1xf32> to vector<80x128xf32>
    %163 = arith.mulf %159, %162 : vector<80x128xf32>
    %cst_159 = arith.constant dense<0.000000e+00> : vector<128xf32>
    %164 = vector.multi_reduction <add>, %163, %cst_159 [0] : vector<80x128xf32> to vector<128xf32>
    %165 = vector.shape_cast %164 : vector<128xf32> to vector<1x128xf32>
    %cst_160 = arith.constant 1.562500e-02 : f32
    %166 = vector.broadcast %cst_160 : f32 to vector<1x128xf32>
    %167 = arith.mulf %165, %166 : vector<1x128xf32>
    %168 = arith.truncf %167 : vector<1x128xf32> to vector<1x128xbf16>
    %c0_161 = arith.constant 0 : index
    %c0_162 = arith.constant 0 : index
    %169 = vector.load %arg10[%c0_161, %c0_162] : memref<128x128xbf16, #tpu.memory_space<vmem>>, vector<128x128xbf16>
    %cst_163 = arith.constant dense<0.000000e+00> : vector<1x128xf32>
    %170 = tpu.matmul %168, %169, %cst_163 {dimension_numbers = #tpu.dot_dimension_numbers<[1], [0], [0], [1], [0, 0, 1, 1], [], []>} : vector<1x128xbf16>, vector<128x128xbf16>, vector<1x128xf32> -> vector<1x128xf32>
    %c0_164 = arith.constant 0 : index
    %c0_165 = arith.constant 0 : index
    %171 = vector.load %arg11[%c0_164, %c0_165] : memref<1x128xf32, #tpu.memory_space<vmem>>, vector<1x128xf32>
    %172 = arith.addf %170, %171 : vector<1x128xf32>
    %c0_166 = arith.constant 0 : index
    %c0_167 = arith.constant 0 : index
    %c0_168 = arith.constant 0 : index
    %173 = vector.load %arg12[%c0_166, %c0_167, %c0_168] : memref<1x1x128xf32, #tpu.memory_space<vmem>>, vector<1x1x128xf32>
    %174 = vector.shape_cast %173 : vector<1x1x128xf32> to vector<1x128xf32>
    %175 = vector.shape_cast %172 : vector<1x128xf32> to vector<1x1x128xf32>
    tpu.vector_store %arg12[%c0_166, %c0_167, %c0_168], %175 {strides = array<i32>} : memref<1x1x128xf32, #tpu.memory_space<vmem>>, vector<1x1x128xf32>,
    return
  }
  func.func @transform_0(%arg0: i32) -> (i32, i32, i32) {
    %c0_i32 = arith.constant 0 : i32
    %c0_i32_0 = arith.constant 0 : i32
    %c0_i32_1 = arith.constant 0 : i32
    return %arg0, %c0_i32, %c0_i32_0 : i32, i32, i32
  }
  func.func @transform_1(%arg0: i32) -> (i32, i32, i32) {
    %c0_i32 = arith.constant 0 : i32
    %c0_i32_0 = arith.constant 0 : i32
    %c0_i32_1 = arith.constant 0 : i32
    return %arg0, %c0_i32, %c0_i32_0 : i32, i32, i32
  }
  func.func @transform_2(%arg0: i32) -> (i32, i32, i32) {
    %c0_i32 = arith.constant 0 : i32
    %c0_i32_0 = arith.constant 0 : i32
    %c0_i32_1 = arith.constant 0 : i32
    return %arg0, %c0_i32, %c0_i32_0 : i32, i32, i32
  }
  func.func @transform_3(%arg0: i32) -> (i32, i32, i32) {
    %c0_i32 = arith.constant 0 : i32
    %c0_i32_0 = arith.constant 0 : i32
    %c0_i32_1 = arith.constant 0 : i32
    return %arg0, %c0_i32, %c0_i32_0 : i32, i32, i32
  }
  func.func @transform_4(%arg0: i32) -> (i32, i32, i32) {
    %c0_i32 = arith.constant 0 : i32
    %c0_i32_0 = arith.constant 0 : i32
    %c0_i32_1 = arith.constant 0 : i32
    %c0_i32_2 = arith.constant 0 : i32
    return %c0_i32, %c0_i32_0, %c0_i32_1 : i32, i32, i32
  }
  func.func @transform_5(%arg0: i32) -> (i32, i32) {
    %c0_i32 = arith.constant 0 : i32
    %c0_i32_0 = arith.constant 0 : i32
    %c0_i32_1 = arith.constant 0 : i32
    return %c0_i32, %c0_i32_0 : i32, i32
  }
  func.func @transform_6(%arg0: i32) -> (i32, i32) {
    %c0_i32 = arith.constant 0 : i32
    %c0_i32_0 = arith.constant 0 : i32
    %c0_i32_1 = arith.constant 0 : i32
    return %c0_i32, %c0_i32_0 : i32, i32
  }
  func.func @transform_7(%arg0: i32) -> (i32, i32) {
    %c0_i32 = arith.constant 0 : i32
    %c0_i32_0 = arith.constant 0 : i32
    %c0_i32_1 = arith.constant 0 : i32
    return %c0_i32, %c0_i32_0 : i32, i32
  }
  func.func @transform_8(%arg0: i32) -> (i32, i32, i32) {
    %c0_i32 = arith.constant 0 : i32
    %c0_i32_0 = arith.constant 0 : i32
    %c0_i32_1 = arith.constant 0 : i32
    %c0_i32_2 = arith.constant 0 : i32
    return %c0_i32, %c0_i32_0, %c0_i32_1 : i32, i32, i32
  }
  func.func @transform_9(%arg0: i32) -> (i32, i32) {
    %c0_i32 = arith.constant 0 : i32
    %c0_i32_0 = arith.constant 0 : i32
    %c0_i32_1 = arith.constant 0 : i32
    return %c0_i32, %c0_i32_0 : i32, i32
  }
  func.func @transform_10(%arg0: i32) -> (i32, i32) {
    %c0_i32 = arith.constant 0 : i32
    %c0_i32_0 = arith.constant 0 : i32
    %c0_i32_1 = arith.constant 0 : i32
    return %c0_i32, %c0_i32_0 : i32, i32
  }
  func.func @transform_11(%arg0: i32) -> (i32, i32, i32) {
    %c0_i32 = arith.constant 0 : i32
    %c0_i32_0 = arith.constant 0 : i32
    %c0_i32_1 = arith.constant 0 : i32
    return %arg0, %c0_i32, %c0_i32_0 : i32, i32, i32
  }
}

</mosaic_0001>

<llo_original>
// kernel: foo_forward.1
$region0: #{foo_forward.1}
  #allocation0 [shape = 'u32[]', space=smem, size = 0x4, offset = 0x4, fixed_abs, tag = 'smem constant byte address 0x4 - core index']
  #allocation1 [shape = 'u32[144,128]{1,0:T(1,128)}', space=vmem, size = 0x12000, scoped, tag = 'internal scratch']
  %s0 = inlined_call_operand.vmem [shape: bf16[2,102,4], index: 0, kind: input, shape index: {}]
  %s1 = inlined_call_operand.vmem [shape: bf16[2,102,4], index: 1, kind: input, shape index: {}]
  %s2 = inlined_call_operand.vmem [shape: bf16[2,102,4], index: 2, kind: input, shape index: {}]
  %s3 = inlined_call_operand.vmem [shape: bf16[2,102,4], index: 3, kind: input, shape index: {}]
  %s4 = inlined_call_operand.vmem [shape: bf16[25,4,128], index: 4, kind: input, shape index: {}]
  %s5 = inlined_call_operand.vmem [shape: f32[1,128], index: 5, kind: input, shape index: {}]
  %s6 = inlined_call_operand.vmem [shape: f32[1,128], index: 6, kind: input, shape index: {}]
  %s7 = inlined_call_operand.vmem [shape: f32[1,128], index: 7, kind: input, shape index: {}]
  %s8 = inlined_call_operand.vmem [shape: f32[1,80,1], index: 8, kind: input, shape index: {}]
  %s9 = inlined_call_operand.vmem [shape: bf16[128,128], index: 9, kind: input, shape index: {}]
  %s10 = inlined_call_operand.vmem [shape: f32[1,128], index: 10, kind: input, shape index: {}]
  %s11 = inlined_call_operand.hbm [shape: f32[2,1,128], index: 11, kind: output, shape index: {}]
  %s12 = sld [smem:[#allocation0]]
  $region77: #{foo_forward.1} parent=0
    _
  %s14 = ssub.s32 1, %s12
  %s15 = scalar_select 0, %s14, %s12
  $region1: #{foo_forward.1} parent=0
    #allocation2 [shape = 'u8[1024]{0}', space=vmem, size = 0x400, scoped, tag = 'output window, operand 0']
    #allocation3 [shape = 's32[2]{0}', space=sflag, size = 0x8, scoped, tag = 'scoped memory for foo_forward.1']
    %16 = vsyncpa [#allocation3], 0
    %s17 = scalar_lea.sflag [#allocation3], 1
    %18 = vsyncpa %s17, 0
    loop: start=0, step=1, limit=4
    $region2: #{foo_forward.1} parent=1 // loop_pre_header
      _
    $region3: #{foo_forward.1} parent=1 // loop_header
      %s20 = sphi 0, %s24
      %p21 = scmp.ge.s32.totalorder %s20, 4
      %s30 = sphi 0, %s32
      %s33 = sphi 0, %s30
      %s34 = sphi 0, %s33
      %s50 = sphi 0, %s34
      %s56 = sphi 0, %s58
      %s59 = sphi 0, %s56
      %s60 = sphi 0, %s59
      %s76 = sphi 0, %s60
      %s82 = sphi 0, %s84
      %s85 = sphi 0, %s82
      %s86 = sphi 0, %s85
      %s102 = sphi 0, %s86
      %s108 = sphi 0, %s110
      %s111 = sphi 0, %s108
      %s112 = sphi 0, %s111
      %s128 = sphi 0, %s112
      %s132 = sphi 0, %s132
      %s134 = sphi 0, %s132
      %s135 = sphi 0, %s134
      %s149 = sphi 0, %s135
      %s153 = sphi 0, %s153
      %s155 = sphi 0, %s153
      %s156 = sphi 0, %s155
      %s170 = sphi 0, %s156
      %s174 = sphi 0, %s174
      %s176 = sphi 0, %s174
      %s177 = sphi 0, %s176
      %s191 = sphi 0, %s177
      %s195 = sphi 0, %s195
      %s197 = sphi 0, %s195
      %s198 = sphi 0, %s197
      %s212 = sphi 0, %s198
      %s216 = sphi 0, %s216
      %s218 = sphi 0, %s216
      %s219 = sphi 0, %s218
      %s233 = sphi 0, %s219
      %s237 = sphi 0, %s237
      %s239 = sphi 0, %s237
      %s240 = sphi 0, %s239
      %s254 = sphi 0, %s240
      %s258 = sphi 0, %s258
      %s260 = sphi 0, %s258
      %s261 = sphi 0, %s260
      %s275 = sphi 0, %s261
      %s281 = sphi 0, %s283
      %s284 = sphi 0, %s281
      %s285 = sphi 0, %s284
      %s301 = sphi 0, %s285
    $region4: #{foo_forward.1} parent=1 // loop_header_branch
      %23 = sbr.rel (%p21) target = $region8
    $region5: #{foo_forward.1} parent=1 // loop_body
      %s25 = ssub.s32 %s20, 1
      %s26 = ssub.s32 %s20, 2
      %s27 = sadd.s32 %s20, 1
      %s28 = ssub.s32 %s20, %s27
      %p29 = scmp.eq.s32.totalorder %s28, 0
      %s31 = sadd.s32 %s30, 1
      %s32 = scalar_select %p29, %s30, %s31
      %p35 = pneg %p29
      %p36 = scmp.eq.s32.totalorder %s20, 1
      %p37 = por %p35, %p36
      %p38 = scmp.ne.s32.totalorder %s30, %s33
      %p39 = scmp.eq.s32.totalorder %s20, 0
      %p40 = por %p38, %p39
      %p41 = scmp.ne.s32.totalorder %s30, %s33
      %p42 = scmp.eq.s32.totalorder %s25, 1
      %p43 = por %p41, %p42
      %p44 = scmp.ne.s32.totalorder %s33, %s34
      %p45 = scmp.eq.s32.totalorder %s25, 0
      %p46 = por %p44, %p45
      %p47 = scmp.ne.s32.totalorder %s33, %s34
      %p48 = scmp.eq.s32.totalorder %s26, 1
      %p49 = por %p47, %p48
      %p51 = scmp.ne.s32.totalorder %s34, %s50
      %p52 = scmp.eq.s32.totalorder %s26, 0
      %p53 = por %p51, %p52
      %s54 = ssub.s32 %s20, %s27
      %p55 = scmp.eq.s32.totalorder %s54, 0
      %s57 = sadd.s32 %s56, 1
      %s58 = scalar_select %p55, %s56, %s57
      %p61 = pneg %p55
      %p62 = scmp.eq.s32.totalorder %s20, 1
      %p63 = por %p61, %p62
      %p64 = scmp.ne.s32.totalorder %s56, %s59
      %p65 = scmp.eq.s32.totalorder %s20, 0
      %p66 = por %p64, %p65
      %p67 = scmp.ne.s32.totalorder %s56, %s59
      %p68 = scmp.eq.s32.totalorder %s25, 1
      %p69 = por %p67, %p68
      %p70 = scmp.ne.s32.totalorder %s59, %s60
      %p71 = scmp.eq.s32.totalorder %s25, 0
      %p72 = por %p70, %p71
      %p73 = scmp.ne.s32.totalorder %s59, %s60
      %p74 = scmp.eq.s32.totalorder %s26, 1
      %p75 = por %p73, %p74
      %p77 = scmp.ne.s32.totalorder %s60, %s76
      %p78 = scmp.eq.s32.totalorder %s26, 0
      %p79 = por %p77, %p78
      %s80 = ssub.s32 %s20, %s27
      %p81 = scmp.eq.s32.totalorder %s80, 0
      %s83 = sadd.s32 %s82, 1
      %s84 = scalar_select %p81, %s82, %s83
      %p87 = pneg %p81
      %p88 = scmp.eq.s32.totalorder %s20, 1
      %p89 = por %p87, %p88
      %p90 = scmp.ne.s32.totalorder %s82, %s85
      %p91 = scmp.eq.s32.totalorder %s20, 0
      %p92 = por %p90, %p91
      %p93 = scmp.ne.s32.totalorder %s82, %s85
      %p94 = scmp.eq.s32.totalorder %s25, 1
      %p95 = por %p93, %p94
      %p96 = scmp.ne.s32.totalorder %s85, %s86
      %p97 = scmp.eq.s32.totalorder %s25, 0
      %p98 = por %p96, %p97
      %p99 = scmp.ne.s32.totalorder %s85, %s86
      %p100 = scmp.eq.s32.totalorder %s26, 1
      %p101 = por %p99, %p100
      %p103 = scmp.ne.s32.totalorder %s86, %s102
      %p104 = scmp.eq.s32.totalorder %s26, 0
      %p105 = por %p103, %p104
      %s106 = ssub.s32 %s20, %s27
      %p107 = scmp.eq.s32.totalorder %s106, 0
      %s109 = sadd.s32 %s108, 1
      %s110 = scalar_select %p107, %s108, %s109
      %p113 = pneg %p107
      %p114 = scmp.eq.s32.totalorder %s20, 1
      %p115 = por %p113, %p114
      %p116 = scmp.ne.s32.totalorder %s108, %s111
      %p117 = scmp.eq.s32.totalorder %s20, 0
      %p118 = por %p116, %p117
      %p119 = scmp.ne.s32.totalorder %s108, %s111
      %p120 = scmp.eq.s32.totalorder %s25, 1
      %p121 = por %p119, %p120
      %p122 = scmp.ne.s32.totalorder %s111, %s112
      %p123 = scmp.eq.s32.totalorder %s25, 0
      %p124 = por %p122, %p123
      %p125 = scmp.ne.s32.totalorder %s111, %s112
      %p126 = scmp.eq.s32.totalorder %s26, 1
      %p127 = por %p125, %p126
      %p129 = scmp.ne.s32.totalorder %s112, %s128
      %p130 = scmp.eq.s32.totalorder %s26, 0
      %p131 = por %p129, %p130
      %s133 = sadd.s32 %s132, 1
      %p136 = scmp.eq.s32.totalorder %s20, 1
      %p137 = scmp.ne.s32.totalorder %s132, %s134
      %p138 = scmp.eq.s32.totalorder %s20, 0
      %p139 = por %p137, %p138
      %p140 = scmp.ne.s32.totalorder %s132, %s134
      %p141 = scmp.eq.s32.totalorder %s25, 1
      %p142 = por %p140, %p141
      %p143 = scmp.ne.s32.totalorder %s134, %s135
      %p144 = scmp.eq.s32.totalorder %s25, 0
      %p145 = por %p143, %p144
      %p146 = scmp.ne.s32.totalorder %s134, %s135
      %p147 = scmp.eq.s32.totalorder %s26, 1
      %p148 = por %p146, %p147
      %p150 = scmp.ne.s32.totalorder %s135, %s149
      %p151 = scmp.eq.s32.totalorder %s26, 0
      %p152 = por %p150, %p151
      %s154 = sadd.s32 %s153, 1
      %p157 = scmp.eq.s32.totalorder %s20, 1
      %p158 = scmp.ne.s32.totalorder %s153, %s155
      %p159 = scmp.eq.s32.totalorder %s20, 0
      %p160 = por %p158, %p159
      %p161 = scmp.ne.s32.totalorder %s153, %s155
      %p162 = scmp.eq.s32.totalorder %s25, 1
      %p163 = por %p161, %p162
      %p164 = scmp.ne.s32.totalorder %s155, %s156
      %p165 = scmp.eq.s32.totalorder %s25, 0
      %p166 = por %p164, %p165
      %p167 = scmp.ne.s32.totalorder %s155, %s156
      %p168 = scmp.eq.s32.totalorder %s26, 1
      %p169 = por %p167, %p168
      %p171 = scmp.ne.s32.totalorder %s156, %s170
      %p172 = scmp.eq.s32.totalorder %s26, 0
      %p173 = por %p171, %p172
      %s175 = sadd.s32 %s174, 1
      %p178 = scmp.eq.s32.totalorder %s20, 1
      %p179 = scmp.ne.s32.totalorder %s174, %s176
      %p180 = scmp.eq.s32.totalorder %s20, 0
      %p181 = por %p179, %p180
      %p182 = scmp.ne.s32.totalorder %s174, %s176
      %p183 = scmp.eq.s32.totalorder %s25, 1
      %p184 = por %p182, %p183
      %p185 = scmp.ne.s32.totalorder %s176, %s177
      %p186 = scmp.eq.s32.totalorder %s25, 0
      %p187 = por %p185, %p186
      %p188 = scmp.ne.s32.totalorder %s176, %s177
      %p189 = scmp.eq.s32.totalorder %s26, 1
      %p190 = por %p188, %p189
      %p192 = scmp.ne.s32.totalorder %s177, %s191
      %p193 = scmp.eq.s32.totalorder %s26, 0
      %p194 = por %p192, %p193
      %s196 = sadd.s32 %s195, 1
      %p199 = scmp.eq.s32.totalorder %s20, 1
      %p200 = scmp.ne.s32.totalorder %s195, %s197
      %p201 = scmp.eq.s32.totalorder %s20, 0
      %p202 = por %p200, %p201
      %p203 = scmp.ne.s32.totalorder %s195, %s197
      %p204 = scmp.eq.s32.totalorder %s25, 1
      %p205 = por %p203, %p204
      %p206 = scmp.ne.s32.totalorder %s197, %s198
      %p207 = scmp.eq.s32.totalorder %s25, 0
      %p208 = por %p206, %p207
      %p209 = scmp.ne.s32.totalorder %s197, %s198
      %p210 = scmp.eq.s32.totalorder %s26, 1
      %p211 = por %p209, %p210
      %p213 = scmp.ne.s32.totalorder %s198, %s212
      %p214 = scmp.eq.s32.totalorder %s26, 0
      %p215 = por %p213, %p214
      %s217 = sadd.s32 %s216, 1
      %p220 = scmp.eq.s32.totalorder %s20, 1
      %p221 = scmp.ne.s32.totalorder %s216, %s218
      %p222 = scmp.eq.s32.totalorder %s20, 0
      %p223 = por %p221, %p222
      %p224 = scmp.ne.s32.totalorder %s216, %s218
      %p225 = scmp.eq.s32.totalorder %s25, 1
      %p226 = por %p224, %p225
      %p227 = scmp.ne.s32.totalorder %s218, %s219
      %p228 = scmp.eq.s32.totalorder %s25, 0
      %p229 = por %p227, %p228
      %p230 = scmp.ne.s32.totalorder %s218, %s219
      %p231 = scmp.eq.s32.totalorder %s26, 1
      %p232 = por %p230, %p231
      %p234 = scmp.ne.s32.totalorder %s219, %s233
      %p235 = scmp.eq.s32.totalorder %s26, 0
      %p236 = por %p234, %p235
      %s238 = sadd.s32 %s237, 1
      %p241 = scmp.eq.s32.totalorder %s20, 1
      %p242 = scmp.ne.s32.totalorder %s237, %s239
      %p243 = scmp.eq.s32.totalorder %s20, 0
      %p244 = por %p242, %p243
      %p245 = scmp.ne.s32.totalorder %s237, %s239
      %p246 = scmp.eq.s32.totalorder %s25, 1
      %p247 = por %p245, %p246
      %p248 = scmp.ne.s32.totalorder %s239, %s240
      %p249 = scmp.eq.s32.totalorder %s25, 0
      %p250 = por %p248, %p249
      %p251 = scmp.ne.s32.totalorder %s239, %s240
      %p252 = scmp.eq.s32.totalorder %s26, 1
      %p253 = por %p251, %p252
      %p255 = scmp.ne.s32.totalorder %s240, %s254
      %p256 = scmp.eq.s32.totalorder %s26, 0
      %p257 = por %p255, %p256
      %s259 = sadd.s32 %s258, 1
      %p262 = scmp.eq.s32.totalorder %s20, 1
      %p263 = scmp.ne.s32.totalorder %s258, %s260
      %p264 = scmp.eq.s32.totalorder %s20, 0
      %p265 = por %p263, %p264
      %p266 = scmp.ne.s32.totalorder %s258, %s260
      %p267 = scmp.eq.s32.totalorder %s25, 1
      %p268 = por %p266, %p267
      %p269 = scmp.ne.s32.totalorder %s260, %s261
      %p270 = scmp.eq.s32.totalorder %s25, 0
      %p271 = por %p269, %p270
      %p272 = scmp.ne.s32.totalorder %s260, %s261
      %p273 = scmp.eq.s32.totalorder %s26, 1
      %p274 = por %p272, %p273
      %p276 = scmp.ne.s32.totalorder %s261, %s275
      %p277 = scmp.eq.s32.totalorder %s26, 0
      %p278 = por %p276, %p277
      %s279 = ssub.s32 %s20, %s27
      %p280 = scmp.eq.s32.totalorder %s279, 0
      %s282 = sadd.s32 %s281, 1
      %s283 = scalar_select %p280, %s281, %s282
      %p286 = pneg %p280
      %p287 = scmp.eq.s32.totalorder %s20, 1
      %p288 = por %p286, %p287
      %p289 = scmp.ne.s32.totalorder %s281, %s284
      %p290 = scmp.eq.s32.totalorder %s20, 0
      %p291 = por %p289, %p290
      %p292 = scmp.ne.s32.totalorder %s281, %s284
      %p293 = scmp.eq.s32.totalorder %s25, 1
      %p294 = por %p292, %p293
      %p295 = scmp.ne.s32.totalorder %s284, %s285
      %p296 = scmp.eq.s32.totalorder %s25, 0
      %p297 = por %p295, %p296
      %p298 = scmp.ne.s32.totalorder %s284, %s285
      %p299 = scmp.eq.s32.totalorder %s26, 1
      %p300 = por %p298, %p299
      %p302 = scmp.ne.s32.totalorder %s285, %s301
      %p303 = scmp.eq.s32.totalorder %s26, 0
      %p304 = por %p302, %p303
      %p305 = scmp.le.s32.totalorder 1, %s20
      %p306 = scmp.lt.s32.totalorder %s20, 3
      %p307 = pnand %p305, %p306
      %p308 = pneg %p307
      // Predicated region
      $region9: #{foo_forward.1} parent=5 // pred_check
        _
      $region10: #{foo_forward.1} parent=5 // pred_check_branch
        %310 = sbr.rel (%p307) target = $region12
      $region11: #{foo_forward.1} parent=5 // pred_region
        %s311 = ssub.s32 %s20, 1
        // Predicated region
        $region13: #{foo_forward.1} parent=11 // pred_check
          %p312 = pneg %p145
        $region14: #{foo_forward.1} parent=11 // pred_check_branch
          %314 = sbr.rel (%p312) target = $region16
        $region15: #{foo_forward.1} parent=11 // pred_region
          _
        $region16: #{foo_forward.1} parent=11 // pred_fallthru
          _
        // Predicated region
        $region17: #{foo_forward.1} parent=11 // pred_check
          %p315 = pneg %p166
        $region18: #{foo_forward.1} parent=11 // pred_check_branch
          %317 = sbr.rel (%p315) target = $region20
        $region19: #{foo_forward.1} parent=11 // pred_region
          _
        $region20: #{foo_forward.1} parent=11 // pred_fallthru
          _
        // Predicated region
        $region21: #{foo_forward.1} parent=11 // pred_check
          %p318 = pneg %p187
        $region22: #{foo_forward.1} parent=11 // pred_check_branch
          %320 = sbr.rel (%p318) target = $region24
        $region23: #{foo_forward.1} parent=11 // pred_region
          _
        $region24: #{foo_forward.1} parent=11 // pred_fallthru
          _
        // Predicated region
        $region25: #{foo_forward.1} parent=11 // pred_check
          %p321 = pneg %p208
        $region26: #{foo_forward.1} parent=11 // pred_check_branch
          %323 = sbr.rel (%p321) target = $region28
        $region27: #{foo_forward.1} parent=11 // pred_region
          _
        $region28: #{foo_forward.1} parent=11 // pred_fallthru
          _
        // Predicated region
        $region29: #{foo_forward.1} parent=11 // pred_check
          %p324 = pneg %p229
        $region30: #{foo_forward.1} parent=11 // pred_check_branch
          %326 = sbr.rel (%p324) target = $region32
        $region31: #{foo_forward.1} parent=11 // pred_region
          _
        $region32: #{foo_forward.1} parent=11 // pred_fallthru
          _
        // Predicated region
        $region33: #{foo_forward.1} parent=11 // pred_check
          %p327 = pneg %p250
        $region34: #{foo_forward.1} parent=11 // pred_check_branch
          %329 = sbr.rel (%p327) target = $region36
        $region35: #{foo_forward.1} parent=11 // pred_region
          _
        $region36: #{foo_forward.1} parent=11 // pred_fallthru
          _
        // Predicated region
        $region37: #{foo_forward.1} parent=11 // pred_check
          %p330 = pneg %p271
        $region38: #{foo_forward.1} parent=11 // pred_check_branch
          %332 = sbr.rel (%p330) target = $region40
        $region39: #{foo_forward.1} parent=11 // pred_region
          _
        $region40: #{foo_forward.1} parent=11 // pred_fallthru
          _
      $region12: #{foo_forward.1} parent=5 // pred_fallthru
        _
      %p333 = scmp.lt.s32.totalorder %s20, 2
      // Predicated region
      $region41: #{foo_forward.1} parent=5 // pred_check
        %p334 = pneg %p333
      $region42: #{foo_forward.1} parent=5 // pred_check_branch
        %336 = sbr.rel (%p334) target = $region44
      $region43: #{foo_forward.1} parent=5 // pred_region
        // Predicated region
        $region45: #{foo_forward.1} parent=43 // pred_check
          %p337 = pneg %p40
        $region46: #{foo_forward.1} parent=43 // pred_check_branch
          %339 = sbr.rel (%p337) target = $region48
        $region47: #{foo_forward.1} parent=43 // pred_region
          %p340 = scmp.lt.s32.totalorder %s20, 1
          %s341 = scalar_select %p340, %s20, 1
          %s342 = smul.addr %s341, 13
          %s343 = smul.addr %s342, 4
          %s344 = scalar_lea.vmem %s0, %s343
        $region48: #{foo_forward.1} parent=43 // pred_fallthru
          _
        // Predicated region
        $region49: #{foo_forward.1} parent=43 // pred_check
          %p345 = pneg %p66
        $region50: #{foo_forward.1} parent=43 // pred_check_branch
          %347 = sbr.rel (%p345) target = $region52
        $region51: #{foo_forward.1} parent=43 // pred_region
          %p348 = scmp.lt.s32.totalorder %s20, 1
          %s349 = scalar_select %p348, %s20, 1
          %s350 = smul.addr %s349, 13
          %s351 = smul.addr %s350, 4
          %s352 = scalar_lea.vmem %s1, %s351
        $region52: #{foo_forward.1} parent=43 // pred_fallthru
          _
        // Predicated region
        $region53: #{foo_forward.1} parent=43 // pred_check
          %p353 = pneg %p92
        $region54: #{foo_forward.1} parent=43 // pred_check_branch
          %355 = sbr.rel (%p353) target = $region56
        $region55: #{foo_forward.1} parent=43 // pred_region
          %p356 = scmp.lt.s32.totalorder %s20, 1
          %s357 = scalar_select %p356, %s20, 1
          %s358 = smul.addr %s357, 13
          %s359 = smul.addr %s358, 4
          %s360 = scalar_lea.vmem %s2, %s359
        $region56: #{foo_forward.1} parent=43 // pred_fallthru
          _
        // Predicated region
        $region57: #{foo_forward.1} parent=43 // pred_check
          %p361 = pneg %p118
        $region58: #{foo_forward.1} parent=43 // pred_check_branch
          %363 = sbr.rel (%p361) target = $region60
        $region59: #{foo_forward.1} parent=43 // pred_region
          %p364 = scmp.lt.s32.totalorder %s20, 1
          %s365 = scalar_select %p364, %s20, 1
          %s366 = smul.addr %s365, 13
          %s367 = smul.addr %s366, 4
          %s368 = scalar_lea.vmem %s3, %s367
        $region60: #{foo_forward.1} parent=43 // pred_fallthru
          _
      $region44: #{foo_forward.1} parent=5 // pred_fallthru
        _
      %p369 = scmp.le.s32.totalorder 1, %s20
      %p370 = scmp.lt.s32.totalorder %s20, 3
      %p371 = pnand %p369, %p370
      %p372 = pneg %p371
      // Predicated region
      $region61: #{foo_forward.1} parent=5 // pred_check
        _
      $region62: #{foo_forward.1} parent=5 // pred_check_branch
        %374 = sbr.rel (%p371) target = $region64
      $region63: #{foo_forward.1} parent=5 // pred_region
        %s375 = ssub.s32 %s20, 1
        %p376 = scmp.lt.s32.totalorder %s25, 1
        %s377 = scalar_select %p376, %s25, 1
        %s378 = smul.addr %s377, 13
        %s379 = smul.addr %s378, 4
        %s380 = scalar_lea.vmem %s0, %s379
        %p381 = pneg %p46
        %p382 = pneg %p43
        %p383 = scmp.lt.s32.totalorder %s25, 1
        %s384 = scalar_select %p383, %s25, 1
        %s385 = smul.addr %s384, 13
        %s386 = smul.addr %s385, 4
        %s387 = scalar_lea.vmem %s1, %s386
        %p388 = pneg %p72
        %p389 = pneg %p69
        %p390 = scmp.lt.s32.totalorder %s25, 1
        %s391 = scalar_select %p390, %s25, 1
        %s392 = smul.addr %s391, 13
        %s393 = smul.addr %s392, 4
        %s394 = scalar_lea.vmem %s2, %s393
        %p395 = pneg %p98
        %p396 = pneg %p95
        %p397 = scmp.lt.s32.totalorder %s25, 1
        %s398 = scalar_select %p397, %s25, 1
        %s399 = smul.addr %s398, 13
        %s400 = smul.addr %s399, 4
        %s401 = scalar_lea.vmem %s3, %s400
        %p402 = pneg %p124
        %p403 = pneg %p121
        %p404 = pneg %p145
        %p405 = pneg %p142
        %p406 = pneg %p166
        %p407 = pneg %p163
        %p408 = pneg %p187
        %p409 = pneg %p184
        %p410 = pneg %p208
        %p411 = pneg %p205
        %p412 = pneg %p229
        %p413 = pneg %p226
        %p414 = pneg %p250
        %p415 = pneg %p247
        %p416 = pneg %p271
        %p417 = pneg %p268
        %p418 = pneg %p297
        %p419 = pneg %p294
        %s420 = sand.u32 %s284, 1
        %s421 = scalar_lea.sflag [#allocation3], %s420
        %s422 = sand.u32 %s284, 1
        %s423 = scalar_lea.vmem [#allocation2], %s422
        %p424 = scmp.lt.s32.totalorder %s25, 1
        %s425 = scalar_select %p424, %s25, 1
        %s426 = smul.addr %s425, 13
        %s427 = smul.addr %s426, 4
        %s428 = scalar_lea.vmem %s0, %s427
        %p429 = scmp.lt.s32.totalorder %s25, 1
        %s430 = scalar_select %p429, %s25, 1
        %s431 = smul.addr %s430, 13
        %s432 = smul.addr %s431, 4
        %s433 = scalar_lea.vmem %s1, %s432
        %p434 = scmp.lt.s32.totalorder %s25, 1
        %s435 = scalar_select %p434, %s25, 1
        %s436 = smul.addr %s435, 13
        %s437 = smul.addr %s436, 4
        %s438 = scalar_lea.vmem %s2, %s437
        %p439 = scmp.lt.s32.totalorder %s25, 1
        %s440 = scalar_select %p439, %s25, 1
        %s441 = smul.addr %s440, 13
        %s442 = smul.addr %s441, 4
        %s443 = scalar_lea.vmem %s3, %s442
        %v445 = vld [vmem:[%s428] sm:$0xf]
        %v446 = vld [vmem:[%s428 + $0x4] sm:$0xf]
        %v447 = vld [vmem:[%s428 + $0x8] sm:$0xf]
        %v448 = vld [vmem:[%s428 + $0xc] sm:$0xf]
        %v449 = vld [vmem:[%s428 + $0x10] sm:$0xf]
        %v450 = vld [vmem:[%s428 + $0x14] sm:$0xf]
        %v451 = vld [vmem:[%s428 + $0x18] sm:$0xf]
        %v452 = vld [vmem:[%s428 + $0x1c] sm:$0xf]
        %v453 = vld [vmem:[%s428 + $0x20] sm:$0xf]
        %v454 = vld [vmem:[%s428 + $0x24] sm:$0xf]
        %v455 = vld [vmem:[%s4] sm:$0x3]
        %v456 = vld [vmem:[%s433] sm:$0xf]
        %v457 = vld [vmem:[%s433 + $0x4] sm:$0xf]
        %v458 = vld [vmem:[%s433 + $0x8] sm:$0xf]
        %v459 = vld [vmem:[%s433 + $0xc] sm:$0xf]
        %v460 = vld [vmem:[%s433 + $0x10] sm:$0xf]
        %v461 = vld [vmem:[%s433 + $0x14] sm:$0xf]
        %v462 = vld [vmem:[%s433 + $0x18] sm:$0xf]
        %v463 = vld [vmem:[%s433 + $0x1c] sm:$0xf]
        %v464 = vld [vmem:[%s433 + $0x20] sm:$0xf]
        %v465 = vld [vmem:[%s433 + $0x24] sm:$0xf]
        %s466 = scalar_lea.vmem %s4, 2
        %v467 = vld [vmem:[%s466] sm:$0x3]
        %v478 = vunpack.c.l.b16 %v456
        %v479 = vunpack.c.l.b16 %v457
        %v480 = vunpack.c.l.b16 %v458
        %v481 = vunpack.c.l.b16 %v459
        %v482 = vunpack.c.l.b16 %v460
        %v483 = vunpack.c.l.b16 %v461
        %v484 = vunpack.c.l.b16 %v462
        %v485 = vunpack.c.l.b16 %v463
        %v486 = vunpack.c.l.b16 %v464
        %v487 = vunpack.c.l.b16 %v465
        %v488 = vpack.c.b16 %v479, %v478
        %v489 = vpack.c.b16 %v481, %v480
        %v490 = vpack.c.b16 %v483, %v482
        %v491 = vpack.c.b16 %v485, %v484
        %v492 = vpack.c.b16 %v487, %v486
        %vm493 = vcmask 31744
        %v495 = vsel %vm493, %v488, 0
        %v498 = vsel %vm493, %v489, 0
        %v501 = vsel %vm493, %v490, 0
        %v504 = vsel %vm493, %v491, 0
        %v507 = vsel %vm493, %v492, 0
        %vm509 = vcmask 1041408
        %v511 = vsel %vm509, %v467, 0
        %513 = vmatprep.subr.bf16.mxu0 0
        %514 = vmatpush1.bf16.msra.mxu0 0
        %515 = vmatprep.subr.bf16.mxu0 0
        %516 = vmatpush1.bf16.msra.mxu0 0
        %517 = vmatprep.subr.bf16.mxu0 0
        %518 = vmatpush1.bf16.msra.mxu0 0
        %519 = vmatprep.subr.bf16.mxu0 0
        %520 = vmatpush1.bf16.msra.mxu0 0
        %521 = vmatprep.subr.bf16.mxu0 0
        %522 = vmatpush1.bf16.msra.mxu0 0
        %523 = vmatprep.subr.bf16.mxu0 0
        %524 = vmatpush1.bf16.msra.mxu0 0
        %525 = vmatprep.subr.bf16.mxu0 0
        %526 = vmatpush1.bf16.msra.mxu0 0
        %527 = vmatprep.subr.bf16.mxu0 0
        %528 = vmatpush1.bf16.msra.mxu0 %v511
        %529 = vmatprep.subr.bf16.mxu0 0
        %530 = vmatpush2.bf16.msra.mxu0 0
        %531 = vmatprep.subr.bf16.mxu0 0
        %532 = vmatpush2.bf16.msra.mxu0 0
        %533 = vmatprep.subr.bf16.mxu0 0
        %534 = vmatpush2.bf16.msra.mxu0 0
        %535 = vmatprep.subr.bf16.mxu0 0
        %536 = vmatpush2.bf16.msra.mxu0 0
        %537 = vmatprep.subr.bf16.mxu0 0
        %538 = vmatpush2.bf16.msra.mxu0 0
        %539 = vmatprep.subr.bf16.mxu0 0
        %540 = vmatpush2.bf16.msra.mxu0 0
        %541 = vmatprep.subr.bf16.mxu0 0
        %542 = vmatpush2.bf16.msra.mxu0 0
        %543 = vmatprep.subr.bf16.mxu0 0
        %544 = vmatpush2.bf16.msra.mxu0 0
        %545 = vmatprep.mubr.bf16.mxu0 0
        %546 = vmatmul.mubr.bf16.gmra.mxu0 %v495
        %v547 = vpop.f32.mrf.mxu0
        %v548 = vadd.f32 0.0, %v547
        %v549 = vpop.f32.mrf.mxu0
        %v550 = vpop.f32.mrf.mxu0
        %v551 = vadd.f32 0.0, %v550
        %v552 = vpop.f32.mrf.mxu0
        %553 = vmatprep.mubr.bf16.mxu0 0
        %554 = vmatmul.mubr.bf16.gmra.mxu0 %v498
        %v555 = vpop.f32.mrf.mxu0
        %v556 = vadd.f32 0.0, %v555
        %v557 = vpop.f32.mrf.mxu0
        %v558 = vpop.f32.mrf.mxu0
        %v559 = vadd.f32 0.0, %v558
        %v560 = vpop.f32.mrf.mxu0
        %561 = vmatprep.mubr.bf16.mxu0 0
        %562 = vmatmul.mubr.bf16.gmra.mxu0 %v501
        %v563 = vpop.f32.mrf.mxu0
        %v564 = vadd.f32 0.0, %v563
        %v565 = vpop.f32.mrf.mxu0
        %v566 = vpop.f32.mrf.mxu0
        %v567 = vadd.f32 0.0, %v566
        %v568 = vpop.f32.mrf.mxu0
        %569 = vmatprep.mubr.bf16.mxu0 0
        %570 = vmatmul.mubr.bf16.gmra.mxu0 %v504
        %v571 = vpop.f32.mrf.mxu0
        %v572 = vadd.f32 0.0, %v571
        %v573 = vpop.f32.mrf.mxu0
        %v574 = vpop.f32.mrf.mxu0
        %v575 = vadd.f32 0.0, %v574
        %v576 = vpop.f32.mrf.mxu0
        %577 = vmatprep.mubr.bf16.mxu0 0
        %578 = vmatmul.mubr.bf16.gmra.mxu0 %v507
        %v579 = vpop.f32.mrf.mxu0
        %v580 = vadd.f32 0.0, %v579
        %v581 = vpop.f32.mrf.mxu0
        %v582 = vpop.f32.mrf.mxu0
        %v583 = vadd.f32 0.0, %v582
        %v584 = vpop.f32.mrf.mxu0
        %585 = vdwg.mxu0
        %v596 = vunpack.c.l.b16 %v445
        %v597 = vunpack.c.l.b16 %v446
        %v598 = vunpack.c.l.b16 %v447
        %v599 = vunpack.c.l.b16 %v448
        %v600 = vunpack.c.l.b16 %v449
        %v601 = vunpack.c.l.b16 %v450
        %v602 = vunpack.c.l.b16 %v451
        %v603 = vunpack.c.l.b16 %v452
        %v604 = vunpack.c.l.b16 %v453
        %v605 = vunpack.c.l.b16 %v454
        %v606 = vpack.c.b16 %v597, %v596
        %v607 = vpack.c.b16 %v599, %v598
        %v608 = vpack.c.b16 %v601, %v600
        %v609 = vpack.c.b16 %v603, %v602
        %v610 = vpack.c.b16 %v605, %v604
        %v612 = vsel %vm493, %v606, 0
        %v615 = vsel %vm493, %v607, 0
        %v618 = vsel %vm493, %v608, 0
        %v621 = vsel %vm493, %v609, 0
        %v624 = vsel %vm493, %v610, 0
        %v627 = vsel %vm509, %v455, 0
        %629 = vmatprep.subr.bf16.mxu0 0
        %630 = vmatpush1.bf16.msra.mxu0 0
        %631 = vmatprep.subr.bf16.mxu0 0
        %632 = vmatpush1.bf16.msra.mxu0 0
        %633 = vmatprep.subr.bf16.mxu0 0
        %634 = vmatpush1.bf16.msra.mxu0 0
        %635 = vmatprep.subr.bf16.mxu0 0
        %636 = vmatpush1.bf16.msra.mxu0 0
        %637 = vmatprep.subr.bf16.mxu0 0
        %638 = vmatpush1.bf16.msra.mxu0 0
        %639 = vmatprep.subr.bf16.mxu0 0
        %640 = vmatpush1.bf16.msra.mxu0 0
        %641 = vmatprep.subr.bf16.mxu0 0
        %642 = vmatpush1.bf16.msra.mxu0 0
        %643 = vmatprep.subr.bf16.mxu0 0
        %644 = vmatpush1.bf16.msra.mxu0 %v627
        %645 = vmatprep.subr.bf16.mxu0 0
        %646 = vmatpush2.bf16.msra.mxu0 0
        %647 = vmatprep.subr.bf16.mxu0 0
        %648 = vmatpush2.bf16.msra.mxu0 0
        %649 = vmatprep.subr.bf16.mxu0 0
        %650 = vmatpush2.bf16.msra.mxu0 0
        %651 = vmatprep.subr.bf16.mxu0 0
        %652 = vmatpush2.bf16.msra.mxu0 0
        %653 = vmatprep.subr.bf16.mxu0 0
        %654 = vmatpush2.bf16.msra.mxu0 0
        %655 = vmatprep.subr.bf16.mxu0 0
        %656 = vmatpush2.bf16.msra.mxu0 0
        %657 = vmatprep.subr.bf16.mxu0 0
        %658 = vmatpush2.bf16.msra.mxu0 0
        %659 = vmatprep.subr.bf16.mxu0 0
        %660 = vmatpush2.bf16.msra.mxu0 0
        %661 = vmatprep.mubr.bf16.mxu0 0
        %662 = vmatmul.mubr.bf16.gmra.mxu0 %v612
        %v663 = vpop.f32.mrf.mxu0
        %v664 = vadd.f32 %v548, %v663
        %v665 = vpop.f32.mrf.mxu0
        %v666 = vpop.f32.mrf.mxu0
        %v667 = vadd.f32 %v551, %v666
        %v668 = vpop.f32.mrf.mxu0
        %669 = vmatprep.mubr.bf16.mxu0 0
        %670 = vmatmul.mubr.bf16.gmra.mxu0 %v615
        %v671 = vpop.f32.mrf.mxu0
        %v672 = vadd.f32 %v556, %v671
        %v673 = vpop.f32.mrf.mxu0
        %v674 = vpop.f32.mrf.mxu0
        %v675 = vadd.f32 %v559, %v674
        %v676 = vpop.f32.mrf.mxu0
        %677 = vmatprep.mubr.bf16.mxu0 0
        %678 = vmatmul.mubr.bf16.gmra.mxu0 %v618
        %v679 = vpop.f32.mrf.mxu0
        %v680 = vadd.f32 %v564, %v679
        %v681 = vpop.f32.mrf.mxu0
        %v682 = vpop.f32.mrf.mxu0
        %v683 = vadd.f32 %v567, %v682
        %v684 = vpop.f32.mrf.mxu0
        %685 = vmatprep.mubr.bf16.mxu0 0
        %686 = vmatmul.mubr.bf16.gmra.mxu0 %v621
        %v687 = vpop.f32.mrf.mxu0
        %v688 = vadd.f32 %v572, %v687
        %v689 = vpop.f32.mrf.mxu0
        %v690 = vpop.f32.mrf.mxu0
        %v691 = vadd.f32 %v575, %v690
        %v692 = vpop.f32.mrf.mxu0
        %693 = vmatprep.mubr.bf16.mxu0 0
        %694 = vmatmul.mubr.bf16.gmra.mxu0 %v624
        %v695 = vpop.f32.mrf.mxu0
        %v696 = vadd.f32 %v580, %v695
        %v697 = vpop.f32.mrf.mxu0
        %v698 = vpop.f32.mrf.mxu0
        %v699 = vadd.f32 %v583, %v698
        %v700 = vpop.f32.mrf.mxu0
        %701 = vdwg.mxu0
        %v702 = vld [vmem:[%s428] sm:$0xf]
        %v703 = vld [vmem:[%s428 + $0x4] sm:$0xf]
        %v704 = vld [vmem:[%s428 + $0x8] sm:$0xf]
        %v705 = vld [vmem:[%s428 + $0xc] sm:$0xf]
        %v706 = vld [vmem:[%s428 + $0x10] sm:$0xf]
        %v707 = vld [vmem:[%s428 + $0x14] sm:$0xf]
        %v708 = vld [vmem:[%s428 + $0x18] sm:$0xf]
        %v709 = vld [vmem:[%s428 + $0x1c] sm:$0xf]
        %v710 = vld [vmem:[%s428 + $0x20] sm:$0xf]
        %v711 = vld [vmem:[%s428 + $0x24] sm:$0xf]
        %v712 = vld [vmem:[%s428 + $0x28] sm:$0x1]
        %s713 = scalar_lea.vmem %s4, 4
        %v714 = vld [vmem:[%s713] sm:$0x3]
        %v726 = vunpack.c.l.b16 %v702
        %v727 = vunpack.c.l.b16 %v703
        %v728 = vunpack.c.l.b16 %v704
        %v729 = vunpack.c.l.b16 %v705
        %v730 = vunpack.c.l.b16 %v706
        %v731 = vunpack.c.l.b16 %v707
        %v732 = vunpack.c.l.b16 %v708
        %v733 = vunpack.c.l.b16 %v709
        %v734 = vunpack.c.l.b16 %v710
        %v735 = vunpack.c.l.b16 %v711
        %v736 = vunpack.c.l.b16 %v712
        %v737 = vpack.c.b16 %v727, %v726
        %v738 = vpack.c.b16 %v729, %v728
        %v739 = vpack.c.b16 %v731, %v730
        %v740 = vpack.c.b16 %v733, %v732
        %v741 = vpack.c.b16 %v735, %v734
        %v742 = vpack.c.b16 %v736, %v736
        %vm743 = vsmask.f32 7424
        %v745 = vshrl.u32 %v737, 16
        %v747 = vshll.u32 %v737, 16
        %v749 = vrot.slane %v747, 1
        %v750 = vor.u32 %v745, %v749
        %v752 = vshll.u32 %v738, 16
        %v754 = vrot.slane %v752, 1
        %v755 = vsel %vm743, %v750, %v754
        %v756 = vshrl.u32 %v738, 16
        %v758 = vor.u32 %v756, %v754
        %v760 = vshll.u32 %v739, 16
        %v762 = vrot.slane %v760, 1
        %v763 = vsel %vm743, %v758, %v762
        %v764 = vshrl.u32 %v739, 16
        %v766 = vor.u32 %v764, %v762
        %v768 = vshll.u32 %v740, 16
        %v770 = vrot.slane %v768, 1
        %v771 = vsel %vm743, %v766, %v770
        %v772 = vshrl.u32 %v740, 16
        %v774 = vor.u32 %v772, %v770
        %v776 = vshll.u32 %v741, 16
        %v778 = vrot.slane %v776, 1
        %v779 = vsel %vm743, %v774, %v778
        %v780 = vshrl.u32 %v741, 16
        %v782 = vor.u32 %v780, %v778
        %v784 = vshll.u32 %v742, 16
        %v786 = vrot.slane %v784, 1
        %v787 = vsel %vm743, %v782, %v786
        %v789 = vsel %vm493, %v755, 0
        %v792 = vsel %vm493, %v763, 0
        %v795 = vsel %vm493, %v771, 0
        %v798 = vsel %vm493, %v779, 0
        %v801 = vsel %vm493, %v787, 0
        %v804 = vsel %vm509, %v714, 0
        %806 = vmatprep.subr.bf16.mxu0 0
        %807 = vmatpush1.bf16.msra.mxu0 0
        %808 = vmatprep.subr.bf16.mxu0 0
        %809 = vmatpush1.bf16.msra.mxu0 0
        %810 = vmatprep.subr.bf16.mxu0 0
        %811 = vmatpush1.bf16.msra.mxu0 0
        %812 = vmatprep.subr.bf16.mxu0 0
        %813 = vmatpush1.bf16.msra.mxu0 0
        %814 = vmatprep.subr.bf16.mxu0 0
        %815 = vmatpush1.bf16.msra.mxu0 0
        %816 = vmatprep.subr.bf16.mxu0 0
        %817 = vmatpush1.bf16.msra.mxu0 0
        %818 = vmatprep.subr.bf16.mxu0 0
        %819 = vmatpush1.bf16.msra.mxu0 0
        %820 = vmatprep.subr.bf16.mxu0 0
        %821 = vmatpush1.bf16.msra.mxu0 %v804
        %822 = vmatprep.subr.bf16.mxu0 0
        %823 = vmatpush2.bf16.msra.mxu0 0
        %824 = vmatprep.subr.bf16.mxu0 0
        %825 = vmatpush2.bf16.msra.mxu0 0
        %826 = vmatprep.subr.bf16.mxu0 0
        %827 = vmatpush2.bf16.msra.mxu0 0
        %828 = vmatprep.subr.bf16.mxu0 0
        %829 = vmatpush2.bf16.msra.mxu0 0
        %830 = vmatprep.subr.bf16.mxu0 0
        %831 = vmatpush2.bf16.msra.mxu0 0
        %832 = vmatprep.subr.bf16.mxu0 0
        %833 = vmatpush2.bf16.msra.mxu0 0
        %834 = vmatprep.subr.bf16.mxu0 0
        %835 = vmatpush2.bf16.msra.mxu0 0
        %836 = vmatprep.subr.bf16.mxu0 0
        %837 = vmatpush2.bf16.msra.mxu0 0
        %838 = vmatprep.mubr.bf16.mxu0 0
        %839 = vmatmul.mubr.bf16.gmra.mxu0 %v789
        %v840 = vpop.f32.mrf.mxu0
        %v841 = vadd.f32 0.0, %v840
        %v842 = vpop.f32.mrf.mxu0
        %v843 = vpop.f32.mrf.mxu0
        %v844 = vadd.f32 0.0, %v843
        %v845 = vpop.f32.mrf.mxu0
        %846 = vmatprep.mubr.bf16.mxu0 0
        %847 = vmatmul.mubr.bf16.gmra.mxu0 %v792
        %v848 = vpop.f32.mrf.mxu0
        %v849 = vadd.f32 0.0, %v848
        %v850 = vpop.f32.mrf.mxu0
        %v851 = vpop.f32.mrf.mxu0
        %v852 = vadd.f32 0.0, %v851
        %v853 = vpop.f32.mrf.mxu0
        %854 = vmatprep.mubr.bf16.mxu0 0
        %855 = vmatmul.mubr.bf16.gmra.mxu0 %v795
        %v856 = vpop.f32.mrf.mxu0
        %v857 = vadd.f32 0.0, %v856
        %v858 = vpop.f32.mrf.mxu0
        %v859 = vpop.f32.mrf.mxu0
        %v860 = vadd.f32 0.0, %v859
        %v861 = vpop.f32.mrf.mxu0
        %862 = vmatprep.mubr.bf16.mxu0 0
        %863 = vmatmul.mubr.bf16.gmra.mxu0 %v798
        %v864 = vpop.f32.mrf.mxu0
        %v865 = vadd.f32 0.0, %v864
        %v866 = vpop.f32.mrf.mxu0
        %v867 = vpop.f32.mrf.mxu0
        %v868 = vadd.f32 0.0, %v867
        %v869 = vpop.f32.mrf.mxu0
        %870 = vmatprep.mubr.bf16.mxu0 0
        %871 = vmatmul.mubr.bf16.gmra.mxu0 %v801
        %v872 = vpop.f32.mrf.mxu0
        %v873 = vadd.f32 0.0, %v872
        %v874 = vpop.f32.mrf.mxu0
        %v875 = vpop.f32.mrf.mxu0
        %v876 = vadd.f32 0.0, %v875
        %v877 = vpop.f32.mrf.mxu0
        %878 = vdwg.mxu0
        %v879 = vadd.f32 %v664, %v841
        %v880 = vadd.f32 %v667, %v844
        %v881 = vadd.f32 %v672, %v849
        %v882 = vadd.f32 %v675, %v852
        %v883 = vadd.f32 %v680, %v857
        %v884 = vadd.f32 %v683, %v860
        %v885 = vadd.f32 %v688, %v865
        %v886 = vadd.f32 %v691, %v868
        %v887 = vadd.f32 %v696, %v873
        %v888 = vadd.f32 %v699, %v876
        %v889 = vld [vmem:[%s433] sm:$0xf]
        %v890 = vld [vmem:[%s433 + $0x4] sm:$0xf]
        %v891 = vld [vmem:[%s433 + $0x8] sm:$0xf]
        %v892 = vld [vmem:[%s433 + $0xc] sm:$0xf]
        %v893 = vld [vmem:[%s433 + $0x10] sm:$0xf]
        %v894 = vld [vmem:[%s433 + $0x14] sm:$0xf]
        %v895 = vld [vmem:[%s433 + $0x18] sm:$0xf]
        %v896 = vld [vmem:[%s433 + $0x1c] sm:$0xf]
        %v897 = vld [vmem:[%s433 + $0x20] sm:$0xf]
        %v898 = vld [vmem:[%s433 + $0x24] sm:$0xf]
        %v899 = vld [vmem:[%s433 + $0x28] sm:$0x1]
        %s900 = scalar_lea.vmem %s4, 6
        %v901 = vld [vmem:[%s900] sm:$0x3]
        %v913 = vunpack.c.l.b16 %v889
        %v914 = vunpack.c.l.b16 %v890
        %v915 = vunpack.c.l.b16 %v891
        %v916 = vunpack.c.l.b16 %v892
        %v917 = vunpack.c.l.b16 %v893
        %v918 = vunpack.c.l.b16 %v894
        %v919 = vunpack.c.l.b16 %v895
        %v920 = vunpack.c.l.b16 %v896
        %v921 = vunpack.c.l.b16 %v897
        %v922 = vunpack.c.l.b16 %v898
        %v923 = vunpack.c.l.b16 %v899
        %v924 = vpack.c.b16 %v914, %v913
        %v925 = vpack.c.b16 %v916, %v915
        %v926 = vpack.c.b16 %v918, %v917
        %v927 = vpack.c.b16 %v920, %v919
        %v928 = vpack.c.b16 %v922, %v921
        %v929 = vpack.c.b16 %v923, %v923
        %v931 = vshrl.u32 %v924, 16
        %v933 = vshll.u32 %v924, 16
        %v935 = vrot.slane %v933, 1
        %v936 = vor.u32 %v931, %v935
        %v938 = vshll.u32 %v925, 16
        %v940 = vrot.slane %v938, 1
        %v941 = vsel %vm743, %v936, %v940
        %v942 = vshrl.u32 %v925, 16
        %v944 = vor.u32 %v942, %v940
        %v946 = vshll.u32 %v926, 16
        %v948 = vrot.slane %v946, 1
        %v949 = vsel %vm743, %v944, %v948
        %v950 = vshrl.u32 %v926, 16
        %v952 = vor.u32 %v950, %v948
        %v954 = vshll.u32 %v927, 16
        %v956 = vrot.slane %v954, 1
        %v957 = vsel %vm743, %v952, %v956
        %v958 = vshrl.u32 %v927, 16
        %v960 = vor.u32 %v958, %v956
        %v962 = vshll.u32 %v928, 16
        %v964 = vrot.slane %v962, 1
        %v965 = vsel %vm743, %v960, %v964
        %v966 = vshrl.u32 %v928, 16
        %v968 = vor.u32 %v966, %v964
        %v970 = vshll.u32 %v929, 16
        %v972 = vrot.slane %v970, 1
        %v973 = vsel %vm743, %v968, %v972
        %v975 = vsel %vm493, %v941, 0
        %v978 = vsel %vm493, %v949, 0
        %v981 = vsel %vm493, %v957, 0
        %v984 = vsel %vm493, %v965, 0
        %v987 = vsel %vm493, %v973, 0
        %v990 = vsel %vm509, %v901, 0
        %992 = vmatprep.subr.bf16.mxu0 0
        %993 = vmatpush1.bf16.msra.mxu0 0
        %994 = vmatprep.subr.bf16.mxu0 0
        %995 = vmatpush1.bf16.msra.mxu0 0
        %996 = vmatprep.subr.bf16.mxu0 0
        %997 = vmatpush1.bf16.msra.mxu0 0
        %998 = vmatprep.subr.bf16.mxu0 0
        %999 = vmatpush1.bf16.msra.mxu0 0
        %1000 = vmatprep.subr.bf16.mxu0 0
        %1001 = vmatpush1.bf16.msra.mxu0 0
        %1002 = vmatprep.subr.bf16.mxu0 0
        %1003 = vmatpush1.bf16.msra.mxu0 0
        %1004 = vmatprep.subr.bf16.mxu0 0
        %1005 = vmatpush1.bf16.msra.mxu0 0
        %1006 = vmatprep.subr.bf16.mxu0 0
        %1007 = vmatpush1.bf16.msra.mxu0 %v990
        %1008 = vmatprep.subr.bf16.mxu0 0
        %1009 = vmatpush2.bf16.msra.mxu0 0
        %1010 = vmatprep.subr.bf16.mxu0 0
        %1011 = vmatpush2.bf16.msra.mxu0 0
        %1012 = vmatprep.subr.bf16.mxu0 0
        %1013 = vmatpush2.bf16.msra.mxu0 0
        %1014 = vmatprep.subr.bf16.mxu0 0
        %1015 = vmatpush2.bf16.msra.mxu0 0
        %1016 = vmatprep.subr.bf16.mxu0 0
        %1017 = vmatpush2.bf16.msra.mxu0 0
        %1018 = vmatprep.subr.bf16.mxu0 0
        %1019 = vmatpush2.bf16.msra.mxu0 0
        %1020 = vmatprep.subr.bf16.mxu0 0
        %1021 = vmatpush2.bf16.msra.mxu0 0
        %1022 = vmatprep.subr.bf16.mxu0 0
        %1023 = vmatpush2.bf16.msra.mxu0 0
        %1024 = vmatprep.mubr.bf16.mxu0 0
        %1025 = vmatmul.mubr.bf16.gmra.mxu0 %v975
        %v1026 = vpop.f32.mrf.mxu0
        %v1027 = vadd.f32 0.0, %v1026
        %v1028 = vpop.f32.mrf.mxu0
        %v1029 = vpop.f32.mrf.mxu0
        %v1030 = vadd.f32 0.0, %v1029
        %v1031 = vpop.f32.mrf.mxu0
        %1032 = vmatprep.mubr.bf16.mxu0 0
        %1033 = vmatmul.mubr.bf16.gmra.mxu0 %v978
        %v1034 = vpop.f32.mrf.mxu0
        %v1035 = vadd.f32 0.0, %v1034
        %v1036 = vpop.f32.mrf.mxu0
        %v1037 = vpop.f32.mrf.mxu0
        %v1038 = vadd.f32 0.0, %v1037
        %v1039 = vpop.f32.mrf.mxu0
        %1040 = vmatprep.mubr.bf16.mxu0 0
        %1041 = vmatmul.mubr.bf16.gmra.mxu0 %v981
        %v1042 = vpop.f32.mrf.mxu0
        %v1043 = vadd.f32 0.0, %v1042
        %v1044 = vpop.f32.mrf.mxu0
        %v1045 = vpop.f32.mrf.mxu0
        %v1046 = vadd.f32 0.0, %v1045
        %v1047 = vpop.f32.mrf.mxu0
        %1048 = vmatprep.mubr.bf16.mxu0 0
        %1049 = vmatmul.mubr.bf16.gmra.mxu0 %v984
        %v1050 = vpop.f32.mrf.mxu0
        %v1051 = vadd.f32 0.0, %v1050
        %v1052 = vpop.f32.mrf.mxu0
        %v1053 = vpop.f32.mrf.mxu0
        %v1054 = vadd.f32 0.0, %v1053
        %v1055 = vpop.f32.mrf.mxu0
        %1056 = vmatprep.mubr.bf16.mxu0 0
        %1057 = vmatmul.mubr.bf16.gmra.mxu0 %v987
        %v1058 = vpop.f32.mrf.mxu0
        %v1059 = vadd.f32 0.0, %v1058
        %v1060 = vpop.f32.mrf.mxu0
        %v1061 = vpop.f32.mrf.mxu0
        %v1062 = vadd.f32 0.0, %v1061
        %v1063 = vpop.f32.mrf.mxu0
        %1064 = vdwg.mxu0
        %v1065 = vadd.f32 %v879, %v1027
        %v1066 = vadd.f32 %v880, %v1030
        %v1067 = vadd.f32 %v881, %v1035
        %v1068 = vadd.f32 %v882, %v1038
        %v1069 = vadd.f32 %v883, %v1043
        %v1070 = vadd.f32 %v884, %v1046
        %v1071 = vadd.f32 %v885, %v1051
        %v1072 = vadd.f32 %v886, %v1054
        %v1073 = vadd.f32 %v887, %v1059
        %v1074 = vadd.f32 %v888, %v1062
        %v1075 = vld [vmem:[%s428] sm:$0xe]
        %s1076 = scalar_lea.vmem %s4, 8
        %v1077 = vld [vmem:[%s1076] sm:$0x3]
        %v1079 = vunpack.c.l.b16 %v1075
        %v1080 = vpack.c.b16 %v727, %v1079
        %vm1081 = vcmask 1046528
        %v1082 = vrot.slane %v1080, 1
        %v1083 = vrot.slane %v738, 1
        %v1084 = vsel %vm1081, %v1082, %v1083
        %v1085 = vrot.slane %v739, 1
        %v1086 = vsel %vm1081, %v1083, %v1085
        %v1087 = vrot.slane %v740, 1
        %v1088 = vsel %vm1081, %v1085, %v1087
        %v1089 = vrot.slane %v741, 1
        %v1090 = vsel %vm1081, %v1087, %v1089
        %v1091 = vrot.slane %v742, 1
        %v1092 = vsel %vm1081, %v1089, %v1091
        %v1094 = vsel %vm493, %v1084, 0
        %v1097 = vsel %vm493, %v1086, 0
        %v1100 = vsel %vm493, %v1088, 0
        %v1103 = vsel %vm493, %v1090, 0
        %v1106 = vsel %vm493, %v1092, 0
        %v1109 = vsel %vm509, %v1077, 0
        %1111 = vmatprep.subr.bf16.mxu0 0
        %1112 = vmatpush1.bf16.msra.mxu0 0
        %1113 = vmatprep.subr.bf16.mxu0 0
        %1114 = vmatpush1.bf16.msra.mxu0 0
        %1115 = vmatprep.subr.bf16.mxu0 0
        %1116 = vmatpush1.bf16.msra.mxu0 0
        %1117 = vmatprep.subr.bf16.mxu0 0
        %1118 = vmatpush1.bf16.msra.mxu0 0
        %1119 = vmatprep.subr.bf16.mxu0 0
        %1120 = vmatpush1.bf16.msra.mxu0 0
        %1121 = vmatprep.subr.bf16.mxu0 0
        %1122 = vmatpush1.bf16.msra.mxu0 0
        %1123 = vmatprep.subr.bf16.mxu0 0
        %1124 = vmatpush1.bf16.msra.mxu0 0
        %1125 = vmatprep.subr.bf16.mxu0 0
        %1126 = vmatpush1.bf16.msra.mxu0 %v1109
        %1127 = vmatprep.subr.bf16.mxu0 0
        %1128 = vmatpush2.bf16.msra.mxu0 0
        %1129 = vmatprep.subr.bf16.mxu0 0
        %1130 = vmatpush2.bf16.msra.mxu0 0
        %1131 = vmatprep.subr.bf16.mxu0 0
        %1132 = vmatpush2.bf16.msra.mxu0 0
        %1133 = vmatprep.subr.bf16.mxu0 0
        %1134 = vmatpush2.bf16.msra.mxu0 0
        %1135 = vmatprep.subr.bf16.mxu0 0
        %1136 = vmatpush2.bf16.msra.mxu0 0
        %1137 = vmatprep.subr.bf16.mxu0 0
        %1138 = vmatpush2.bf16.msra.mxu0 0
        %1139 = vmatprep.subr.bf16.mxu0 0
        %1140 = vmatpush2.bf16.msra.mxu0 0
        %1141 = vmatprep.subr.bf16.mxu0 0
        %1142 = vmatpush2.bf16.msra.mxu0 0
        %1143 = vmatprep.mubr.bf16.mxu0 0
        %1144 = vmatmul.mubr.bf16.gmra.mxu0 %v1094
        %v1145 = vpop.f32.mrf.mxu0
        %v1146 = vadd.f32 0.0, %v1145
        %v1147 = vpop.f32.mrf.mxu0
        %v1148 = vpop.f32.mrf.mxu0
        %v1149 = vadd.f32 0.0, %v1148
        %v1150 = vpop.f32.mrf.mxu0
        %1151 = vmatprep.mubr.bf16.mxu0 0
        %1152 = vmatmul.mubr.bf16.gmra.mxu0 %v1097
        %v1153 = vpop.f32.mrf.mxu0
        %v1154 = vadd.f32 0.0, %v1153
        %v1155 = vpop.f32.mrf.mxu0
        %v1156 = vpop.f32.mrf.mxu0
        %v1157 = vadd.f32 0.0, %v1156
        %v1158 = vpop.f32.mrf.mxu0
        %1159 = vmatprep.mubr.bf16.mxu0 0
        %1160 = vmatmul.mubr.bf16.gmra.mxu0 %v1100
        %v1161 = vpop.f32.mrf.mxu0
        %v1162 = vadd.f32 0.0, %v1161
        %v1163 = vpop.f32.mrf.mxu0
        %v1164 = vpop.f32.mrf.mxu0
        %v1165 = vadd.f32 0.0, %v1164
        %v1166 = vpop.f32.mrf.mxu0
        %1167 = vmatprep.mubr.bf16.mxu0 0
        %1168 = vmatmul.mubr.bf16.gmra.mxu0 %v1103
        %v1169 = vpop.f32.mrf.mxu0
        %v1170 = vadd.f32 0.0, %v1169
        %v1171 = vpop.f32.mrf.mxu0
        %v1172 = vpop.f32.mrf.mxu0
        %v1173 = vadd.f32 0.0, %v1172
        %v1174 = vpop.f32.mrf.mxu0
        %1175 = vmatprep.mubr.bf16.mxu0 0
        %1176 = vmatmul.mubr.bf16.gmra.mxu0 %v1106
        %v1177 = vpop.f32.mrf.mxu0
        %v1178 = vadd.f32 0.0, %v1177
        %v1179 = vpop.f32.mrf.mxu0
        %v1180 = vpop.f32.mrf.mxu0
        %v1181 = vadd.f32 0.0, %v1180
        %v1182 = vpop.f32.mrf.mxu0
        %1183 = vdwg.mxu0
        %v1184 = vadd.f32 %v1065, %v1146
        %v1185 = vadd.f32 %v1066, %v1149
        %v1186 = vadd.f32 %v1067, %v1154
        %v1187 = vadd.f32 %v1068, %v1157
        %v1188 = vadd.f32 %v1069, %v1162
        %v1189 = vadd.f32 %v1070, %v1165
        %v1190 = vadd.f32 %v1071, %v1170
        %v1191 = vadd.f32 %v1072, %v1173
        %v1192 = vadd.f32 %v1073, %v1178
        %v1193 = vadd.f32 %v1074, %v1181
        %v1194 = vld [vmem:[%s438] sm:$0xf]
        %v1195 = vld [vmem:[%s438 + $0x4] sm:$0xf]
        %v1196 = vld [vmem:[%s438 + $0x8] sm:$0xf]
        %v1197 = vld [vmem:[%s438 + $0xc] sm:$0xf]
        %v1198 = vld [vmem:[%s438 + $0x10] sm:$0xf]
        %v1199 = vld [vmem:[%s438 + $0x14] sm:$0xf]
        %v1200 = vld [vmem:[%s438 + $0x18] sm:$0xf]
        %v1201 = vld [vmem:[%s438 + $0x1c] sm:$0xf]
        %v1202 = vld [vmem:[%s438 + $0x20] sm:$0xf]
        %v1203 = vld [vmem:[%s438 + $0x24] sm:$0xf]
        %s1204 = scalar_lea.vmem %s4, 10
        %v1205 = vld [vmem:[%s1204] sm:$0x3]
        %v1216 = vunpack.c.l.b16 %v1194
        %v1217 = vunpack.c.l.b16 %v1195
        %v1218 = vunpack.c.l.b16 %v1196
        %v1219 = vunpack.c.l.b16 %v1197
        %v1220 = vunpack.c.l.b16 %v1198
        %v1221 = vunpack.c.l.b16 %v1199
        %v1222 = vunpack.c.l.b16 %v1200
        %v1223 = vunpack.c.l.b16 %v1201
        %v1224 = vunpack.c.l.b16 %v1202
        %v1225 = vunpack.c.l.b16 %v1203
        %v1226 = vpack.c.b16 %v1217, %v1216
        %v1227 = vpack.c.b16 %v1219, %v1218
        %v1228 = vpack.c.b16 %v1221, %v1220
        %v1229 = vpack.c.b16 %v1223, %v1222
        %v1230 = vpack.c.b16 %v1225, %v1224
        %v1232 = vsel %vm493, %v1226, 0
        %v1235 = vsel %vm493, %v1227, 0
        %v1238 = vsel %vm493, %v1228, 0
        %v1241 = vsel %vm493, %v1229, 0
        %v1244 = vsel %vm493, %v1230, 0
        %v1247 = vsel %vm509, %v1205, 0
        %1249 = vmatprep.subr.bf16.mxu0 0
        %1250 = vmatpush1.bf16.msra.mxu0 0
        %1251 = vmatprep.subr.bf16.mxu0 0
        %1252 = vmatpush1.bf16.msra.mxu0 0
        %1253 = vmatprep.subr.bf16.mxu0 0
        %1254 = vmatpush1.bf16.msra.mxu0 0
        %1255 = vmatprep.subr.bf16.mxu0 0
        %1256 = vmatpush1.bf16.msra.mxu0 0
        %1257 = vmatprep.subr.bf16.mxu0 0
        %1258 = vmatpush1.bf16.msra.mxu0 0
        %1259 = vmatprep.subr.bf16.mxu0 0
        %1260 = vmatpush1.bf16.msra.mxu0 0
        %1261 = vmatprep.subr.bf16.mxu0 0
        %1262 = vmatpush1.bf16.msra.mxu0 0
        %1263 = vmatprep.subr.bf16.mxu0 0
        %1264 = vmatpush1.bf16.msra.mxu0 %v1247
        %1265 = vmatprep.subr.bf16.mxu0 0
        %1266 = vmatpush2.bf16.msra.mxu0 0
        %1267 = vmatprep.subr.bf16.mxu0 0
        %1268 = vmatpush2.bf16.msra.mxu0 0
        %1269 = vmatprep.subr.bf16.mxu0 0
        %1270 = vmatpush2.bf16.msra.mxu0 0
        %1271 = vmatprep.subr.bf16.mxu0 0
        %1272 = vmatpush2.bf16.msra.mxu0 0
        %1273 = vmatprep.subr.bf16.mxu0 0
        %1274 = vmatpush2.bf16.msra.mxu0 0
        %1275 = vmatprep.subr.bf16.mxu0 0
        %1276 = vmatpush2.bf16.msra.mxu0 0
        %1277 = vmatprep.subr.bf16.mxu0 0
        %1278 = vmatpush2.bf16.msra.mxu0 0
        %1279 = vmatprep.subr.bf16.mxu0 0
        %1280 = vmatpush2.bf16.msra.mxu0 0
        %1281 = vmatprep.mubr.bf16.mxu0 0
        %1282 = vmatmul.mubr.bf16.gmra.mxu0 %v1232
        %v1283 = vpop.f32.mrf.mxu0
        %v1284 = vadd.f32 0.0, %v1283
        %v1285 = vpop.f32.mrf.mxu0
        %v1286 = vpop.f32.mrf.mxu0
        %v1287 = vadd.f32 0.0, %v1286
        %v1288 = vpop.f32.mrf.mxu0
        %1289 = vmatprep.mubr.bf16.mxu0 0
        %1290 = vmatmul.mubr.bf16.gmra.mxu0 %v1235
        %v1291 = vpop.f32.mrf.mxu0
        %v1292 = vadd.f32 0.0, %v1291
        %v1293 = vpop.f32.mrf.mxu0
        %v1294 = vpop.f32.mrf.mxu0
        %v1295 = vadd.f32 0.0, %v1294
        %v1296 = vpop.f32.mrf.mxu0
        %1297 = vmatprep.mubr.bf16.mxu0 0
        %1298 = vmatmul.mubr.bf16.gmra.mxu0 %v1238
        %v1299 = vpop.f32.mrf.mxu0
        %v1300 = vadd.f32 0.0, %v1299
        %v1301 = vpop.f32.mrf.mxu0
        %v1302 = vpop.f32.mrf.mxu0
        %v1303 = vadd.f32 0.0, %v1302
        %v1304 = vpop.f32.mrf.mxu0
        %1305 = vmatprep.mubr.bf16.mxu0 0
        %1306 = vmatmul.mubr.bf16.gmra.mxu0 %v1241
        %v1307 = vpop.f32.mrf.mxu0
        %v1308 = vadd.f32 0.0, %v1307
        %v1309 = vpop.f32.mrf.mxu0
        %v1310 = vpop.f32.mrf.mxu0
        %v1311 = vadd.f32 0.0, %v1310
        %v1312 = vpop.f32.mrf.mxu0
        %1313 = vmatprep.mubr.bf16.mxu0 0
        %1314 = vmatmul.mubr.bf16.gmra.mxu0 %v1244
        %v1315 = vpop.f32.mrf.mxu0
        %v1316 = vadd.f32 0.0, %v1315
        %v1317 = vpop.f32.mrf.mxu0
        %v1318 = vpop.f32.mrf.mxu0
        %v1319 = vadd.f32 0.0, %v1318
        %v1320 = vpop.f32.mrf.mxu0
        %1321 = vdwg.mxu0
        %v1322 = vadd.f32 %v1184, %v1284
        %v1323 = vadd.f32 %v1185, %v1287
        %v1324 = vadd.f32 %v1186, %v1292
        %v1325 = vadd.f32 %v1187, %v1295
        %v1326 = vadd.f32 %v1188, %v1300
        %v1327 = vadd.f32 %v1189, %v1303
        %v1328 = vadd.f32 %v1190, %v1308
        %v1329 = vadd.f32 %v1191, %v1311
        %v1330 = vadd.f32 %v1192, %v1316
        %v1331 = vadd.f32 %v1193, %v1319
        %v1332 = vld [vmem:[%s443] sm:$0xf]
        %v1333 = vld [vmem:[%s443 + $0x4] sm:$0xf]
        %v1334 = vld [vmem:[%s443 + $0x8] sm:$0xf]
        %v1335 = vld [vmem:[%s443 + $0xc] sm:$0xf]
        %v1336 = vld [vmem:[%s443 + $0x10] sm:$0xf]
        %v1337 = vld [vmem:[%s443 + $0x14] sm:$0xf]
        %v1338 = vld [vmem:[%s443 + $0x18] sm:$0xf]
        %v1339 = vld [vmem:[%s443 + $0x1c] sm:$0xf]
        %v1340 = vld [vmem:[%s443 + $0x20] sm:$0xf]
        %v1341 = vld [vmem:[%s443 + $0x24] sm:$0xf]
        %s1342 = scalar_lea.vmem %s4, 12
        %v1343 = vld [vmem:[%s1342] sm:$0x3]
        %v1354 = vunpack.c.l.b16 %v1332
        %v1355 = vunpack.c.l.b16 %v1333
        %v1356 = vunpack.c.l.b16 %v1334
        %v1357 = vunpack.c.l.b16 %v1335
        %v1358 = vunpack.c.l.b16 %v1336
        %v1359 = vunpack.c.l.b16 %v1337
        %v1360 = vunpack.c.l.b16 %v1338
        %v1361 = vunpack.c.l.b16 %v1339
        %v1362 = vunpack.c.l.b16 %v1340
        %v1363 = vunpack.c.l.b16 %v1341
        %v1364 = vpack.c.b16 %v1355, %v1354
        %v1365 = vpack.c.b16 %v1357, %v1356
        %v1366 = vpack.c.b16 %v1359, %v1358
        %v1367 = vpack.c.b16 %v1361, %v1360
        %v1368 = vpack.c.b16 %v1363, %v1362
        %v1370 = vsel %vm493, %v1364, 0
        %v1373 = vsel %vm493, %v1365, 0
        %v1376 = vsel %vm493, %v1366, 0
        %v1379 = vsel %vm493, %v1367, 0
        %v1382 = vsel %vm493, %v1368, 0
        %v1385 = vsel %vm509, %v1343, 0
        %1387 = vmatprep.subr.bf16.mxu0 0
        %1388 = vmatpush1.bf16.msra.mxu0 0
        %1389 = vmatprep.subr.bf16.mxu0 0
        %1390 = vmatpush1.bf16.msra.mxu0 0
        %1391 = vmatprep.subr.bf16.mxu0 0
        %1392 = vmatpush1.bf16.msra.mxu0 0
        %1393 = vmatprep.subr.bf16.mxu0 0
        %1394 = vmatpush1.bf16.msra.mxu0 0
        %1395 = vmatprep.subr.bf16.mxu0 0
        %1396 = vmatpush1.bf16.msra.mxu0 0
        %1397 = vmatprep.subr.bf16.mxu0 0
        %1398 = vmatpush1.bf16.msra.mxu0 0
        %1399 = vmatprep.subr.bf16.mxu0 0
        %1400 = vmatpush1.bf16.msra.mxu0 0
        %1401 = vmatprep.subr.bf16.mxu0 0
        %1402 = vmatpush1.bf16.msra.mxu0 %v1385
        %1403 = vmatprep.subr.bf16.mxu0 0
        %1404 = vmatpush2.bf16.msra.mxu0 0
        %1405 = vmatprep.subr.bf16.mxu0 0
        %1406 = vmatpush2.bf16.msra.mxu0 0
        %1407 = vmatprep.subr.bf16.mxu0 0
        %1408 = vmatpush2.bf16.msra.mxu0 0
        %1409 = vmatprep.subr.bf16.mxu0 0
        %1410 = vmatpush2.bf16.msra.mxu0 0
        %1411 = vmatprep.subr.bf16.mxu0 0
        %1412 = vmatpush2.bf16.msra.mxu0 0
        %1413 = vmatprep.subr.bf16.mxu0 0
        %1414 = vmatpush2.bf16.msra.mxu0 0
        %1415 = vmatprep.subr.bf16.mxu0 0
        %1416 = vmatpush2.bf16.msra.mxu0 0
        %1417 = vmatprep.subr.bf16.mxu0 0
        %1418 = vmatpush2.bf16.msra.mxu0 0
        %1419 = vmatprep.mubr.bf16.mxu0 0
        %1420 = vmatmul.mubr.bf16.gmra.mxu0 %v1370
        %v1421 = vpop.f32.mrf.mxu0
        %v1422 = vadd.f32 0.0, %v1421
        %v1423 = vpop.f32.mrf.mxu0
        %v1424 = vpop.f32.mrf.mxu0
        %v1425 = vadd.f32 0.0, %v1424
        %v1426 = vpop.f32.mrf.mxu0
        %1427 = vmatprep.mubr.bf16.mxu0 0
        %1428 = vmatmul.mubr.bf16.gmra.mxu0 %v1373
        %v1429 = vpop.f32.mrf.mxu0
        %v1430 = vadd.f32 0.0, %v1429
        %v1431 = vpop.f32.mrf.mxu0
        %v1432 = vpop.f32.mrf.mxu0
        %v1433 = vadd.f32 0.0, %v1432
        %v1434 = vpop.f32.mrf.mxu0
        %1435 = vmatprep.mubr.bf16.mxu0 0
        %1436 = vmatmul.mubr.bf16.gmra.mxu0 %v1376
        %v1437 = vpop.f32.mrf.mxu0
        %v1438 = vadd.f32 0.0, %v1437
        %v1439 = vpop.f32.mrf.mxu0
        %v1440 = vpop.f32.mrf.mxu0
        %v1441 = vadd.f32 0.0, %v1440
        %v1442 = vpop.f32.mrf.mxu0
        %1443 = vmatprep.mubr.bf16.mxu0 0
        %1444 = vmatmul.mubr.bf16.gmra.mxu0 %v1379
        %v1445 = vpop.f32.mrf.mxu0
        %v1446 = vadd.f32 0.0, %v1445
        %v1447 = vpop.f32.mrf.mxu0
        %v1448 = vpop.f32.mrf.mxu0
        %v1449 = vadd.f32 0.0, %v1448
        %v1450 = vpop.f32.mrf.mxu0
        %1451 = vmatprep.mubr.bf16.mxu0 0
        %1452 = vmatmul.mubr.bf16.gmra.mxu0 %v1382
        %v1453 = vpop.f32.mrf.mxu0
        %v1454 = vadd.f32 0.0, %v1453
        %v1455 = vpop.f32.mrf.mxu0
        %v1456 = vpop.f32.mrf.mxu0
        %v1457 = vadd.f32 0.0, %v1456
        %v1458 = vpop.f32.mrf.mxu0
        %1459 = vdwg.mxu0
        %v1460 = vadd.f32 %v1322, %v1422
        %v1461 = vadd.f32 %v1323, %v1425
        %v1462 = vadd.f32 %v1324, %v1430
        %v1463 = vadd.f32 %v1325, %v1433
        %v1464 = vadd.f32 %v1326, %v1438
        %v1465 = vadd.f32 %v1327, %v1441
        %v1466 = vadd.f32 %v1328, %v1446
        %v1467 = vadd.f32 %v1329, %v1449
        %v1468 = vadd.f32 %v1330, %v1454
        %v1469 = vadd.f32 %v1331, %v1457
        %v1470 = vld [vmem:[%s438] sm:$0xf]
        %v1471 = vld [vmem:[%s438 + $0x4] sm:$0xf]
        %v1472 = vld [vmem:[%s438 + $0x8] sm:$0xf]
        %v1473 = vld [vmem:[%s438 + $0xc] sm:$0xf]
        %v1474 = vld [vmem:[%s438 + $0x10] sm:$0xf]
        %v1475 = vld [vmem:[%s438 + $0x14] sm:$0xf]
        %v1476 = vld [vmem:[%s438 + $0x18] sm:$0xf]
        %v1477 = vld [vmem:[%s438 + $0x1c] sm:$0xf]
        %v1478 = vld [vmem:[%s438 + $0x20] sm:$0xf]
        %v1479 = vld [vmem:[%s438 + $0x24] sm:$0xf]
        %v1480 = vld [vmem:[%s438 + $0x28] sm:$0x1]
        %s1481 = scalar_lea.vmem %s4, 14
        %v1482 = vld [vmem:[%s1481] sm:$0x3]
        %v1494 = vunpack.c.l.b16 %v1470
        %v1495 = vunpack.c.l.b16 %v1471
        %v1496 = vunpack.c.l.b16 %v1472
        %v1497 = vunpack.c.l.b16 %v1473
        %v1498 = vunpack.c.l.b16 %v1474
        %v1499 = vunpack.c.l.b16 %v1475
        %v1500 = vunpack.c.l.b16 %v1476
        %v1501 = vunpack.c.l.b16 %v1477
        %v1502 = vunpack.c.l.b16 %v1478
        %v1503 = vunpack.c.l.b16 %v1479
        %v1504 = vunpack.c.l.b16 %v1480
        %v1505 = vpack.c.b16 %v1495, %v1494
        %v1506 = vpack.c.b16 %v1497, %v1496
        %v1507 = vpack.c.b16 %v1499, %v1498
        %v1508 = vpack.c.b16 %v1501, %v1500
        %v1509 = vpack.c.b16 %v1503, %v1502
        %v1510 = vpack.c.b16 %v1504, %v1504
        %v1512 = vshrl.u32 %v1505, 16
        %v1514 = vshll.u32 %v1505, 16
        %v1516 = vrot.slane %v1514, 1
        %v1517 = vor.u32 %v1512, %v1516
        %v1519 = vshll.u32 %v1506, 16
        %v1521 = vrot.slane %v1519, 1
        %v1522 = vsel %vm743, %v1517, %v1521
        %v1523 = vshrl.u32 %v1506, 16
        %v1525 = vor.u32 %v1523, %v1521
        %v1527 = vshll.u32 %v1507, 16
        %v1529 = vrot.slane %v1527, 1
        %v1530 = vsel %vm743, %v1525, %v1529
        %v1531 = vshrl.u32 %v1507, 16
        %v1533 = vor.u32 %v1531, %v1529
        %v1535 = vshll.u32 %v1508, 16
        %v1537 = vrot.slane %v1535, 1
        %v1538 = vsel %vm743, %v1533, %v1537
        %v1539 = vshrl.u32 %v1508, 16
        %v1541 = vor.u32 %v1539, %v1537
        %v1543 = vshll.u32 %v1509, 16
        %v1545 = vrot.slane %v1543, 1
        %v1546 = vsel %vm743, %v1541, %v1545
        %v1547 = vshrl.u32 %v1509, 16
        %v1549 = vor.u32 %v1547, %v1545
        %v1551 = vshll.u32 %v1510, 16
        %v1553 = vrot.slane %v1551, 1
        %v1554 = vsel %vm743, %v1549, %v1553
        %v1556 = vsel %vm493, %v1522, 0
        %v1559 = vsel %vm493, %v1530, 0
        %v1562 = vsel %vm493, %v1538, 0
        %v1565 = vsel %vm493, %v1546, 0
        %v1568 = vsel %vm493, %v1554, 0
        %v1571 = vsel %vm509, %v1482, 0
        %1573 = vmatprep.subr.bf16.mxu0 0
        %1574 = vmatpush1.bf16.msra.mxu0 0
        %1575 = vmatprep.subr.bf16.mxu0 0
        %1576 = vmatpush1.bf16.msra.mxu0 0
        %1577 = vmatprep.subr.bf16.mxu0 0
        %1578 = vmatpush1.bf16.msra.mxu0 0
        %1579 = vmatprep.subr.bf16.mxu0 0
        %1580 = vmatpush1.bf16.msra.mxu0 0
        %1581 = vmatprep.subr.bf16.mxu0 0
        %1582 = vmatpush1.bf16.msra.mxu0 0
        %1583 = vmatprep.subr.bf16.mxu0 0
        %1584 = vmatpush1.bf16.msra.mxu0 0
        %1585 = vmatprep.subr.bf16.mxu0 0
        %1586 = vmatpush1.bf16.msra.mxu0 0
        %1587 = vmatprep.subr.bf16.mxu0 0
        %1588 = vmatpush1.bf16.msra.mxu0 %v1571
        %1589 = vmatprep.subr.bf16.mxu0 0
        %1590 = vmatpush2.bf16.msra.mxu0 0
        %1591 = vmatprep.subr.bf16.mxu0 0
        %1592 = vmatpush2.bf16.msra.mxu0 0
        %1593 = vmatprep.subr.bf16.mxu0 0
        %1594 = vmatpush2.bf16.msra.mxu0 0
        %1595 = vmatprep.subr.bf16.mxu0 0
        %1596 = vmatpush2.bf16.msra.mxu0 0
        %1597 = vmatprep.subr.bf16.mxu0 0
        %1598 = vmatpush2.bf16.msra.mxu0 0
        %1599 = vmatprep.subr.bf16.mxu0 0
        %1600 = vmatpush2.bf16.msra.mxu0 0
        %1601 = vmatprep.subr.bf16.mxu0 0
        %1602 = vmatpush2.bf16.msra.mxu0 0
        %1603 = vmatprep.subr.bf16.mxu0 0
        %1604 = vmatpush2.bf16.msra.mxu0 0
        %1605 = vmatprep.mubr.bf16.mxu0 0
        %1606 = vmatmul.mubr.bf16.gmra.mxu0 %v1556
        %v1607 = vpop.f32.mrf.mxu0
        %v1608 = vadd.f32 0.0, %v1607
        %v1609 = vpop.f32.mrf.mxu0
        %v1610 = vpop.f32.mrf.mxu0
        %v1611 = vadd.f32 0.0, %v1610
        %v1612 = vpop.f32.mrf.mxu0
        %1613 = vmatprep.mubr.bf16.mxu0 0
        %1614 = vmatmul.mubr.bf16.gmra.mxu0 %v1559
        %v1615 = vpop.f32.mrf.mxu0
        %v1616 = vadd.f32 0.0, %v1615
        %v1617 = vpop.f32.mrf.mxu0
        %v1618 = vpop.f32.mrf.mxu0
        %v1619 = vadd.f32 0.0, %v1618
        %v1620 = vpop.f32.mrf.mxu0
        %1621 = vmatprep.mubr.bf16.mxu0 0
        %1622 = vmatmul.mubr.bf16.gmra.mxu0 %v1562
        %v1623 = vpop.f32.mrf.mxu0
        %v1624 = vadd.f32 0.0, %v1623
        %v1625 = vpop.f32.mrf.mxu0
        %v1626 = vpop.f32.mrf.mxu0
        %v1627 = vadd.f32 0.0, %v1626
        %v1628 = vpop.f32.mrf.mxu0
        %1629 = vmatprep.mubr.bf16.mxu0 0
        %1630 = vmatmul.mubr.bf16.gmra.mxu0 %v1565
        %v1631 = vpop.f32.mrf.mxu0
        %v1632 = vadd.f32 0.0, %v1631
        %v1633 = vpop.f32.mrf.mxu0
        %v1634 = vpop.f32.mrf.mxu0
        %v1635 = vadd.f32 0.0, %v1634
        %v1636 = vpop.f32.mrf.mxu0
        %1637 = vmatprep.mubr.bf16.mxu0 0
        %1638 = vmatmul.mubr.bf16.gmra.mxu0 %v1568
        %v1639 = vpop.f32.mrf.mxu0
        %v1640 = vadd.f32 0.0, %v1639
        %v1641 = vpop.f32.mrf.mxu0
        %v1642 = vpop.f32.mrf.mxu0
        %v1643 = vadd.f32 0.0, %v1642
        %v1644 = vpop.f32.mrf.mxu0
        %1645 = vdwg.mxu0
        %v1646 = vadd.f32 %v1460, %v1608
        %v1647 = vadd.f32 %v1461, %v1611
        %v1648 = vadd.f32 %v1462, %v1616
        %v1649 = vadd.f32 %v1463, %v1619
        %v1650 = vadd.f32 %v1464, %v1624
        %v1651 = vadd.f32 %v1465, %v1627
        %v1652 = vadd.f32 %v1466, %v1632
        %v1653 = vadd.f32 %v1467, %v1635
        %v1654 = vadd.f32 %v1468, %v1640
        %v1655 = vadd.f32 %v1469, %v1643
        %v1656 = vld [vmem:[%s443] sm:$0xf]
        %v1657 = vld [vmem:[%s443 + $0x4] sm:$0xf]
        %v1658 = vld [vmem:[%s443 + $0x8] sm:$0xf]
        %v1659 = vld [vmem:[%s443 + $0xc] sm:$0xf]
        %v1660 = vld [vmem:[%s443 + $0x10] sm:$0xf]
        %v1661 = vld [vmem:[%s443 + $0x14] sm:$0xf]
        %v1662 = vld [vmem:[%s443 + $0x18] sm:$0xf]
        %v1663 = vld [vmem:[%s443 + $0x1c] sm:$0xf]
        %v1664 = vld [vmem:[%s443 + $0x20] sm:$0xf]
        %v1665 = vld [vmem:[%s443 + $0x24] sm:$0xf]
        %v1666 = vld [vmem:[%s443 + $0x28] sm:$0x1]
        %s1667 = scalar_lea.vmem %s4, 16
        %v1668 = vld [vmem:[%s1667] sm:$0x3]
        %v1680 = vunpack.c.l.b16 %v1656
        %v1681 = vunpack.c.l.b16 %v1657
        %v1682 = vunpack.c.l.b16 %v1658
        %v1683 = vunpack.c.l.b16 %v1659
        %v1684 = vunpack.c.l.b16 %v1660
        %v1685 = vunpack.c.l.b16 %v1661
        %v1686 = vunpack.c.l.b16 %v1662
        %v1687 = vunpack.c.l.b16 %v1663
        %v1688 = vunpack.c.l.b16 %v1664
        %v1689 = vunpack.c.l.b16 %v1665
        %v1690 = vunpack.c.l.b16 %v1666
        %v1691 = vpack.c.b16 %v1681, %v1680
        %v1692 = vpack.c.b16 %v1683, %v1682
        %v1693 = vpack.c.b16 %v1685, %v1684
        %v1694 = vpack.c.b16 %v1687, %v1686
        %v1695 = vpack.c.b16 %v1689, %v1688
        %v1696 = vpack.c.b16 %v1690, %v1690
        %v1698 = vshrl.u32 %v1691, 16
        %v1700 = vshll.u32 %v1691, 16
        %v1702 = vrot.slane %v1700, 1
        %v1703 = vor.u32 %v1698, %v1702
        %v1705 = vshll.u32 %v1692, 16
        %v1707 = vrot.slane %v1705, 1
        %v1708 = vsel %vm743, %v1703, %v1707
        %v1709 = vshrl.u32 %v1692, 16
        %v1711 = vor.u32 %v1709, %v1707
        %v1713 = vshll.u32 %v1693, 16
        %v1715 = vrot.slane %v1713, 1
        %v1716 = vsel %vm743, %v1711, %v1715
        %v1717 = vshrl.u32 %v1693, 16
        %v1719 = vor.u32 %v1717, %v1715
        %v1721 = vshll.u32 %v1694, 16
        %v1723 = vrot.slane %v1721, 1
        %v1724 = vsel %vm743, %v1719, %v1723
        %v1725 = vshrl.u32 %v1694, 16
        %v1727 = vor.u32 %v1725, %v1723
        %v1729 = vshll.u32 %v1695, 16
        %v1731 = vrot.slane %v1729, 1
        %v1732 = vsel %vm743, %v1727, %v1731
        %v1733 = vshrl.u32 %v1695, 16
        %v1735 = vor.u32 %v1733, %v1731
        %v1737 = vshll.u32 %v1696, 16
        %v1739 = vrot.slane %v1737, 1
        %v1740 = vsel %vm743, %v1735, %v1739
        %v1742 = vsel %vm493, %v1708, 0
        %v1745 = vsel %vm493, %v1716, 0
        %v1748 = vsel %vm493, %v1724, 0
        %v1751 = vsel %vm493, %v1732, 0
        %v1754 = vsel %vm493, %v1740, 0
        %v1757 = vsel %vm509, %v1668, 0
        %1759 = vmatprep.subr.bf16.mxu0 0
        %1760 = vmatpush1.bf16.msra.mxu0 0
        %1761 = vmatprep.subr.bf16.mxu0 0
        %1762 = vmatpush1.bf16.msra.mxu0 0
        %1763 = vmatprep.subr.bf16.mxu0 0
        %1764 = vmatpush1.bf16.msra.mxu0 0
        %1765 = vmatprep.subr.bf16.mxu0 0
        %1766 = vmatpush1.bf16.msra.mxu0 0
        %1767 = vmatprep.subr.bf16.mxu0 0
        %1768 = vmatpush1.bf16.msra.mxu0 0
        %1769 = vmatprep.subr.bf16.mxu0 0
        %1770 = vmatpush1.bf16.msra.mxu0 0
        %1771 = vmatprep.subr.bf16.mxu0 0
        %1772 = vmatpush1.bf16.msra.mxu0 0
        %1773 = vmatprep.subr.bf16.mxu0 0
        %1774 = vmatpush1.bf16.msra.mxu0 %v1757
        %1775 = vmatprep.subr.bf16.mxu0 0
        %1776 = vmatpush2.bf16.msra.mxu0 0
        %1777 = vmatprep.subr.bf16.mxu0 0
        %1778 = vmatpush2.bf16.msra.mxu0 0
        %1779 = vmatprep.subr.bf16.mxu0 0
        %1780 = vmatpush2.bf16.msra.mxu0 0
        %1781 = vmatprep.subr.bf16.mxu0 0
        %1782 = vmatpush2.bf16.msra.mxu0 0
        %1783 = vmatprep.subr.bf16.mxu0 0
        %1784 = vmatpush2.bf16.msra.mxu0 0
        %1785 = vmatprep.subr.bf16.mxu0 0
        %1786 = vmatpush2.bf16.msra.mxu0 0
        %1787 = vmatprep.subr.bf16.mxu0 0
        %1788 = vmatpush2.bf16.msra.mxu0 0
        %1789 = vmatprep.subr.bf16.mxu0 0
        %1790 = vmatpush2.bf16.msra.mxu0 0
        %1791 = vmatprep.mubr.bf16.mxu0 0
        %1792 = vmatmul.mubr.bf16.gmra.mxu0 %v1742
        %v1793 = vpop.f32.mrf.mxu0
        %v1794 = vadd.f32 0.0, %v1793
        %v1795 = vpop.f32.mrf.mxu0
        %v1796 = vpop.f32.mrf.mxu0
        %v1797 = vadd.f32 0.0, %v1796
        %v1798 = vpop.f32.mrf.mxu0
        %1799 = vmatprep.mubr.bf16.mxu0 0
        %1800 = vmatmul.mubr.bf16.gmra.mxu0 %v1745
        %v1801 = vpop.f32.mrf.mxu0
        %v1802 = vadd.f32 0.0, %v1801
        %v1803 = vpop.f32.mrf.mxu0
        %v1804 = vpop.f32.mrf.mxu0
        %v1805 = vadd.f32 0.0, %v1804
        %v1806 = vpop.f32.mrf.mxu0
        %1807 = vmatprep.mubr.bf16.mxu0 0
        %1808 = vmatmul.mubr.bf16.gmra.mxu0 %v1748
        %v1809 = vpop.f32.mrf.mxu0
        %v1810 = vadd.f32 0.0, %v1809
        %v1811 = vpop.f32.mrf.mxu0
        %v1812 = vpop.f32.mrf.mxu0
        %v1813 = vadd.f32 0.0, %v1812
        %v1814 = vpop.f32.mrf.mxu0
        %1815 = vmatprep.mubr.bf16.mxu0 0
        %1816 = vmatmul.mubr.bf16.gmra.mxu0 %v1751
        %v1817 = vpop.f32.mrf.mxu0
        %v1818 = vadd.f32 0.0, %v1817
        %v1819 = vpop.f32.mrf.mxu0
        %v1820 = vpop.f32.mrf.mxu0
        %v1821 = vadd.f32 0.0, %v1820
        %v1822 = vpop.f32.mrf.mxu0
        %1823 = vmatprep.mubr.bf16.mxu0 0
        %1824 = vmatmul.mubr.bf16.gmra.mxu0 %v1754
        %v1825 = vpop.f32.mrf.mxu0
        %v1826 = vadd.f32 0.0, %v1825
        %v1827 = vpop.f32.mrf.mxu0
        %v1828 = vpop.f32.mrf.mxu0
        %v1829 = vadd.f32 0.0, %v1828
        %v1830 = vpop.f32.mrf.mxu0
        %1831 = vdwg.mxu0
        %v1832 = vadd.f32 %v1646, %v1794
        %v1833 = vadd.f32 %v1647, %v1797
        %v1834 = vadd.f32 %v1648, %v1802
        %v1835 = vadd.f32 %v1649, %v1805
        %v1836 = vadd.f32 %v1650, %v1810
        %v1837 = vadd.f32 %v1651, %v1813
        %v1838 = vadd.f32 %v1652, %v1818
        %v1839 = vadd.f32 %v1653, %v1821
        %v1840 = vadd.f32 %v1654, %v1826
        %v1841 = vadd.f32 %v1655, %v1829
        %v1842 = vld [vmem:[%s438] sm:$0xe]
        %s1843 = scalar_lea.vmem %s4, 18
        %v1844 = vld [vmem:[%s1843] sm:$0x3]
        %v1846 = vunpack.c.l.b16 %v1842
        %v1847 = vpack.c.b16 %v1495, %v1846
        %v1848 = vrot.slane %v1847, 1
        %v1849 = vrot.slane %v1506, 1
        %v1850 = vsel %vm1081, %v1848, %v1849
        %v1851 = vrot.slane %v1507, 1
        %v1852 = vsel %vm1081, %v1849, %v1851
        %v1853 = vrot.slane %v1508, 1
        %v1854 = vsel %vm1081, %v1851, %v1853
        %v1855 = vrot.slane %v1509, 1
        %v1856 = vsel %vm1081, %v1853, %v1855
        %v1857 = vrot.slane %v1510, 1
        %v1858 = vsel %vm1081, %v1855, %v1857
        %v1860 = vsel %vm493, %v1850, 0
        %v1863 = vsel %vm493, %v1852, 0
        %v1866 = vsel %vm493, %v1854, 0
        %v1869 = vsel %vm493, %v1856, 0
        %v1872 = vsel %vm493, %v1858, 0
        %v1875 = vsel %vm509, %v1844, 0
        %1877 = vmatprep.subr.bf16.mxu0 0
        %1878 = vmatpush1.bf16.msra.mxu0 0
        %1879 = vmatprep.subr.bf16.mxu0 0
        %1880 = vmatpush1.bf16.msra.mxu0 0
        %1881 = vmatprep.subr.bf16.mxu0 0
        %1882 = vmatpush1.bf16.msra.mxu0 0
        %1883 = vmatprep.subr.bf16.mxu0 0
        %1884 = vmatpush1.bf16.msra.mxu0 0
        %1885 = vmatprep.subr.bf16.mxu0 0
        %1886 = vmatpush1.bf16.msra.mxu0 0
        %1887 = vmatprep.subr.bf16.mxu0 0
        %1888 = vmatpush1.bf16.msra.mxu0 0
        %1889 = vmatprep.subr.bf16.mxu0 0
        %1890 = vmatpush1.bf16.msra.mxu0 0
        %1891 = vmatprep.subr.bf16.mxu0 0
        %1892 = vmatpush1.bf16.msra.mxu0 %v1875
        %1893 = vmatprep.subr.bf16.mxu0 0
        %1894 = vmatpush2.bf16.msra.mxu0 0
        %1895 = vmatprep.subr.bf16.mxu0 0
        %1896 = vmatpush2.bf16.msra.mxu0 0
        %1897 = vmatprep.subr.bf16.mxu0 0
        %1898 = vmatpush2.bf16.msra.mxu0 0
        %1899 = vmatprep.subr.bf16.mxu0 0
        %1900 = vmatpush2.bf16.msra.mxu0 0
        %1901 = vmatprep.subr.bf16.mxu0 0
        %1902 = vmatpush2.bf16.msra.mxu0 0
        %1903 = vmatprep.subr.bf16.mxu0 0
        %1904 = vmatpush2.bf16.msra.mxu0 0
        %1905 = vmatprep.subr.bf16.mxu0 0
        %1906 = vmatpush2.bf16.msra.mxu0 0
        %1907 = vmatprep.subr.bf16.mxu0 0
        %1908 = vmatpush2.bf16.msra.mxu0 0
        %1909 = vmatprep.mubr.bf16.mxu0 0
        %1910 = vmatmul.mubr.bf16.gmra.mxu0 %v1860
        %v1911 = vpop.f32.mrf.mxu0
        %v1912 = vadd.f32 0.0, %v1911
        %v1913 = vpop.f32.mrf.mxu0
        %v1914 = vpop.f32.mrf.mxu0
        %v1915 = vadd.f32 0.0, %v1914
        %v1916 = vpop.f32.mrf.mxu0
        %1917 = vmatprep.mubr.bf16.mxu0 0
        %1918 = vmatmul.mubr.bf16.gmra.mxu0 %v1863
        %v1919 = vpop.f32.mrf.mxu0
        %v1920 = vadd.f32 0.0, %v1919
        %v1921 = vpop.f32.mrf.mxu0
        %v1922 = vpop.f32.mrf.mxu0
        %v1923 = vadd.f32 0.0, %v1922
        %v1924 = vpop.f32.mrf.mxu0
        %1925 = vmatprep.mubr.bf16.mxu0 0
        %1926 = vmatmul.mubr.bf16.gmra.mxu0 %v1866
        %v1927 = vpop.f32.mrf.mxu0
        %v1928 = vadd.f32 0.0, %v1927
        %v1929 = vpop.f32.mrf.mxu0
        %v1930 = vpop.f32.mrf.mxu0
        %v1931 = vadd.f32 0.0, %v1930
        %v1932 = vpop.f32.mrf.mxu0
        %1933 = vmatprep.mubr.bf16.mxu0 0
        %1934 = vmatmul.mubr.bf16.gmra.mxu0 %v1869
        %v1935 = vpop.f32.mrf.mxu0
        %v1936 = vadd.f32 0.0, %v1935
        %v1937 = vpop.f32.mrf.mxu0
        %v1938 = vpop.f32.mrf.mxu0
        %v1939 = vadd.f32 0.0, %v1938
        %v1940 = vpop.f32.mrf.mxu0
        %1941 = vmatprep.mubr.bf16.mxu0 0
        %1942 = vmatmul.mubr.bf16.gmra.mxu0 %v1872
        %v1943 = vpop.f32.mrf.mxu0
        %v1944 = vadd.f32 0.0, %v1943
        %v1945 = vpop.f32.mrf.mxu0
        %v1946 = vpop.f32.mrf.mxu0
        %v1947 = vadd.f32 0.0, %v1946
        %v1948 = vpop.f32.mrf.mxu0
        %1949 = vdwg.mxu0
        %v1950 = vadd.f32 %v1832, %v1912
        %v1951 = vadd.f32 %v1833, %v1915
        %v1952 = vadd.f32 %v1834, %v1920
        %v1953 = vadd.f32 %v1835, %v1923
        %v1954 = vadd.f32 %v1836, %v1928
        %v1955 = vadd.f32 %v1837, %v1931
        %v1956 = vadd.f32 %v1838, %v1936
        %v1957 = vadd.f32 %v1839, %v1939
        %v1958 = vadd.f32 %v1840, %v1944
        %v1959 = vadd.f32 %v1841, %v1947
        %v1960 = vld [vmem:[%s428 + $0x4] sm:$0xe]
        %v1961 = vld [vmem:[%s428 + $0x8] sm:$0xf]
        %v1962 = vld [vmem:[%s428 + $0xc] sm:$0xf]
        %v1963 = vld [vmem:[%s428 + $0x10] sm:$0xf]
        %v1964 = vld [vmem:[%s428 + $0x14] sm:$0xf]
        %v1965 = vld [vmem:[%s428 + $0x18] sm:$0xf]
        %v1966 = vld [vmem:[%s428 + $0x1c] sm:$0xf]
        %v1967 = vld [vmem:[%s428 + $0x20] sm:$0xf]
        %v1968 = vld [vmem:[%s428 + $0x24] sm:$0xf]
        %v1969 = vld [vmem:[%s428 + $0x28] sm:$0xf]
        %v1970 = vld [vmem:[%s428 + $0x2c] sm:$0x1]
        %s1971 = scalar_lea.vmem %s4, 20
        %v1972 = vld [vmem:[%s1971] sm:$0x3]
        %v1984 = vunpack.c.l.b16 %v1960
        %v1985 = vunpack.c.l.b16 %v1961
        %v1986 = vunpack.c.l.b16 %v1962
        %v1987 = vunpack.c.l.b16 %v1963
        %v1988 = vunpack.c.l.b16 %v1964
        %v1989 = vunpack.c.l.b16 %v1965
        %v1990 = vunpack.c.l.b16 %v1966
        %v1991 = vunpack.c.l.b16 %v1967
        %v1992 = vunpack.c.l.b16 %v1968
        %v1993 = vunpack.c.l.b16 %v1969
        %v1994 = vunpack.c.l.b16 %v1970
        %v1995 = vpack.c.b16 %v1985, %v1984
        %v1996 = vpack.c.b16 %v1987, %v1986
        %v1997 = vpack.c.b16 %v1989, %v1988
        %v1998 = vpack.c.b16 %v1991, %v1990
        %v1999 = vpack.c.b16 %v1993, %v1992
        %v2000 = vpack.c.b16 %v1994, %v1994
        %v2001 = vrot.slane %v1995, 1
        %v2002 = vrot.slane %v1996, 1
        %v2003 = vsel %vm1081, %v2001, %v2002
        %v2004 = vrot.slane %v1997, 1
        %v2005 = vsel %vm1081, %v2002, %v2004
        %v2006 = vrot.slane %v1998, 1
        %v2007 = vsel %vm1081, %v2004, %v2006
        %v2008 = vrot.slane %v1999, 1
        %v2009 = vsel %vm1081, %v2006, %v2008
        %v2010 = vrot.slane %v2000, 1
        %v2011 = vsel %vm1081, %v2008, %v2010
        %v2013 = vsel %vm493, %v2003, 0
        %v2016 = vsel %vm493, %v2005, 0
        %v2019 = vsel %vm493, %v2007, 0
        %v2022 = vsel %vm493, %v2009, 0
        %v2025 = vsel %vm493, %v2011, 0
        %v2028 = vsel %vm509, %v1972, 0
        %2030 = vmatprep.subr.bf16.mxu0 0
        %2031 = vmatpush1.bf16.msra.mxu0 0
        %2032 = vmatprep.subr.bf16.mxu0 0
        %2033 = vmatpush1.bf16.msra.mxu0 0
        %2034 = vmatprep.subr.bf16.mxu0 0
        %2035 = vmatpush1.bf16.msra.mxu0 0
        %2036 = vmatprep.subr.bf16.mxu0 0
        %2037 = vmatpush1.bf16.msra.mxu0 0
        %2038 = vmatprep.subr.bf16.mxu0 0
        %2039 = vmatpush1.bf16.msra.mxu0 0
        %2040 = vmatprep.subr.bf16.mxu0 0
        %2041 = vmatpush1.bf16.msra.mxu0 0
        %2042 = vmatprep.subr.bf16.mxu0 0
        %2043 = vmatpush1.bf16.msra.mxu0 0
        %2044 = vmatprep.subr.bf16.mxu0 0
        %2045 = vmatpush1.bf16.msra.mxu0 %v2028
        %2046 = vmatprep.subr.bf16.mxu0 0
        %2047 = vmatpush2.bf16.msra.mxu0 0
        %2048 = vmatprep.subr.bf16.mxu0 0
        %2049 = vmatpush2.bf16.msra.mxu0 0
        %2050 = vmatprep.subr.bf16.mxu0 0
        %2051 = vmatpush2.bf16.msra.mxu0 0
        %2052 = vmatprep.subr.bf16.mxu0 0
        %2053 = vmatpush2.bf16.msra.mxu0 0
        %2054 = vmatprep.subr.bf16.mxu0 0
        %2055 = vmatpush2.bf16.msra.mxu0 0
        %2056 = vmatprep.subr.bf16.mxu0 0
        %2057 = vmatpush2.bf16.msra.mxu0 0
        %2058 = vmatprep.subr.bf16.mxu0 0
        %2059 = vmatpush2.bf16.msra.mxu0 0
        %2060 = vmatprep.subr.bf16.mxu0 0
        %2061 = vmatpush2.bf16.msra.mxu0 0
        %2062 = vmatprep.mubr.bf16.mxu0 0
        %2063 = vmatmul.mubr.bf16.gmra.mxu0 %v2013
        %v2064 = vpop.f32.mrf.mxu0
        %v2065 = vadd.f32 0.0, %v2064
        %v2066 = vpop.f32.mrf.mxu0
        %v2067 = vpop.f32.mrf.mxu0
        %v2068 = vadd.f32 0.0, %v2067
        %v2069 = vpop.f32.mrf.mxu0
        %2070 = vmatprep.mubr.bf16.mxu0 0
        %2071 = vmatmul.mubr.bf16.gmra.mxu0 %v2016
        %v2072 = vpop.f32.mrf.mxu0
        %v2073 = vadd.f32 0.0, %v2072
        %v2074 = vpop.f32.mrf.mxu0
        %v2075 = vpop.f32.mrf.mxu0
        %v2076 = vadd.f32 0.0, %v2075
        %v2077 = vpop.f32.mrf.mxu0
        %2078 = vmatprep.mubr.bf16.mxu0 0
        %2079 = vmatmul.mubr.bf16.gmra.mxu0 %v2019
        %v2080 = vpop.f32.mrf.mxu0
        %v2081 = vadd.f32 0.0, %v2080
        %v2082 = vpop.f32.mrf.mxu0
        %v2083 = vpop.f32.mrf.mxu0
        %v2084 = vadd.f32 0.0, %v2083
        %v2085 = vpop.f32.mrf.mxu0
        %2086 = vmatprep.mubr.bf16.mxu0 0
        %2087 = vmatmul.mubr.bf16.gmra.mxu0 %v2022
        %v2088 = vpop.f32.mrf.mxu0
        %v2089 = vadd.f32 0.0, %v2088
        %v2090 = vpop.f32.mrf.mxu0
        %v2091 = vpop.f32.mrf.mxu0
        %v2092 = vadd.f32 0.0, %v2091
        %v2093 = vpop.f32.mrf.mxu0
        %2094 = vmatprep.mubr.bf16.mxu0 0
        %2095 = vmatmul.mubr.bf16.gmra.mxu0 %v2025
        %v2096 = vpop.f32.mrf.mxu0
        %v2097 = vadd.f32 0.0, %v2096
        %v2098 = vpop.f32.mrf.mxu0
        %v2099 = vpop.f32.mrf.mxu0
        %v2100 = vadd.f32 0.0, %v2099
        %v2101 = vpop.f32.mrf.mxu0
        %2102 = vdwg.mxu0
        %v2103 = vadd.f32 %v1950, %v2065
        %v2104 = vadd.f32 %v1951, %v2068
        %v2105 = vadd.f32 %v1952, %v2073
        %v2106 = vadd.f32 %v1953, %v2076
        %v2107 = vadd.f32 %v1954, %v2081
        %v2108 = vadd.f32 %v1955, %v2084
        %v2109 = vadd.f32 %v1956, %v2089
        %v2110 = vadd.f32 %v1957, %v2092
        %v2111 = vadd.f32 %v1958, %v2097
        %v2112 = vadd.f32 %v1959, %v2100
        %v2113 = vld [vmem:[%s433 + $0x4] sm:$0xe]
        %v2114 = vld [vmem:[%s433 + $0x8] sm:$0xf]
        %v2115 = vld [vmem:[%s433 + $0xc] sm:$0xf]
        %v2116 = vld [vmem:[%s433 + $0x10] sm:$0xf]
        %v2117 = vld [vmem:[%s433 + $0x14] sm:$0xf]
        %v2118 = vld [vmem:[%s433 + $0x18] sm:$0xf]
        %v2119 = vld [vmem:[%s433 + $0x1c] sm:$0xf]
        %v2120 = vld [vmem:[%s433 + $0x20] sm:$0xf]
        %v2121 = vld [vmem:[%s433 + $0x24] sm:$0xf]
        %v2122 = vld [vmem:[%s433 + $0x28] sm:$0xf]
        %v2123 = vld [vmem:[%s433 + $0x2c] sm:$0x1]
        %s2124 = scalar_lea.vmem %s4, 22
        %v2125 = vld [vmem:[%s2124] sm:$0x3]
        %v2137 = vunpack.c.l.b16 %v2113
        %v2138 = vunpack.c.l.b16 %v2114
        %v2139 = vunpack.c.l.b16 %v2115
        %v2140 = vunpack.c.l.b16 %v2116
        %v2141 = vunpack.c.l.b16 %v2117
        %v2142 = vunpack.c.l.b16 %v2118
        %v2143 = vunpack.c.l.b16 %v2119
        %v2144 = vunpack.c.l.b16 %v2120
        %v2145 = vunpack.c.l.b16 %v2121
        %v2146 = vunpack.c.l.b16 %v2122
        %v2147 = vunpack.c.l.b16 %v2123
        %v2148 = vpack.c.b16 %v2138, %v2137
        %v2149 = vpack.c.b16 %v2140, %v2139
        %v2150 = vpack.c.b16 %v2142, %v2141
        %v2151 = vpack.c.b16 %v2144, %v2143
        %v2152 = vpack.c.b16 %v2146, %v2145
        %v2153 = vpack.c.b16 %v2147, %v2147
        %v2154 = vrot.slane %v2148, 1
        %v2155 = vrot.slane %v2149, 1
        %v2156 = vsel %vm1081, %v2154, %v2155
        %v2157 = vrot.slane %v2150, 1
        %v2158 = vsel %vm1081, %v2155, %v2157
        %v2159 = vrot.slane %v2151, 1
        %v2160 = vsel %vm1081, %v2157, %v2159
        %v2161 = vrot.slane %v2152, 1
        %v2162 = vsel %vm1081, %v2159, %v2161
        %v2163 = vrot.slane %v2153, 1
        %v2164 = vsel %vm1081, %v2161, %v2163
        %v2166 = vsel %vm493, %v2156, 0
        %v2169 = vsel %vm493, %v2158, 0
        %v2172 = vsel %vm493, %v2160, 0
        %v2175 = vsel %vm493, %v2162, 0
        %v2178 = vsel %vm493, %v2164, 0
        %v2181 = vsel %vm509, %v2125, 0
        %2183 = vmatprep.subr.bf16.mxu0 0
        %2184 = vmatpush1.bf16.msra.mxu0 0
        %2185 = vmatprep.subr.bf16.mxu0 0
        %2186 = vmatpush1.bf16.msra.mxu0 0
        %2187 = vmatprep.subr.bf16.mxu0 0
        %2188 = vmatpush1.bf16.msra.mxu0 0
        %2189 = vmatprep.subr.bf16.mxu0 0
        %2190 = vmatpush1.bf16.msra.mxu0 0
        %2191 = vmatprep.subr.bf16.mxu0 0
        %2192 = vmatpush1.bf16.msra.mxu0 0
        %2193 = vmatprep.subr.bf16.mxu0 0
        %2194 = vmatpush1.bf16.msra.mxu0 0
        %2195 = vmatprep.subr.bf16.mxu0 0
        %2196 = vmatpush1.bf16.msra.mxu0 0
        %2197 = vmatprep.subr.bf16.mxu0 0
        %2198 = vmatpush1.bf16.msra.mxu0 %v2181
        %2199 = vmatprep.subr.bf16.mxu0 0
        %2200 = vmatpush2.bf16.msra.mxu0 0
        %2201 = vmatprep.subr.bf16.mxu0 0
        %2202 = vmatpush2.bf16.msra.mxu0 0
        %2203 = vmatprep.subr.bf16.mxu0 0
        %2204 = vmatpush2.bf16.msra.mxu0 0
        %2205 = vmatprep.subr.bf16.mxu0 0
        %2206 = vmatpush2.bf16.msra.mxu0 0
        %2207 = vmatprep.subr.bf16.mxu0 0
        %2208 = vmatpush2.bf16.msra.mxu0 0
        %2209 = vmatprep.subr.bf16.mxu0 0
        %2210 = vmatpush2.bf16.msra.mxu0 0
        %2211 = vmatprep.subr.bf16.mxu0 0
        %2212 = vmatpush2.bf16.msra.mxu0 0
        %2213 = vmatprep.subr.bf16.mxu0 0
        %2214 = vmatpush2.bf16.msra.mxu0 0
        %2215 = vmatprep.mubr.bf16.mxu0 0
        %2216 = vmatmul.mubr.bf16.gmra.mxu0 %v2166
        %v2217 = vpop.f32.mrf.mxu0
        %v2218 = vadd.f32 0.0, %v2217
        %v2219 = vpop.f32.mrf.mxu0
        %v2220 = vpop.f32.mrf.mxu0
        %v2221 = vadd.f32 0.0, %v2220
        %v2222 = vpop.f32.mrf.mxu0
        %2223 = vmatprep.mubr.bf16.mxu0 0
        %2224 = vmatmul.mubr.bf16.gmra.mxu0 %v2169
        %v2225 = vpop.f32.mrf.mxu0
        %v2226 = vadd.f32 0.0, %v2225
        %v2227 = vpop.f32.mrf.mxu0
        %v2228 = vpop.f32.mrf.mxu0
        %v2229 = vadd.f32 0.0, %v2228
        %v2230 = vpop.f32.mrf.mxu0
        %2231 = vmatprep.mubr.bf16.mxu0 0
        %2232 = vmatmul.mubr.bf16.gmra.mxu0 %v2172
        %v2233 = vpop.f32.mrf.mxu0
        %v2234 = vadd.f32 0.0, %v2233
        %v2235 = vpop.f32.mrf.mxu0
        %v2236 = vpop.f32.mrf.mxu0
        %v2237 = vadd.f32 0.0, %v2236
        %v2238 = vpop.f32.mrf.mxu0
        %2239 = vmatprep.mubr.bf16.mxu0 0
        %2240 = vmatmul.mubr.bf16.gmra.mxu0 %v2175
        %v2241 = vpop.f32.mrf.mxu0
        %v2242 = vadd.f32 0.0, %v2241
        %v2243 = vpop.f32.mrf.mxu0
        %v2244 = vpop.f32.mrf.mxu0
        %v2245 = vadd.f32 0.0, %v2244
        %v2246 = vpop.f32.mrf.mxu0
        %2247 = vmatprep.mubr.bf16.mxu0 0
        %2248 = vmatmul.mubr.bf16.gmra.mxu0 %v2178
        %v2249 = vpop.f32.mrf.mxu0
        %v2250 = vadd.f32 0.0, %v2249
        %v2251 = vpop.f32.mrf.mxu0
        %v2252 = vpop.f32.mrf.mxu0
        %v2253 = vadd.f32 0.0, %v2252
        %v2254 = vpop.f32.mrf.mxu0
        %2255 = vdwg.mxu0
        %v2256 = vadd.f32 %v2103, %v2218
        %v2257 = vadd.f32 %v2104, %v2221
        %v2258 = vadd.f32 %v2105, %v2226
        %v2259 = vadd.f32 %v2106, %v2229
        %v2260 = vadd.f32 %v2107, %v2234
        %v2261 = vadd.f32 %v2108, %v2237
        %v2262 = vadd.f32 %v2109, %v2242
        %v2263 = vadd.f32 %v2110, %v2245
        %v2264 = vadd.f32 %v2111, %v2250
        %v2265 = vadd.f32 %v2112, %v2253
        %v2266 = vld [vmem:[%s428 + $0x2c] sm:$0x3]
        %s2267 = scalar_lea.vmem %s4, 24
        %v2268 = vld [vmem:[%s2267] sm:$0x3]
        %v2270 = vunpack.c.l.b16 %v2266
        %v2271 = vpack.c.b16 %v2270, %v2270
        %vm2272 = vsmask.f32 6400
        %v2274 = vshrl.u32 %v1995, 16
        %v2276 = vrot.slane %v2274, 1
        %v2277 = vshll.u32 %v1995, 16
        %v2279 = vrot.slane %v2277, 2
        %v2280 = vor.u32 %v2276, %v2279
        %v2282 = vshrl.u32 %v1996, 16
        %v2284 = vrot.slane %v2282, 1
        %v2285 = vshll.u32 %v1996, 16
        %v2287 = vrot.slane %v2285, 2
        %v2288 = vor.u32 %v2284, %v2287
        %v2289 = vsel %vm2272, %v2280, %v2288
        %v2291 = vshrl.u32 %v1997, 16
        %v2293 = vrot.slane %v2291, 1
        %v2294 = vshll.u32 %v1997, 16
        %v2296 = vrot.slane %v2294, 2
        %v2297 = vor.u32 %v2293, %v2296
        %v2298 = vsel %vm2272, %v2288, %v2297
        %v2300 = vshrl.u32 %v1998, 16
        %v2302 = vrot.slane %v2300, 1
        %v2303 = vshll.u32 %v1998, 16
        %v2305 = vrot.slane %v2303, 2
        %v2306 = vor.u32 %v2302, %v2305
        %v2307 = vsel %vm2272, %v2297, %v2306
        %v2309 = vshrl.u32 %v1999, 16
        %v2311 = vrot.slane %v2309, 1
        %v2312 = vshll.u32 %v1999, 16
        %v2314 = vrot.slane %v2312, 2
        %v2315 = vor.u32 %v2311, %v2314
        %v2316 = vsel %vm2272, %v2306, %v2315
        %v2318 = vshrl.u32 %v2271, 16
        %v2320 = vrot.slane %v2318, 1
        %v2321 = vshll.u32 %v2271, 16
        %v2323 = vrot.slane %v2321, 2
        %v2324 = vor.u32 %v2320, %v2323
        %v2325 = vsel %vm2272, %v2315, %v2324
        %v2327 = vsel %vm493, %v2289, 0
        %v2330 = vsel %vm493, %v2298, 0
        %v2333 = vsel %vm493, %v2307, 0
        %v2336 = vsel %vm493, %v2316, 0
        %v2339 = vsel %vm493, %v2325, 0
        %v2342 = vsel %vm509, %v2268, 0
        %2344 = vmatprep.subr.bf16.mxu0 0
        %2345 = vmatpush1.bf16.msra.mxu0 0
        %2346 = vmatprep.subr.bf16.mxu0 0
        %2347 = vmatpush1.bf16.msra.mxu0 0
        %2348 = vmatprep.subr.bf16.mxu0 0
        %2349 = vmatpush1.bf16.msra.mxu0 0
        %2350 = vmatprep.subr.bf16.mxu0 0
        %2351 = vmatpush1.bf16.msra.mxu0 0
        %2352 = vmatprep.subr.bf16.mxu0 0
        %2353 = vmatpush1.bf16.msra.mxu0 0
        %2354 = vmatprep.subr.bf16.mxu0 0
        %2355 = vmatpush1.bf16.msra.mxu0 0
        %2356 = vmatprep.subr.bf16.mxu0 0
        %2357 = vmatpush1.bf16.msra.mxu0 0
        %2358 = vmatprep.subr.bf16.mxu0 0
        %2359 = vmatpush1.bf16.msra.mxu0 %v2342
        %2360 = vmatprep.subr.bf16.mxu0 0
        %2361 = vmatpush2.bf16.msra.mxu0 0
        %2362 = vmatprep.subr.bf16.mxu0 0
        %2363 = vmatpush2.bf16.msra.mxu0 0
        %2364 = vmatprep.subr.bf16.mxu0 0
        %2365 = vmatpush2.bf16.msra.mxu0 0
        %2366 = vmatprep.subr.bf16.mxu0 0
        %2367 = vmatpush2.bf16.msra.mxu0 0
        %2368 = vmatprep.subr.bf16.mxu0 0
        %2369 = vmatpush2.bf16.msra.mxu0 0
        %2370 = vmatprep.subr.bf16.mxu0 0
        %2371 = vmatpush2.bf16.msra.mxu0 0
        %2372 = vmatprep.subr.bf16.mxu0 0
        %2373 = vmatpush2.bf16.msra.mxu0 0
        %2374 = vmatprep.subr.bf16.mxu0 0
        %2375 = vmatpush2.bf16.msra.mxu0 0
        %2376 = vmatprep.mubr.bf16.mxu0 0
        %2377 = vmatmul.mubr.bf16.gmra.mxu0 %v2327
        %v2378 = vpop.f32.mrf.mxu0
        %v2379 = vadd.f32 0.0, %v2378
        %v2380 = vpop.f32.mrf.mxu0
        %v2381 = vpop.f32.mrf.mxu0
        %v2382 = vadd.f32 0.0, %v2381
        %v2383 = vpop.f32.mrf.mxu0
        %2384 = vmatprep.mubr.bf16.mxu0 0
        %2385 = vmatmul.mubr.bf16.gmra.mxu0 %v2330
        %v2386 = vpop.f32.mrf.mxu0
        %v2387 = vadd.f32 0.0, %v2386
        %v2388 = vpop.f32.mrf.mxu0
        %v2389 = vpop.f32.mrf.mxu0
        %v2390 = vadd.f32 0.0, %v2389
        %v2391 = vpop.f32.mrf.mxu0
        %2392 = vmatprep.mubr.bf16.mxu0 0
        %2393 = vmatmul.mubr.bf16.gmra.mxu0 %v2333
        %v2394 = vpop.f32.mrf.mxu0
        %v2395 = vadd.f32 0.0, %v2394
        %v2396 = vpop.f32.mrf.mxu0
        %v2397 = vpop.f32.mrf.mxu0
        %v2398 = vadd.f32 0.0, %v2397
        %v2399 = vpop.f32.mrf.mxu0
        %2400 = vmatprep.mubr.bf16.mxu0 0
        %2401 = vmatmul.mubr.bf16.gmra.mxu0 %v2336
        %v2402 = vpop.f32.mrf.mxu0
        %v2403 = vadd.f32 0.0, %v2402
        %v2404 = vpop.f32.mrf.mxu0
        %v2405 = vpop.f32.mrf.mxu0
        %v2406 = vadd.f32 0.0, %v2405
        %v2407 = vpop.f32.mrf.mxu0
        %2408 = vmatprep.mubr.bf16.mxu0 0
        %2409 = vmatmul.mubr.bf16.gmra.mxu0 %v2339
        %v2410 = vpop.f32.mrf.mxu0
        %v2411 = vadd.f32 0.0, %v2410
        %v2412 = vpop.f32.mrf.mxu0
        %v2413 = vpop.f32.mrf.mxu0
        %v2414 = vadd.f32 0.0, %v2413
        %v2415 = vpop.f32.mrf.mxu0
        %2416 = vdwg.mxu0
        %v2417 = vadd.f32 %v2256, %v2379
        %v2418 = vadd.f32 %v2257, %v2382
        %v2419 = vadd.f32 %v2258, %v2387
        %v2420 = vadd.f32 %v2259, %v2390
        %v2421 = vadd.f32 %v2260, %v2395
        %v2422 = vadd.f32 %v2261, %v2398
        %v2423 = vadd.f32 %v2262, %v2403
        %v2424 = vadd.f32 %v2263, %v2406
        %v2425 = vadd.f32 %v2264, %v2411
        %v2426 = vadd.f32 %v2265, %v2414
        %v2427 = vld [vmem:[%s433 + $0x2c] sm:$0x3]
        %s2428 = scalar_lea.vmem %s4, 26
        %v2429 = vld [vmem:[%s2428] sm:$0x3]
        %v2431 = vunpack.c.l.b16 %v2427
        %v2432 = vpack.c.b16 %v2431, %v2431
        %v2434 = vshrl.u32 %v2148, 16
        %v2436 = vrot.slane %v2434, 1
        %v2437 = vshll.u32 %v2148, 16
        %v2439 = vrot.slane %v2437, 2
        %v2440 = vor.u32 %v2436, %v2439
        %v2442 = vshrl.u32 %v2149, 16
        %v2444 = vrot.slane %v2442, 1
        %v2445 = vshll.u32 %v2149, 16
        %v2447 = vrot.slane %v2445, 2
        %v2448 = vor.u32 %v2444, %v2447
        %v2449 = vsel %vm2272, %v2440, %v2448
        %v2451 = vshrl.u32 %v2150, 16
        %v2453 = vrot.slane %v2451, 1
        %v2454 = vshll.u32 %v2150, 16
        %v2456 = vrot.slane %v2454, 2
        %v2457 = vor.u32 %v2453, %v2456
        %v2458 = vsel %vm2272, %v2448, %v2457
        %v2460 = vshrl.u32 %v2151, 16
        %v2462 = vrot.slane %v2460, 1
        %v2463 = vshll.u32 %v2151, 16
        %v2465 = vrot.slane %v2463, 2
        %v2466 = vor.u32 %v2462, %v2465
        %v2467 = vsel %vm2272, %v2457, %v2466
        %v2469 = vshrl.u32 %v2152, 16
        %v2471 = vrot.slane %v2469, 1
        %v2472 = vshll.u32 %v2152, 16
        %v2474 = vrot.slane %v2472, 2
        %v2475 = vor.u32 %v2471, %v2474
        %v2476 = vsel %vm2272, %v2466, %v2475
        %v2478 = vshrl.u32 %v2432, 16
        %v2480 = vrot.slane %v2478, 1
        %v2481 = vshll.u32 %v2432, 16
        %v2483 = vrot.slane %v2481, 2
        %v2484 = vor.u32 %v2480, %v2483
        %v2485 = vsel %vm2272, %v2475, %v2484
        %v2487 = vsel %vm493, %v2449, 0
        %v2490 = vsel %vm493, %v2458, 0
        %v2493 = vsel %vm493, %v2467, 0
        %v2496 = vsel %vm493, %v2476, 0
        %v2499 = vsel %vm493, %v2485, 0
        %v2502 = vsel %vm509, %v2429, 0
        %2504 = vmatprep.subr.bf16.mxu0 0
        %2505 = vmatpush1.bf16.msra.mxu0 0
        %2506 = vmatprep.subr.bf16.mxu0 0
        %2507 = vmatpush1.bf16.msra.mxu0 0
        %2508 = vmatprep.subr.bf16.mxu0 0
        %2509 = vmatpush1.bf16.msra.mxu0 0
        %2510 = vmatprep.subr.bf16.mxu0 0
        %2511 = vmatpush1.bf16.msra.mxu0 0
        %2512 = vmatprep.subr.bf16.mxu0 0
        %2513 = vmatpush1.bf16.msra.mxu0 0
        %2514 = vmatprep.subr.bf16.mxu0 0
        %2515 = vmatpush1.bf16.msra.mxu0 0
        %2516 = vmatprep.subr.bf16.mxu0 0
        %2517 = vmatpush1.bf16.msra.mxu0 0
        %2518 = vmatprep.subr.bf16.mxu0 0
        %2519 = vmatpush1.bf16.msra.mxu0 %v2502
        %2520 = vmatprep.subr.bf16.mxu0 0
        %2521 = vmatpush2.bf16.msra.mxu0 0
        %2522 = vmatprep.subr.bf16.mxu0 0
        %2523 = vmatpush2.bf16.msra.mxu0 0
        %2524 = vmatprep.subr.bf16.mxu0 0
        %2525 = vmatpush2.bf16.msra.mxu0 0
        %2526 = vmatprep.subr.bf16.mxu0 0
        %2527 = vmatpush2.bf16.msra.mxu0 0
        %2528 = vmatprep.subr.bf16.mxu0 0
        %2529 = vmatpush2.bf16.msra.mxu0 0
        %2530 = vmatprep.subr.bf16.mxu0 0
        %2531 = vmatpush2.bf16.msra.mxu0 0
        %2532 = vmatprep.subr.bf16.mxu0 0
        %2533 = vmatpush2.bf16.msra.mxu0 0
        %2534 = vmatprep.subr.bf16.mxu0 0
        %2535 = vmatpush2.bf16.msra.mxu0 0
        %2536 = vmatprep.mubr.bf16.mxu0 0
        %2537 = vmatmul.mubr.bf16.gmra.mxu0 %v2487
        %v2538 = vpop.f32.mrf.mxu0
        %v2539 = vadd.f32 0.0, %v2538
        %v2540 = vpop.f32.mrf.mxu0
        %v2541 = vpop.f32.mrf.mxu0
        %v2542 = vadd.f32 0.0, %v2541
        %v2543 = vpop.f32.mrf.mxu0
        %2544 = vmatprep.mubr.bf16.mxu0 0
        %2545 = vmatmul.mubr.bf16.gmra.mxu0 %v2490
        %v2546 = vpop.f32.mrf.mxu0
        %v2547 = vadd.f32 0.0, %v2546
        %v2548 = vpop.f32.mrf.mxu0
        %v2549 = vpop.f32.mrf.mxu0
        %v2550 = vadd.f32 0.0, %v2549
        %v2551 = vpop.f32.mrf.mxu0
        %2552 = vmatprep.mubr.bf16.mxu0 0
        %2553 = vmatmul.mubr.bf16.gmra.mxu0 %v2493
        %v2554 = vpop.f32.mrf.mxu0
        %v2555 = vadd.f32 0.0, %v2554
        %v2556 = vpop.f32.mrf.mxu0
        %v2557 = vpop.f32.mrf.mxu0
        %v2558 = vadd.f32 0.0, %v2557
        %v2559 = vpop.f32.mrf.mxu0
        %2560 = vmatprep.mubr.bf16.mxu0 0
        %2561 = vmatmul.mubr.bf16.gmra.mxu0 %v2496
        %v2562 = vpop.f32.mrf.mxu0
        %v2563 = vadd.f32 0.0, %v2562
        %v2564 = vpop.f32.mrf.mxu0
        %v2565 = vpop.f32.mrf.mxu0
        %v2566 = vadd.f32 0.0, %v2565
        %v2567 = vpop.f32.mrf.mxu0
        %2568 = vmatprep.mubr.bf16.mxu0 0
        %2569 = vmatmul.mubr.bf16.gmra.mxu0 %v2499
        %v2570 = vpop.f32.mrf.mxu0
        %v2571 = vadd.f32 0.0, %v2570
        %v2572 = vpop.f32.mrf.mxu0
        %v2573 = vpop.f32.mrf.mxu0
        %v2574 = vadd.f32 0.0, %v2573
        %v2575 = vpop.f32.mrf.mxu0
        %2576 = vdwg.mxu0
        %v2577 = vadd.f32 %v2417, %v2539
        %v2578 = vadd.f32 %v2418, %v2542
        %v2579 = vadd.f32 %v2419, %v2547
        %v2580 = vadd.f32 %v2420, %v2550
        %v2581 = vadd.f32 %v2421, %v2555
        %v2582 = vadd.f32 %v2422, %v2558
        %v2583 = vadd.f32 %v2423, %v2563
        %v2584 = vadd.f32 %v2424, %v2566
        %v2585 = vadd.f32 %v2425, %v2571
        %v2586 = vadd.f32 %v2426, %v2574
        %v2587 = vld [vmem:[%s428 + $0x4] sm:$0xc]
        %s2588 = scalar_lea.vmem %s4, 28
        %v2589 = vld [vmem:[%s2588] sm:$0x3]
        %v2591 = vunpack.c.l.b16 %v2587
        %v2592 = vpack.c.b16 %v1985, %v2591
        %vm2593 = vcmask 1045504
        %v2594 = vrot.slane %v2592, 2
        %v2595 = vrot.slane %v1996, 2
        %v2596 = vsel %vm2593, %v2594, %v2595
        %v2597 = vrot.slane %v1997, 2
        %v2598 = vsel %vm2593, %v2595, %v2597
        %v2599 = vrot.slane %v1998, 2
        %v2600 = vsel %vm2593, %v2597, %v2599
        %v2601 = vrot.slane %v1999, 2
        %v2602 = vsel %vm2593, %v2599, %v2601
        %v2603 = vrot.slane %v2271, 2
        %v2604 = vsel %vm2593, %v2601, %v2603
        %v2606 = vsel %vm493, %v2596, 0
        %v2609 = vsel %vm493, %v2598, 0
        %v2612 = vsel %vm493, %v2600, 0
        %v2615 = vsel %vm493, %v2602, 0
        %v2618 = vsel %vm493, %v2604, 0
        %v2621 = vsel %vm509, %v2589, 0
        %2623 = vmatprep.subr.bf16.mxu0 0
        %2624 = vmatpush1.bf16.msra.mxu0 0
        %2625 = vmatprep.subr.bf16.mxu0 0
        %2626 = vmatpush1.bf16.msra.mxu0 0
        %2627 = vmatprep.subr.bf16.mxu0 0
        %2628 = vmatpush1.bf16.msra.mxu0 0
        %2629 = vmatprep.subr.bf16.mxu0 0
        %2630 = vmatpush1.bf16.msra.mxu0 0
        %2631 = vmatprep.subr.bf16.mxu0 0
        %2632 = vmatpush1.bf16.msra.mxu0 0
        %2633 = vmatprep.subr.bf16.mxu0 0
        %2634 = vmatpush1.bf16.msra.mxu0 0
        %2635 = vmatprep.subr.bf16.mxu0 0
        %2636 = vmatpush1.bf16.msra.mxu0 0
        %2637 = vmatprep.subr.bf16.mxu0 0
        %2638 = vmatpush1.bf16.msra.mxu0 %v2621
        %2639 = vmatprep.subr.bf16.mxu0 0
        %2640 = vmatpush2.bf16.msra.mxu0 0
        %2641 = vmatprep.subr.bf16.mxu0 0
        %2642 = vmatpush2.bf16.msra.mxu0 0
        %2643 = vmatprep.subr.bf16.mxu0 0
        %2644 = vmatpush2.bf16.msra.mxu0 0
        %2645 = vmatprep.subr.bf16.mxu0 0
        %2646 = vmatpush2.bf16.msra.mxu0 0
        %2647 = vmatprep.subr.bf16.mxu0 0
        %2648 = vmatpush2.bf16.msra.mxu0 0
        %2649 = vmatprep.subr.bf16.mxu0 0
        %2650 = vmatpush2.bf16.msra.mxu0 0
        %2651 = vmatprep.subr.bf16.mxu0 0
        %2652 = vmatpush2.bf16.msra.mxu0 0
        %2653 = vmatprep.subr.bf16.mxu0 0
        %2654 = vmatpush2.bf16.msra.mxu0 0
        %2655 = vmatprep.mubr.bf16.mxu0 0
        %2656 = vmatmul.mubr.bf16.gmra.mxu0 %v2606
        %v2657 = vpop.f32.mrf.mxu0
        %v2658 = vadd.f32 0.0, %v2657
        %v2659 = vpop.f32.mrf.mxu0
        %v2660 = vpop.f32.mrf.mxu0
        %v2661 = vadd.f32 0.0, %v2660
        %v2662 = vpop.f32.mrf.mxu0
        %2663 = vmatprep.mubr.bf16.mxu0 0
        %2664 = vmatmul.mubr.bf16.gmra.mxu0 %v2609
        %v2665 = vpop.f32.mrf.mxu0
        %v2666 = vadd.f32 0.0, %v2665
        %v2667 = vpop.f32.mrf.mxu0
        %v2668 = vpop.f32.mrf.mxu0
        %v2669 = vadd.f32 0.0, %v2668
        %v2670 = vpop.f32.mrf.mxu0
        %2671 = vmatprep.mubr.bf16.mxu0 0
        %2672 = vmatmul.mubr.bf16.gmra.mxu0 %v2612
        %v2673 = vpop.f32.mrf.mxu0
        %v2674 = vadd.f32 0.0, %v2673
        %v2675 = vpop.f32.mrf.mxu0
        %v2676 = vpop.f32.mrf.mxu0
        %v2677 = vadd.f32 0.0, %v2676
        %v2678 = vpop.f32.mrf.mxu0
        %2679 = vmatprep.mubr.bf16.mxu0 0
        %2680 = vmatmul.mubr.bf16.gmra.mxu0 %v2615
        %v2681 = vpop.f32.mrf.mxu0
        %v2682 = vadd.f32 0.0, %v2681
        %v2683 = vpop.f32.mrf.mxu0
        %v2684 = vpop.f32.mrf.mxu0
        %v2685 = vadd.f32 0.0, %v2684
        %v2686 = vpop.f32.mrf.mxu0
        %2687 = vmatprep.mubr.bf16.mxu0 0
        %2688 = vmatmul.mubr.bf16.gmra.mxu0 %v2618
        %v2689 = vpop.f32.mrf.mxu0
        %v2690 = vadd.f32 0.0, %v2689
        %v2691 = vpop.f32.mrf.mxu0
        %v2692 = vpop.f32.mrf.mxu0
        %v2693 = vadd.f32 0.0, %v2692
        %v2694 = vpop.f32.mrf.mxu0
        %2695 = vdwg.mxu0
        %v2696 = vadd.f32 %v2577, %v2658
        %v2697 = vadd.f32 %v2578, %v2661
        %v2698 = vadd.f32 %v2579, %v2666
        %v2699 = vadd.f32 %v2580, %v2669
        %v2700 = vadd.f32 %v2581, %v2674
        %v2701 = vadd.f32 %v2582, %v2677
        %v2702 = vadd.f32 %v2583, %v2682
        %v2703 = vadd.f32 %v2584, %v2685
        %v2704 = vadd.f32 %v2585, %v2690
        %v2705 = vadd.f32 %v2586, %v2693
        %v2706 = vld [vmem:[%s438 + $0x4] sm:$0xe]
        %v2707 = vld [vmem:[%s438 + $0x8] sm:$0xf]
        %v2708 = vld [vmem:[%s438 + $0xc] sm:$0xf]
        %v2709 = vld [vmem:[%s438 + $0x10] sm:$0xf]
        %v2710 = vld [vmem:[%s438 + $0x14] sm:$0xf]
        %v2711 = vld [vmem:[%s438 + $0x18] sm:$0xf]
        %v2712 = vld [vmem:[%s438 + $0x1c] sm:$0xf]
        %v2713 = vld [vmem:[%s438 + $0x20] sm:$0xf]
        %v2714 = vld [vmem:[%s438 + $0x24] sm:$0xf]
        %v2715 = vld [vmem:[%s438 + $0x28] sm:$0xf]
        %v2716 = vld [vmem:[%s438 + $0x2c] sm:$0x1]
        %s2717 = scalar_lea.vmem %s4, 30
        %v2718 = vld [vmem:[%s2717] sm:$0x3]
        %v2730 = vunpack.c.l.b16 %v2706
        %v2731 = vunpack.c.l.b16 %v2707
        %v2732 = vunpack.c.l.b16 %v2708
        %v2733 = vunpack.c.l.b16 %v2709
        %v2734 = vunpack.c.l.b16 %v2710
        %v2735 = vunpack.c.l.b16 %v2711
        %v2736 = vunpack.c.l.b16 %v2712
        %v2737 = vunpack.c.l.b16 %v2713
        %v2738 = vunpack.c.l.b16 %v2714
        %v2739 = vunpack.c.l.b16 %v2715
        %v2740 = vunpack.c.l.b16 %v2716
        %v2741 = vpack.c.b16 %v2731, %v2730
        %v2742 = vpack.c.b16 %v2733, %v2732
        %v2743 = vpack.c.b16 %v2735, %v2734
        %v2744 = vpack.c.b16 %v2737, %v2736
        %v2745 = vpack.c.b16 %v2739, %v2738
        %v2746 = vpack.c.b16 %v2740, %v2740
        %v2747 = vrot.slane %v2741, 1
        %v2748 = vrot.slane %v2742, 1
        %v2749 = vsel %vm1081, %v2747, %v2748
        %v2750 = vrot.slane %v2743, 1
        %v2751 = vsel %vm1081, %v2748, %v2750
        %v2752 = vrot.slane %v2744, 1
        %v2753 = vsel %vm1081, %v2750, %v2752
        %v2754 = vrot.slane %v2745, 1
        %v2755 = vsel %vm1081, %v2752, %v2754
        %v2756 = vrot.slane %v2746, 1
        %v2757 = vsel %vm1081, %v2754, %v2756
        %v2759 = vsel %vm493, %v2749, 0
        %v2762 = vsel %vm493, %v2751, 0
        %v2765 = vsel %vm493, %v2753, 0
        %v2768 = vsel %vm493, %v2755, 0
        %v2771 = vsel %vm493, %v2757, 0
        %v2774 = vsel %vm509, %v2718, 0
        %2776 = vmatprep.subr.bf16.mxu0 0
        %2777 = vmatpush1.bf16.msra.mxu0 0
        %2778 = vmatprep.subr.bf16.mxu0 0
        %2779 = vmatpush1.bf16.msra.mxu0 0
        %2780 = vmatprep.subr.bf16.mxu0 0
        %2781 = vmatpush1.bf16.msra.mxu0 0
        %2782 = vmatprep.subr.bf16.mxu0 0
        %2783 = vmatpush1.bf16.msra.mxu0 0
        %2784 = vmatprep.subr.bf16.mxu0 0
        %2785 = vmatpush1.bf16.msra.mxu0 0
        %2786 = vmatprep.subr.bf16.mxu0 0
        %2787 = vmatpush1.bf16.msra.mxu0 0
        %2788 = vmatprep.subr.bf16.mxu0 0
        %2789 = vmatpush1.bf16.msra.mxu0 0
        %2790 = vmatprep.subr.bf16.mxu0 0
        %2791 = vmatpush1.bf16.msra.mxu0 %v2774
        %2792 = vmatprep.subr.bf16.mxu0 0
        %2793 = vmatpush2.bf16.msra.mxu0 0
        %2794 = vmatprep.subr.bf16.mxu0 0
        %2795 = vmatpush2.bf16.msra.mxu0 0
        %2796 = vmatprep.subr.bf16.mxu0 0
        %2797 = vmatpush2.bf16.msra.mxu0 0
        %2798 = vmatprep.subr.bf16.mxu0 0
        %2799 = vmatpush2.bf16.msra.mxu0 0
        %2800 = vmatprep.subr.bf16.mxu0 0
        %2801 = vmatpush2.bf16.msra.mxu0 0
        %2802 = vmatprep.subr.bf16.mxu0 0
        %2803 = vmatpush2.bf16.msra.mxu0 0
        %2804 = vmatprep.subr.bf16.mxu0 0
        %2805 = vmatpush2.bf16.msra.mxu0 0
        %2806 = vmatprep.subr.bf16.mxu0 0
        %2807 = vmatpush2.bf16.msra.mxu0 0
        %2808 = vmatprep.mubr.bf16.mxu0 0
        %2809 = vmatmul.mubr.bf16.gmra.mxu0 %v2759
        %v2810 = vpop.f32.mrf.mxu0
        %v2811 = vadd.f32 0.0, %v2810
        %v2812 = vpop.f32.mrf.mxu0
        %v2813 = vpop.f32.mrf.mxu0
        %v2814 = vadd.f32 0.0, %v2813
        %v2815 = vpop.f32.mrf.mxu0
        %2816 = vmatprep.mubr.bf16.mxu0 0
        %2817 = vmatmul.mubr.bf16.gmra.mxu0 %v2762
        %v2818 = vpop.f32.mrf.mxu0
        %v2819 = vadd.f32 0.0, %v2818
        %v2820 = vpop.f32.mrf.mxu0
        %v2821 = vpop.f32.mrf.mxu0
        %v2822 = vadd.f32 0.0, %v2821
        %v2823 = vpop.f32.mrf.mxu0
        %2824 = vmatprep.mubr.bf16.mxu0 0
        %2825 = vmatmul.mubr.bf16.gmra.mxu0 %v2765
        %v2826 = vpop.f32.mrf.mxu0
        %v2827 = vadd.f32 0.0, %v2826
        %v2828 = vpop.f32.mrf.mxu0
        %v2829 = vpop.f32.mrf.mxu0
        %v2830 = vadd.f32 0.0, %v2829
        %v2831 = vpop.f32.mrf.mxu0
        %2832 = vmatprep.mubr.bf16.mxu0 0
        %2833 = vmatmul.mubr.bf16.gmra.mxu0 %v2768
        %v2834 = vpop.f32.mrf.mxu0
        %v2835 = vadd.f32 0.0, %v2834
        %v2836 = vpop.f32.mrf.mxu0
        %v2837 = vpop.f32.mrf.mxu0
        %v2838 = vadd.f32 0.0, %v2837
        %v2839 = vpop.f32.mrf.mxu0
        %2840 = vmatprep.mubr.bf16.mxu0 0
        %2841 = vmatmul.mubr.bf16.gmra.mxu0 %v2771
        %v2842 = vpop.f32.mrf.mxu0
        %v2843 = vadd.f32 0.0, %v2842
        %v2844 = vpop.f32.mrf.mxu0
        %v2845 = vpop.f32.mrf.mxu0
        %v2846 = vadd.f32 0.0, %v2845
        %v2847 = vpop.f32.mrf.mxu0
        %2848 = vdwg.mxu0
        %v2849 = vadd.f32 %v2696, %v2811
        %v2850 = vadd.f32 %v2697, %v2814
        %v2851 = vadd.f32 %v2698, %v2819
        %v2852 = vadd.f32 %v2699, %v2822
        %v2853 = vadd.f32 %v2700, %v2827
        %v2854 = vadd.f32 %v2701, %v2830
        %v2855 = vadd.f32 %v2702, %v2835
        %v2856 = vadd.f32 %v2703, %v2838
        %v2857 = vadd.f32 %v2704, %v2843
        %v2858 = vadd.f32 %v2705, %v2846
        %v2859 = vld [vmem:[%s443 + $0x4] sm:$0xe]
        %v2860 = vld [vmem:[%s443 + $0x8] sm:$0xf]
        %v2861 = vld [vmem:[%s443 + $0xc] sm:$0xf]
        %v2862 = vld [vmem:[%s443 + $0x10] sm:$0xf]
        %v2863 = vld [vmem:[%s443 + $0x14] sm:$0xf]
        %v2864 = vld [vmem:[%s443 + $0x18] sm:$0xf]
        %v2865 = vld [vmem:[%s443 + $0x1c] sm:$0xf]
        %v2866 = vld [vmem:[%s443 + $0x20] sm:$0xf]
        %v2867 = vld [vmem:[%s443 + $0x24] sm:$0xf]
        %v2868 = vld [vmem:[%s443 + $0x28] sm:$0xf]
        %v2869 = vld [vmem:[%s443 + $0x2c] sm:$0x1]
        %s2870 = scalar_lea.vmem %s4, 32
        %v2871 = vld [vmem:[%s2870] sm:$0x3]
        %v2883 = vunpack.c.l.b16 %v2859
        %v2884 = vunpack.c.l.b16 %v2860
        %v2885 = vunpack.c.l.b16 %v2861
        %v2886 = vunpack.c.l.b16 %v2862
        %v2887 = vunpack.c.l.b16 %v2863
        %v2888 = vunpack.c.l.b16 %v2864
        %v2889 = vunpack.c.l.b16 %v2865
        %v2890 = vunpack.c.l.b16 %v2866
        %v2891 = vunpack.c.l.b16 %v2867
        %v2892 = vunpack.c.l.b16 %v2868
        %v2893 = vunpack.c.l.b16 %v2869
        %v2894 = vpack.c.b16 %v2884, %v2883
        %v2895 = vpack.c.b16 %v2886, %v2885
        %v2896 = vpack.c.b16 %v2888, %v2887
        %v2897 = vpack.c.b16 %v2890, %v2889
        %v2898 = vpack.c.b16 %v2892, %v2891
        %v2899 = vpack.c.b16 %v2893, %v2893
        %v2900 = vrot.slane %v2894, 1
        %v2901 = vrot.slane %v2895, 1
        %v2902 = vsel %vm1081, %v2900, %v2901
        %v2903 = vrot.slane %v2896, 1
        %v2904 = vsel %vm1081, %v2901, %v2903
        %v2905 = vrot.slane %v2897, 1
        %v2906 = vsel %vm1081, %v2903, %v2905
        %v2907 = vrot.slane %v2898, 1
        %v2908 = vsel %vm1081, %v2905, %v2907
        %v2909 = vrot.slane %v2899, 1
        %v2910 = vsel %vm1081, %v2907, %v2909
        %v2912 = vsel %vm493, %v2902, 0
        %v2915 = vsel %vm493, %v2904, 0
        %v2918 = vsel %vm493, %v2906, 0
        %v2921 = vsel %vm493, %v2908, 0
        %v2924 = vsel %vm493, %v2910, 0
        %v2927 = vsel %vm509, %v2871, 0
        %2929 = vmatprep.subr.bf16.mxu0 0
        %2930 = vmatpush1.bf16.msra.mxu0 0
        %2931 = vmatprep.subr.bf16.mxu0 0
        %2932 = vmatpush1.bf16.msra.mxu0 0
        %2933 = vmatprep.subr.bf16.mxu0 0
        %2934 = vmatpush1.bf16.msra.mxu0 0
        %2935 = vmatprep.subr.bf16.mxu0 0
        %2936 = vmatpush1.bf16.msra.mxu0 0
        %2937 = vmatprep.subr.bf16.mxu0 0
        %2938 = vmatpush1.bf16.msra.mxu0 0
        %2939 = vmatprep.subr.bf16.mxu0 0
        %2940 = vmatpush1.bf16.msra.mxu0 0
        %2941 = vmatprep.subr.bf16.mxu0 0
        %2942 = vmatpush1.bf16.msra.mxu0 0
        %2943 = vmatprep.subr.bf16.mxu0 0
        %2944 = vmatpush1.bf16.msra.mxu0 %v2927
        %2945 = vmatprep.subr.bf16.mxu0 0
        %2946 = vmatpush2.bf16.msra.mxu0 0
        %2947 = vmatprep.subr.bf16.mxu0 0
        %2948 = vmatpush2.bf16.msra.mxu0 0
        %2949 = vmatprep.subr.bf16.mxu0 0
        %2950 = vmatpush2.bf16.msra.mxu0 0
        %2951 = vmatprep.subr.bf16.mxu0 0
        %2952 = vmatpush2.bf16.msra.mxu0 0
        %2953 = vmatprep.subr.bf16.mxu0 0
        %2954 = vmatpush2.bf16.msra.mxu0 0
        %2955 = vmatprep.subr.bf16.mxu0 0
        %2956 = vmatpush2.bf16.msra.mxu0 0
        %2957 = vmatprep.subr.bf16.mxu0 0
        %2958 = vmatpush2.bf16.msra.mxu0 0
        %2959 = vmatprep.subr.bf16.mxu0 0
        %2960 = vmatpush2.bf16.msra.mxu0 0
        %2961 = vmatprep.mubr.bf16.mxu0 0
        %2962 = vmatmul.mubr.bf16.gmra.mxu0 %v2912
        %v2963 = vpop.f32.mrf.mxu0
        %v2964 = vadd.f32 0.0, %v2963
        %v2965 = vpop.f32.mrf.mxu0
        %v2966 = vpop.f32.mrf.mxu0
        %v2967 = vadd.f32 0.0, %v2966
        %v2968 = vpop.f32.mrf.mxu0
        %2969 = vmatprep.mubr.bf16.mxu0 0
        %2970 = vmatmul.mubr.bf16.gmra.mxu0 %v2915
        %v2971 = vpop.f32.mrf.mxu0
        %v2972 = vadd.f32 0.0, %v2971
        %v2973 = vpop.f32.mrf.mxu0
        %v2974 = vpop.f32.mrf.mxu0
        %v2975 = vadd.f32 0.0, %v2974
        %v2976 = vpop.f32.mrf.mxu0
        %2977 = vmatprep.mubr.bf16.mxu0 0
        %2978 = vmatmul.mubr.bf16.gmra.mxu0 %v2918
        %v2979 = vpop.f32.mrf.mxu0
        %v2980 = vadd.f32 0.0, %v2979
        %v2981 = vpop.f32.mrf.mxu0
        %v2982 = vpop.f32.mrf.mxu0
        %v2983 = vadd.f32 0.0, %v2982
        %v2984 = vpop.f32.mrf.mxu0
        %2985 = vmatprep.mubr.bf16.mxu0 0
        %2986 = vmatmul.mubr.bf16.gmra.mxu0 %v2921
        %v2987 = vpop.f32.mrf.mxu0
        %v2988 = vadd.f32 0.0, %v2987
        %v2989 = vpop.f32.mrf.mxu0
        %v2990 = vpop.f32.mrf.mxu0
        %v2991 = vadd.f32 0.0, %v2990
        %v2992 = vpop.f32.mrf.mxu0
        %2993 = vmatprep.mubr.bf16.mxu0 0
        %2994 = vmatmul.mubr.bf16.gmra.mxu0 %v2924
        %v2995 = vpop.f32.mrf.mxu0
        %v2996 = vadd.f32 0.0, %v2995
        %v2997 = vpop.f32.mrf.mxu0
        %v2998 = vpop.f32.mrf.mxu0
        %v2999 = vadd.f32 0.0, %v2998
        %v3000 = vpop.f32.mrf.mxu0
        %3001 = vdwg.mxu0
        %v3002 = vadd.f32 %v2849, %v2964
        %v3003 = vadd.f32 %v2850, %v2967
        %v3004 = vadd.f32 %v2851, %v2972
        %v3005 = vadd.f32 %v2852, %v2975
        %v3006 = vadd.f32 %v2853, %v2980
        %v3007 = vadd.f32 %v2854, %v2983
        %v3008 = vadd.f32 %v2855, %v2988
        %v3009 = vadd.f32 %v2856, %v2991
        %v3010 = vadd.f32 %v2857, %v2996
        %v3011 = vadd.f32 %v2858, %v2999
        %v3012 = vld [vmem:[%s438 + $0x2c] sm:$0x3]
        %s3013 = scalar_lea.vmem %s4, 34
        %v3014 = vld [vmem:[%s3013] sm:$0x3]
        %v3016 = vunpack.c.l.b16 %v3012
        %v3017 = vpack.c.b16 %v3016, %v3016
        %v3019 = vshrl.u32 %v2741, 16
        %v3021 = vrot.slane %v3019, 1
        %v3022 = vshll.u32 %v2741, 16
        %v3024 = vrot.slane %v3022, 2
        %v3025 = vor.u32 %v3021, %v3024
        %v3027 = vshrl.u32 %v2742, 16
        %v3029 = vrot.slane %v3027, 1
        %v3030 = vshll.u32 %v2742, 16
        %v3032 = vrot.slane %v3030, 2
        %v3033 = vor.u32 %v3029, %v3032
        %v3034 = vsel %vm2272, %v3025, %v3033
        %v3036 = vshrl.u32 %v2743, 16
        %v3038 = vrot.slane %v3036, 1
        %v3039 = vshll.u32 %v2743, 16
        %v3041 = vrot.slane %v3039, 2
        %v3042 = vor.u32 %v3038, %v3041
        %v3043 = vsel %vm2272, %v3033, %v3042
        %v3045 = vshrl.u32 %v2744, 16
        %v3047 = vrot.slane %v3045, 1
        %v3048 = vshll.u32 %v2744, 16
        %v3050 = vrot.slane %v3048, 2
        %v3051 = vor.u32 %v3047, %v3050
        %v3052 = vsel %vm2272, %v3042, %v3051
        %v3054 = vshrl.u32 %v2745, 16
        %v3056 = vrot.slane %v3054, 1
        %v3057 = vshll.u32 %v2745, 16
        %v3059 = vrot.slane %v3057, 2
        %v3060 = vor.u32 %v3056, %v3059
        %v3061 = vsel %vm2272, %v3051, %v3060
        %v3063 = vshrl.u32 %v3017, 16
        %v3065 = vrot.slane %v3063, 1
        %v3066 = vshll.u32 %v3017, 16
        %v3068 = vrot.slane %v3066, 2
        %v3069 = vor.u32 %v3065, %v3068
        %v3070 = vsel %vm2272, %v3060, %v3069
        %v3072 = vsel %vm493, %v3034, 0
        %v3075 = vsel %vm493, %v3043, 0
        %v3078 = vsel %vm493, %v3052, 0
        %v3081 = vsel %vm493, %v3061, 0
        %v3084 = vsel %vm493, %v3070, 0
        %v3087 = vsel %vm509, %v3014, 0
        %3089 = vmatprep.subr.bf16.mxu0 0
        %3090 = vmatpush1.bf16.msra.mxu0 0
        %3091 = vmatprep.subr.bf16.mxu0 0
        %3092 = vmatpush1.bf16.msra.mxu0 0
        %3093 = vmatprep.subr.bf16.mxu0 0
        %3094 = vmatpush1.bf16.msra.mxu0 0
        %3095 = vmatprep.subr.bf16.mxu0 0
        %3096 = vmatpush1.bf16.msra.mxu0 0
        %3097 = vmatprep.subr.bf16.mxu0 0
        %3098 = vmatpush1.bf16.msra.mxu0 0
        %3099 = vmatprep.subr.bf16.mxu0 0
        %3100 = vmatpush1.bf16.msra.mxu0 0
        %3101 = vmatprep.subr.bf16.mxu0 0
        %3102 = vmatpush1.bf16.msra.mxu0 0
        %3103 = vmatprep.subr.bf16.mxu0 0
        %3104 = vmatpush1.bf16.msra.mxu0 %v3087
        %3105 = vmatprep.subr.bf16.mxu0 0
        %3106 = vmatpush2.bf16.msra.mxu0 0
        %3107 = vmatprep.subr.bf16.mxu0 0
        %3108 = vmatpush2.bf16.msra.mxu0 0
        %3109 = vmatprep.subr.bf16.mxu0 0
        %3110 = vmatpush2.bf16.msra.mxu0 0
        %3111 = vmatprep.subr.bf16.mxu0 0
        %3112 = vmatpush2.bf16.msra.mxu0 0
        %3113 = vmatprep.subr.bf16.mxu0 0
        %3114 = vmatpush2.bf16.msra.mxu0 0
        %3115 = vmatprep.subr.bf16.mxu0 0
        %3116 = vmatpush2.bf16.msra.mxu0 0
        %3117 = vmatprep.subr.bf16.mxu0 0
        %3118 = vmatpush2.bf16.msra.mxu0 0
        %3119 = vmatprep.subr.bf16.mxu0 0
        %3120 = vmatpush2.bf16.msra.mxu0 0
        %3121 = vmatprep.mubr.bf16.mxu0 0
        %3122 = vmatmul.mubr.bf16.gmra.mxu0 %v3072
        %v3123 = vpop.f32.mrf.mxu0
        %v3124 = vadd.f32 0.0, %v3123
        %v3125 = vpop.f32.mrf.mxu0
        %v3126 = vpop.f32.mrf.mxu0
        %v3127 = vadd.f32 0.0, %v3126
        %v3128 = vpop.f32.mrf.mxu0
        %3129 = vmatprep.mubr.bf16.mxu0 0
        %3130 = vmatmul.mubr.bf16.gmra.mxu0 %v3075
        %v3131 = vpop.f32.mrf.mxu0
        %v3132 = vadd.f32 0.0, %v3131
        %v3133 = vpop.f32.mrf.mxu0
        %v3134 = vpop.f32.mrf.mxu0
        %v3135 = vadd.f32 0.0, %v3134
        %v3136 = vpop.f32.mrf.mxu0
        %3137 = vmatprep.mubr.bf16.mxu0 0
        %3138 = vmatmul.mubr.bf16.gmra.mxu0 %v3078
        %v3139 = vpop.f32.mrf.mxu0
        %v3140 = vadd.f32 0.0, %v3139
        %v3141 = vpop.f32.mrf.mxu0
        %v3142 = vpop.f32.mrf.mxu0
        %v3143 = vadd.f32 0.0, %v3142
        %v3144 = vpop.f32.mrf.mxu0
        %3145 = vmatprep.mubr.bf16.mxu0 0
        %3146 = vmatmul.mubr.bf16.gmra.mxu0 %v3081
        %v3147 = vpop.f32.mrf.mxu0
        %v3148 = vadd.f32 0.0, %v3147
        %v3149 = vpop.f32.mrf.mxu0
        %v3150 = vpop.f32.mrf.mxu0
        %v3151 = vadd.f32 0.0, %v3150
        %v3152 = vpop.f32.mrf.mxu0
        %3153 = vmatprep.mubr.bf16.mxu0 0
        %3154 = vmatmul.mubr.bf16.gmra.mxu0 %v3084
        %v3155 = vpop.f32.mrf.mxu0
        %v3156 = vadd.f32 0.0, %v3155
        %v3157 = vpop.f32.mrf.mxu0
        %v3158 = vpop.f32.mrf.mxu0
        %v3159 = vadd.f32 0.0, %v3158
        %v3160 = vpop.f32.mrf.mxu0
        %3161 = vdwg.mxu0
        %v3162 = vadd.f32 %v3002, %v3124
        %v3163 = vadd.f32 %v3003, %v3127
        %v3164 = vadd.f32 %v3004, %v3132
        %v3165 = vadd.f32 %v3005, %v3135
        %v3166 = vadd.f32 %v3006, %v3140
        %v3167 = vadd.f32 %v3007, %v3143
        %v3168 = vadd.f32 %v3008, %v3148
        %v3169 = vadd.f32 %v3009, %v3151
        %v3170 = vadd.f32 %v3010, %v3156
        %v3171 = vadd.f32 %v3011, %v3159
        %v3172 = vld [vmem:[%s443 + $0x2c] sm:$0x3]
        %s3173 = scalar_lea.vmem %s4, 36
        %v3174 = vld [vmem:[%s3173] sm:$0x3]
        %v3176 = vunpack.c.l.b16 %v3172
        %v3177 = vpack.c.b16 %v3176, %v3176
        %v3179 = vshrl.u32 %v2894, 16
        %v3181 = vrot.slane %v3179, 1
        %v3182 = vshll.u32 %v2894, 16
        %v3184 = vrot.slane %v3182, 2
        %v3185 = vor.u32 %v3181, %v3184
        %v3187 = vshrl.u32 %v2895, 16
        %v3189 = vrot.slane %v3187, 1
        %v3190 = vshll.u32 %v2895, 16
        %v3192 = vrot.slane %v3190, 2
        %v3193 = vor.u32 %v3189, %v3192
        %v3194 = vsel %vm2272, %v3185, %v3193
        %v3196 = vshrl.u32 %v2896, 16
        %v3198 = vrot.slane %v3196, 1
        %v3199 = vshll.u32 %v2896, 16
        %v3201 = vrot.slane %v3199, 2
        %v3202 = vor.u32 %v3198, %v3201
        %v3203 = vsel %vm2272, %v3193, %v3202
        %v3205 = vshrl.u32 %v2897, 16
        %v3207 = vrot.slane %v3205, 1
        %v3208 = vshll.u32 %v2897, 16
        %v3210 = vrot.slane %v3208, 2
        %v3211 = vor.u32 %v3207, %v3210
        %v3212 = vsel %vm2272, %v3202, %v3211
        %v3214 = vshrl.u32 %v2898, 16
        %v3216 = vrot.slane %v3214, 1
        %v3217 = vshll.u32 %v2898, 16
        %v3219 = vrot.slane %v3217, 2
        %v3220 = vor.u32 %v3216, %v3219
        %v3221 = vsel %vm2272, %v3211, %v3220
        %v3223 = vshrl.u32 %v3177, 16
        %v3225 = vrot.slane %v3223, 1
        %v3226 = vshll.u32 %v3177, 16
        %v3228 = vrot.slane %v3226, 2
        %v3229 = vor.u32 %v3225, %v3228
        %v3230 = vsel %vm2272, %v3220, %v3229
        %v3232 = vsel %vm493, %v3194, 0
        %v3235 = vsel %vm493, %v3203, 0
        %v3238 = vsel %vm493, %v3212, 0
        %v3241 = vsel %vm493, %v3221, 0
        %v3244 = vsel %vm493, %v3230, 0
        %v3247 = vsel %vm509, %v3174, 0
        %3249 = vmatprep.subr.bf16.mxu0 0
        %3250 = vmatpush1.bf16.msra.mxu0 0
        %3251 = vmatprep.subr.bf16.mxu0 0
        %3252 = vmatpush1.bf16.msra.mxu0 0
        %3253 = vmatprep.subr.bf16.mxu0 0
        %3254 = vmatpush1.bf16.msra.mxu0 0
        %3255 = vmatprep.subr.bf16.mxu0 0
        %3256 = vmatpush1.bf16.msra.mxu0 0
        %3257 = vmatprep.subr.bf16.mxu0 0
        %3258 = vmatpush1.bf16.msra.mxu0 0
        %3259 = vmatprep.subr.bf16.mxu0 0
        %3260 = vmatpush1.bf16.msra.mxu0 0
        %3261 = vmatprep.subr.bf16.mxu0 0
        %3262 = vmatpush1.bf16.msra.mxu0 0
        %3263 = vmatprep.subr.bf16.mxu0 0
        %3264 = vmatpush1.bf16.msra.mxu0 %v3247
        %3265 = vmatprep.subr.bf16.mxu0 0
        %3266 = vmatpush2.bf16.msra.mxu0 0
        %3267 = vmatprep.subr.bf16.mxu0 0
        %3268 = vmatpush2.bf16.msra.mxu0 0
        %3269 = vmatprep.subr.bf16.mxu0 0
        %3270 = vmatpush2.bf16.msra.mxu0 0
        %3271 = vmatprep.subr.bf16.mxu0 0
        %3272 = vmatpush2.bf16.msra.mxu0 0
        %3273 = vmatprep.subr.bf16.mxu0 0
        %3274 = vmatpush2.bf16.msra.mxu0 0
        %3275 = vmatprep.subr.bf16.mxu0 0
        %3276 = vmatpush2.bf16.msra.mxu0 0
        %3277 = vmatprep.subr.bf16.mxu0 0
        %3278 = vmatpush2.bf16.msra.mxu0 0
        %3279 = vmatprep.subr.bf16.mxu0 0
        %3280 = vmatpush2.bf16.msra.mxu0 0
        %3281 = vmatprep.mubr.bf16.mxu0 0
        %3282 = vmatmul.mubr.bf16.gmra.mxu0 %v3232
        %v3283 = vpop.f32.mrf.mxu0
        %v3284 = vadd.f32 0.0, %v3283
        %v3285 = vpop.f32.mrf.mxu0
        %v3286 = vpop.f32.mrf.mxu0
        %v3287 = vadd.f32 0.0, %v3286
        %v3288 = vpop.f32.mrf.mxu0
        %3289 = vmatprep.mubr.bf16.mxu0 0
        %3290 = vmatmul.mubr.bf16.gmra.mxu0 %v3235
        %v3291 = vpop.f32.mrf.mxu0
        %v3292 = vadd.f32 0.0, %v3291
        %v3293 = vpop.f32.mrf.mxu0
        %v3294 = vpop.f32.mrf.mxu0
        %v3295 = vadd.f32 0.0, %v3294
        %v3296 = vpop.f32.mrf.mxu0
        %3297 = vmatprep.mubr.bf16.mxu0 0
        %3298 = vmatmul.mubr.bf16.gmra.mxu0 %v3238
        %v3299 = vpop.f32.mrf.mxu0
        %v3300 = vadd.f32 0.0, %v3299
        %v3301 = vpop.f32.mrf.mxu0
        %v3302 = vpop.f32.mrf.mxu0
        %v3303 = vadd.f32 0.0, %v3302
        %v3304 = vpop.f32.mrf.mxu0
        %3305 = vmatprep.mubr.bf16.mxu0 0
        %3306 = vmatmul.mubr.bf16.gmra.mxu0 %v3241
        %v3307 = vpop.f32.mrf.mxu0
        %v3308 = vadd.f32 0.0, %v3307
        %v3309 = vpop.f32.mrf.mxu0
        %v3310 = vpop.f32.mrf.mxu0
        %v3311 = vadd.f32 0.0, %v3310
        %v3312 = vpop.f32.mrf.mxu0
        %3313 = vmatprep.mubr.bf16.mxu0 0
        %3314 = vmatmul.mubr.bf16.gmra.mxu0 %v3244
        %v3315 = vpop.f32.mrf.mxu0
        %v3316 = vadd.f32 0.0, %v3315
        %v3317 = vpop.f32.mrf.mxu0
        %v3318 = vpop.f32.mrf.mxu0
        %v3319 = vadd.f32 0.0, %v3318
        %v3320 = vpop.f32.mrf.mxu0
        %3321 = vdwg.mxu0
        %v3322 = vadd.f32 %v3162, %v3284
        %v3323 = vadd.f32 %v3163, %v3287
        %v3324 = vadd.f32 %v3164, %v3292
        %v3325 = vadd.f32 %v3165, %v3295
        %v3326 = vadd.f32 %v3166, %v3300
        %v3327 = vadd.f32 %v3167, %v3303
        %v3328 = vadd.f32 %v3168, %v3308
        %v3329 = vadd.f32 %v3169, %v3311
        %v3330 = vadd.f32 %v3170, %v3316
        %v3331 = vadd.f32 %v3171, %v3319
        %v3332 = vld [vmem:[%s438 + $0x4] sm:$0xc]
        %s3333 = scalar_lea.vmem %s4, 38
        %v3334 = vld [vmem:[%s3333] sm:$0x3]
        %v3336 = vunpack.c.l.b16 %v3332
        %v3337 = vpack.c.b16 %v2731, %v3336
        %v3338 = vrot.slane %v3337, 2
        %v3339 = vrot.slane %v2742, 2
        %v3340 = vsel %vm2593, %v3338, %v3339
        %v3341 = vrot.slane %v2743, 2
        %v3342 = vsel %vm2593, %v3339, %v3341
        %v3343 = vrot.slane %v2744, 2
        %v3344 = vsel %vm2593, %v3341, %v3343
        %v3345 = vrot.slane %v2745, 2
        %v3346 = vsel %vm2593, %v3343, %v3345
        %v3347 = vrot.slane %v3017, 2
        %v3348 = vsel %vm2593, %v3345, %v3347
        %v3350 = vsel %vm493, %v3340, 0
        %v3353 = vsel %vm493, %v3342, 0
        %v3356 = vsel %vm493, %v3344, 0
        %v3359 = vsel %vm493, %v3346, 0
        %v3362 = vsel %vm493, %v3348, 0
        %v3365 = vsel %vm509, %v3334, 0
        %3367 = vmatprep.subr.bf16.mxu0 0
        %3368 = vmatpush1.bf16.msra.mxu0 0
        %3369 = vmatprep.subr.bf16.mxu0 0
        %3370 = vmatpush1.bf16.msra.mxu0 0
        %3371 = vmatprep.subr.bf16.mxu0 0
        %3372 = vmatpush1.bf16.msra.mxu0 0
        %3373 = vmatprep.subr.bf16.mxu0 0
        %3374 = vmatpush1.bf16.msra.mxu0 0
        %3375 = vmatprep.subr.bf16.mxu0 0
        %3376 = vmatpush1.bf16.msra.mxu0 0
        %3377 = vmatprep.subr.bf16.mxu0 0
        %3378 = vmatpush1.bf16.msra.mxu0 0
        %3379 = vmatprep.subr.bf16.mxu0 0
        %3380 = vmatpush1.bf16.msra.mxu0 0
        %3381 = vmatprep.subr.bf16.mxu0 0
        %3382 = vmatpush1.bf16.msra.mxu0 %v3365
        %3383 = vmatprep.subr.bf16.mxu0 0
        %3384 = vmatpush2.bf16.msra.mxu0 0
        %3385 = vmatprep.subr.bf16.mxu0 0
        %3386 = vmatpush2.bf16.msra.mxu0 0
        %3387 = vmatprep.subr.bf16.mxu0 0
        %3388 = vmatpush2.bf16.msra.mxu0 0
        %3389 = vmatprep.subr.bf16.mxu0 0
        %3390 = vmatpush2.bf16.msra.mxu0 0
        %3391 = vmatprep.subr.bf16.mxu0 0
        %3392 = vmatpush2.bf16.msra.mxu0 0
        %3393 = vmatprep.subr.bf16.mxu0 0
        %3394 = vmatpush2.bf16.msra.mxu0 0
        %3395 = vmatprep.subr.bf16.mxu0 0
        %3396 = vmatpush2.bf16.msra.mxu0 0
        %3397 = vmatprep.subr.bf16.mxu0 0
        %3398 = vmatpush2.bf16.msra.mxu0 0
        %3399 = vmatprep.mubr.bf16.mxu0 0
        %3400 = vmatmul.mubr.bf16.gmra.mxu0 %v3350
        %v3401 = vpop.f32.mrf.mxu0
        %v3402 = vadd.f32 0.0, %v3401
        %v3403 = vpop.f32.mrf.mxu0
        %v3404 = vpop.f32.mrf.mxu0
        %v3405 = vadd.f32 0.0, %v3404
        %v3406 = vpop.f32.mrf.mxu0
        %3407 = vmatprep.mubr.bf16.mxu0 0
        %3408 = vmatmul.mubr.bf16.gmra.mxu0 %v3353
        %v3409 = vpop.f32.mrf.mxu0
        %v3410 = vadd.f32 0.0, %v3409
        %v3411 = vpop.f32.mrf.mxu0
        %v3412 = vpop.f32.mrf.mxu0
        %v3413 = vadd.f32 0.0, %v3412
        %v3414 = vpop.f32.mrf.mxu0
        %3415 = vmatprep.mubr.bf16.mxu0 0
        %3416 = vmatmul.mubr.bf16.gmra.mxu0 %v3356
        %v3417 = vpop.f32.mrf.mxu0
        %v3418 = vadd.f32 0.0, %v3417
        %v3419 = vpop.f32.mrf.mxu0
        %v3420 = vpop.f32.mrf.mxu0
        %v3421 = vadd.f32 0.0, %v3420
        %v3422 = vpop.f32.mrf.mxu0
        %3423 = vmatprep.mubr.bf16.mxu0 0
        %3424 = vmatmul.mubr.bf16.gmra.mxu0 %v3359
        %v3425 = vpop.f32.mrf.mxu0
        %v3426 = vadd.f32 0.0, %v3425
        %v3427 = vpop.f32.mrf.mxu0
        %v3428 = vpop.f32.mrf.mxu0
        %v3429 = vadd.f32 0.0, %v3428
        %v3430 = vpop.f32.mrf.mxu0
        %3431 = vmatprep.mubr.bf16.mxu0 0
        %3432 = vmatmul.mubr.bf16.gmra.mxu0 %v3362
        %v3433 = vpop.f32.mrf.mxu0
        %v3434 = vadd.f32 0.0, %v3433
        %v3435 = vpop.f32.mrf.mxu0
        %v3436 = vpop.f32.mrf.mxu0
        %v3437 = vadd.f32 0.0, %v3436
        %v3438 = vpop.f32.mrf.mxu0
        %3439 = vdwg.mxu0
        %v3440 = vadd.f32 %v3322, %v3402
        %v3441 = vadd.f32 %v3323, %v3405
        %v3442 = vadd.f32 %v3324, %v3410
        %v3443 = vadd.f32 %v3325, %v3413
        %v3444 = vadd.f32 %v3326, %v3418
        %v3445 = vadd.f32 %v3327, %v3421
        %v3446 = vadd.f32 %v3328, %v3426
        %v3447 = vadd.f32 %v3329, %v3429
        %v3448 = vadd.f32 %v3330, %v3434
        %v3449 = vadd.f32 %v3331, %v3437
        %v3450 = vld [vmem:[%s428 + $0x8] sm:$0xc]
        %v3451 = vld [vmem:[%s428 + $0xc] sm:$0xf]
        %v3452 = vld [vmem:[%s428 + $0x10] sm:$0xf]
        %v3453 = vld [vmem:[%s428 + $0x14] sm:$0xf]
        %v3454 = vld [vmem:[%s428 + $0x18] sm:$0xf]
        %v3455 = vld [vmem:[%s428 + $0x1c] sm:$0xf]
        %v3456 = vld [vmem:[%s428 + $0x20] sm:$0xf]
        %v3457 = vld [vmem:[%s428 + $0x24] sm:$0xf]
        %v3458 = vld [vmem:[%s428 + $0x28] sm:$0xf]
        %v3459 = vld [vmem:[%s428 + $0x2c] sm:$0xf]
        %v3460 = vld [vmem:[%s428 + $0x30] sm:$0x3]
        %s3461 = scalar_lea.vmem %s4, 40
        %v3462 = vld [vmem:[%s3461] sm:$0x3]
        %v3474 = vunpack.c.l.b16 %v3450
        %v3475 = vunpack.c.l.b16 %v3451
        %v3476 = vunpack.c.l.b16 %v3452
        %v3477 = vunpack.c.l.b16 %v3453
        %v3478 = vunpack.c.l.b16 %v3454
        %v3479 = vunpack.c.l.b16 %v3455
        %v3480 = vunpack.c.l.b16 %v3456
        %v3481 = vunpack.c.l.b16 %v3457
        %v3482 = vunpack.c.l.b16 %v3458
        %v3483 = vunpack.c.l.b16 %v3459
        %v3484 = vunpack.c.l.b16 %v3460
        %v3485 = vpack.c.b16 %v3475, %v3474
        %v3486 = vpack.c.b16 %v3477, %v3476
        %v3487 = vpack.c.b16 %v3479, %v3478
        %v3488 = vpack.c.b16 %v3481, %v3480
        %v3489 = vpack.c.b16 %v3483, %v3482
        %v3490 = vpack.c.b16 %v3484, %v3484
        %v3491 = vrot.slane %v3485, 2
        %v3492 = vrot.slane %v3486, 2
        %v3493 = vsel %vm2593, %v3491, %v3492
        %v3494 = vrot.slane %v3487, 2
        %v3495 = vsel %vm2593, %v3492, %v3494
        %v3496 = vrot.slane %v3488, 2
        %v3497 = vsel %vm2593, %v3494, %v3496
        %v3498 = vrot.slane %v3489, 2
        %v3499 = vsel %vm2593, %v3496, %v3498
        %v3500 = vrot.slane %v3490, 2
        %v3501 = vsel %vm2593, %v3498, %v3500
        %v3503 = vsel %vm493, %v3493, 0
        %v3506 = vsel %vm493, %v3495, 0
        %v3509 = vsel %vm493, %v3497, 0
        %v3512 = vsel %vm493, %v3499, 0
        %v3515 = vsel %vm493, %v3501, 0
        %v3518 = vsel %vm509, %v3462, 0
        %3520 = vmatprep.subr.bf16.mxu0 0
        %3521 = vmatpush1.bf16.msra.mxu0 0
        %3522 = vmatprep.subr.bf16.mxu0 0
        %3523 = vmatpush1.bf16.msra.mxu0 0
        %3524 = vmatprep.subr.bf16.mxu0 0
        %3525 = vmatpush1.bf16.msra.mxu0 0
        %3526 = vmatprep.subr.bf16.mxu0 0
        %3527 = vmatpush1.bf16.msra.mxu0 0
        %3528 = vmatprep.subr.bf16.mxu0 0
        %3529 = vmatpush1.bf16.msra.mxu0 0
        %3530 = vmatprep.subr.bf16.mxu0 0
        %3531 = vmatpush1.bf16.msra.mxu0 0
        %3532 = vmatprep.subr.bf16.mxu0 0
        %3533 = vmatpush1.bf16.msra.mxu0 0
        %3534 = vmatprep.subr.bf16.mxu0 0
        %3535 = vmatpush1.bf16.msra.mxu0 %v3518
        %3536 = vmatprep.subr.bf16.mxu0 0
        %3537 = vmatpush2.bf16.msra.mxu0 0
        %3538 = vmatprep.subr.bf16.mxu0 0
        %3539 = vmatpush2.bf16.msra.mxu0 0
        %3540 = vmatprep.subr.bf16.mxu0 0
        %3541 = vmatpush2.bf16.msra.mxu0 0
        %3542 = vmatprep.subr.bf16.mxu0 0
        %3543 = vmatpush2.bf16.msra.mxu0 0
        %3544 = vmatprep.subr.bf16.mxu0 0
        %3545 = vmatpush2.bf16.msra.mxu0 0
        %3546 = vmatprep.subr.bf16.mxu0 0
        %3547 = vmatpush2.bf16.msra.mxu0 0
        %3548 = vmatprep.subr.bf16.mxu0 0
        %3549 = vmatpush2.bf16.msra.mxu0 0
        %3550 = vmatprep.subr.bf16.mxu0 0
        %3551 = vmatpush2.bf16.msra.mxu0 0
        %3552 = vmatprep.mubr.bf16.mxu0 0
        %3553 = vmatmul.mubr.bf16.gmra.mxu0 %v3503
        %v3554 = vpop.f32.mrf.mxu0
        %v3555 = vadd.f32 0.0, %v3554
        %v3556 = vpop.f32.mrf.mxu0
        %v3557 = vpop.f32.mrf.mxu0
        %v3558 = vadd.f32 0.0, %v3557
        %v3559 = vpop.f32.mrf.mxu0
        %3560 = vmatprep.mubr.bf16.mxu0 0
        %3561 = vmatmul.mubr.bf16.gmra.mxu0 %v3506
        %v3562 = vpop.f32.mrf.mxu0
        %v3563 = vadd.f32 0.0, %v3562
        %v3564 = vpop.f32.mrf.mxu0
        %v3565 = vpop.f32.mrf.mxu0
        %v3566 = vadd.f32 0.0, %v3565
        %v3567 = vpop.f32.mrf.mxu0
        %3568 = vmatprep.mubr.bf16.mxu0 0
        %3569 = vmatmul.mubr.bf16.gmra.mxu0 %v3509
        %v3570 = vpop.f32.mrf.mxu0
        %v3571 = vadd.f32 0.0, %v3570
        %v3572 = vpop.f32.mrf.mxu0
        %v3573 = vpop.f32.mrf.mxu0
        %v3574 = vadd.f32 0.0, %v3573
        %v3575 = vpop.f32.mrf.mxu0
        %3576 = vmatprep.mubr.bf16.mxu0 0
        %3577 = vmatmul.mubr.bf16.gmra.mxu0 %v3512
        %v3578 = vpop.f32.mrf.mxu0
        %v3579 = vadd.f32 0.0, %v3578
        %v3580 = vpop.f32.mrf.mxu0
        %v3581 = vpop.f32.mrf.mxu0
        %v3582 = vadd.f32 0.0, %v3581
        %v3583 = vpop.f32.mrf.mxu0
        %3584 = vmatprep.mubr.bf16.mxu0 0
        %3585 = vmatmul.mubr.bf16.gmra.mxu0 %v3515
        %v3586 = vpop.f32.mrf.mxu0
        %v3587 = vadd.f32 0.0, %v3586
        %v3588 = vpop.f32.mrf.mxu0
        %v3589 = vpop.f32.mrf.mxu0
        %v3590 = vadd.f32 0.0, %v3589
        %v3591 = vpop.f32.mrf.mxu0
        %3592 = vdwg.mxu0
        %v3593 = vadd.f32 %v3440, %v3555
        %v3594 = vadd.f32 %v3441, %v3558
        %v3595 = vadd.f32 %v3442, %v3563
        %v3596 = vadd.f32 %v3443, %v3566
        %v3597 = vadd.f32 %v3444, %v3571
        %v3598 = vadd.f32 %v3445, %v3574
        %v3599 = vadd.f32 %v3446, %v3579
        %v3600 = vadd.f32 %v3447, %v3582
        %v3601 = vadd.f32 %v3448, %v3587
        %v3602 = vadd.f32 %v3449, %v3590
        %v3603 = vld [vmem:[%s433 + $0x8] sm:$0xc]
        %v3604 = vld [vmem:[%s433 + $0xc] sm:$0xf]
        %v3605 = vld [vmem:[%s433 + $0x10] sm:$0xf]
        %v3606 = vld [vmem:[%s433 + $0x14] sm:$0xf]
        %v3607 = vld [vmem:[%s433 + $0x18] sm:$0xf]
        %v3608 = vld [vmem:[%s433 + $0x1c] sm:$0xf]
        %v3609 = vld [vmem:[%s433 + $0x20] sm:$0xf]
        %v3610 = vld [vmem:[%s433 + $0x24] sm:$0xf]
        %v3611 = vld [vmem:[%s433 + $0x28] sm:$0xf]
        %v3612 = vld [vmem:[%s433 + $0x2c] sm:$0xf]
        %v3613 = vld [vmem:[%s433 + $0x30] sm:$0x3]
        %s3614 = scalar_lea.vmem %s4, 42
        %v3615 = vld [vmem:[%s3614] sm:$0x3]
        %v3627 = vunpack.c.l.b16 %v3603
        %v3628 = vunpack.c.l.b16 %v3604
        %v3629 = vunpack.c.l.b16 %v3605
        %v3630 = vunpack.c.l.b16 %v3606
        %v3631 = vunpack.c.l.b16 %v3607
        %v3632 = vunpack.c.l.b16 %v3608
        %v3633 = vunpack.c.l.b16 %v3609
        %v3634 = vunpack.c.l.b16 %v3610
        %v3635 = vunpack.c.l.b16 %v3611
        %v3636 = vunpack.c.l.b16 %v3612
        %v3637 = vunpack.c.l.b16 %v3613
        %v3638 = vpack.c.b16 %v3628, %v3627
        %v3639 = vpack.c.b16 %v3630, %v3629
        %v3640 = vpack.c.b16 %v3632, %v3631
        %v3641 = vpack.c.b16 %v3634, %v3633
        %v3642 = vpack.c.b16 %v3636, %v3635
        %v3643 = vpack.c.b16 %v3637, %v3637
        %v3644 = vrot.slane %v3638, 2
        %v3645 = vrot.slane %v3639, 2
        %v3646 = vsel %vm2593, %v3644, %v3645
        %v3647 = vrot.slane %v3640, 2
        %v3648 = vsel %vm2593, %v3645, %v3647
        %v3649 = vrot.slane %v3641, 2
        %v3650 = vsel %vm2593, %v3647, %v3649
        %v3651 = vrot.slane %v3642, 2
        %v3652 = vsel %vm2593, %v3649, %v3651
        %v3653 = vrot.slane %v3643, 2
        %v3654 = vsel %vm2593, %v3651, %v3653
        %v3656 = vsel %vm493, %v3646, 0
        %v3659 = vsel %vm493, %v3648, 0
        %v3662 = vsel %vm493, %v3650, 0
        %v3665 = vsel %vm493, %v3652, 0
        %v3668 = vsel %vm493, %v3654, 0
        %v3671 = vsel %vm509, %v3615, 0
        %3673 = vmatprep.subr.bf16.mxu0 0
        %3674 = vmatpush1.bf16.msra.mxu0 0
        %3675 = vmatprep.subr.bf16.mxu0 0
        %3676 = vmatpush1.bf16.msra.mxu0 0
        %3677 = vmatprep.subr.bf16.mxu0 0
        %3678 = vmatpush1.bf16.msra.mxu0 0
        %3679 = vmatprep.subr.bf16.mxu0 0
        %3680 = vmatpush1.bf16.msra.mxu0 0
        %3681 = vmatprep.subr.bf16.mxu0 0
        %3682 = vmatpush1.bf16.msra.mxu0 0
        %3683 = vmatprep.subr.bf16.mxu0 0
        %3684 = vmatpush1.bf16.msra.mxu0 0
        %3685 = vmatprep.subr.bf16.mxu0 0
        %3686 = vmatpush1.bf16.msra.mxu0 0
        %3687 = vmatprep.subr.bf16.mxu0 0
        %3688 = vmatpush1.bf16.msra.mxu0 %v3671
        %3689 = vmatprep.subr.bf16.mxu0 0
        %3690 = vmatpush2.bf16.msra.mxu0 0
        %3691 = vmatprep.subr.bf16.mxu0 0
        %3692 = vmatpush2.bf16.msra.mxu0 0
        %3693 = vmatprep.subr.bf16.mxu0 0
        %3694 = vmatpush2.bf16.msra.mxu0 0
        %3695 = vmatprep.subr.bf16.mxu0 0
        %3696 = vmatpush2.bf16.msra.mxu0 0
        %3697 = vmatprep.subr.bf16.mxu0 0
        %3698 = vmatpush2.bf16.msra.mxu0 0
        %3699 = vmatprep.subr.bf16.mxu0 0
        %3700 = vmatpush2.bf16.msra.mxu0 0
        %3701 = vmatprep.subr.bf16.mxu0 0
        %3702 = vmatpush2.bf16.msra.mxu0 0
        %3703 = vmatprep.subr.bf16.mxu0 0
        %3704 = vmatpush2.bf16.msra.mxu0 0
        %3705 = vmatprep.mubr.bf16.mxu0 0
        %3706 = vmatmul.mubr.bf16.gmra.mxu0 %v3656
        %v3707 = vpop.f32.mrf.mxu0
        %v3708 = vadd.f32 0.0, %v3707
        %v3709 = vpop.f32.mrf.mxu0
        %v3710 = vpop.f32.mrf.mxu0
        %v3711 = vadd.f32 0.0, %v3710
        %v3712 = vpop.f32.mrf.mxu0
        %3713 = vmatprep.mubr.bf16.mxu0 0
        %3714 = vmatmul.mubr.bf16.gmra.mxu0 %v3659
        %v3715 = vpop.f32.mrf.mxu0
        %v3716 = vadd.f32 0.0, %v3715
        %v3717 = vpop.f32.mrf.mxu0
        %v3718 = vpop.f32.mrf.mxu0
        %v3719 = vadd.f32 0.0, %v3718
        %v3720 = vpop.f32.mrf.mxu0
        %3721 = vmatprep.mubr.bf16.mxu0 0
        %3722 = vmatmul.mubr.bf16.gmra.mxu0 %v3662
        %v3723 = vpop.f32.mrf.mxu0
        %v3724 = vadd.f32 0.0, %v3723
        %v3725 = vpop.f32.mrf.mxu0
        %v3726 = vpop.f32.mrf.mxu0
        %v3727 = vadd.f32 0.0, %v3726
        %v3728 = vpop.f32.mrf.mxu0
        %3729 = vmatprep.mubr.bf16.mxu0 0
        %3730 = vmatmul.mubr.bf16.gmra.mxu0 %v3665
        %v3731 = vpop.f32.mrf.mxu0
        %v3732 = vadd.f32 0.0, %v3731
        %v3733 = vpop.f32.mrf.mxu0
        %v3734 = vpop.f32.mrf.mxu0
        %v3735 = vadd.f32 0.0, %v3734
        %v3736 = vpop.f32.mrf.mxu0
        %3737 = vmatprep.mubr.bf16.mxu0 0
        %3738 = vmatmul.mubr.bf16.gmra.mxu0 %v3668
        %v3739 = vpop.f32.mrf.mxu0
        %v3740 = vadd.f32 0.0, %v3739
        %v3741 = vpop.f32.mrf.mxu0
        %v3742 = vpop.f32.mrf.mxu0
        %v3743 = vadd.f32 0.0, %v3742
        %v3744 = vpop.f32.mrf.mxu0
        %3745 = vdwg.mxu0
        %v3746 = vadd.f32 %v3593, %v3708
        %v3747 = vadd.f32 %v3594, %v3711
        %v3748 = vadd.f32 %v3595, %v3716
        %v3749 = vadd.f32 %v3596, %v3719
        %v3750 = vadd.f32 %v3597, %v3724
        %v3751 = vadd.f32 %v3598, %v3727
        %v3752 = vadd.f32 %v3599, %v3732
        %v3753 = vadd.f32 %v3600, %v3735
        %v3754 = vadd.f32 %v3601, %v3740
        %v3755 = vadd.f32 %v3602, %v3743
        %v3756 = vld [vmem:[%s428 + $0x30] sm:$0x7]
        %s3757 = scalar_lea.vmem %s4, 44
        %v3758 = vld [vmem:[%s3757] sm:$0x3]
        %v3760 = vunpack.c.l.b16 %v3756
        %v3761 = vpack.c.b16 %v3760, %v3760
        %vm3762 = vsmask.f32 5376
        %v3764 = vshrl.u32 %v3485, 16
        %v3766 = vrot.slane %v3764, 2
        %v3767 = vshll.u32 %v3485, 16
        %v3769 = vrot.slane %v3767, 3
        %v3770 = vor.u32 %v3766, %v3769
        %v3772 = vshrl.u32 %v3486, 16
        %v3774 = vrot.slane %v3772, 2
        %v3775 = vshll.u32 %v3486, 16
        %v3777 = vrot.slane %v3775, 3
        %v3778 = vor.u32 %v3774, %v3777
        %v3779 = vsel %vm3762, %v3770, %v3778
        %v3781 = vshrl.u32 %v3487, 16
        %v3783 = vrot.slane %v3781, 2
        %v3784 = vshll.u32 %v3487, 16
        %v3786 = vrot.slane %v3784, 3
        %v3787 = vor.u32 %v3783, %v3786
        %v3788 = vsel %vm3762, %v3778, %v3787
        %v3790 = vshrl.u32 %v3488, 16
        %v3792 = vrot.slane %v3790, 2
        %v3793 = vshll.u32 %v3488, 16
        %v3795 = vrot.slane %v3793, 3
        %v3796 = vor.u32 %v3792, %v3795
        %v3797 = vsel %vm3762, %v3787, %v3796
        %v3799 = vshrl.u32 %v3489, 16
        %v3801 = vrot.slane %v3799, 2
        %v3802 = vshll.u32 %v3489, 16
        %v3804 = vrot.slane %v3802, 3
        %v3805 = vor.u32 %v3801, %v3804
        %v3806 = vsel %vm3762, %v3796, %v3805
        %v3808 = vshrl.u32 %v3761, 16
        %v3810 = vrot.slane %v3808, 2
        %v3811 = vshll.u32 %v3761, 16
        %v3813 = vrot.slane %v3811, 3
        %v3814 = vor.u32 %v3810, %v3813
        %v3815 = vsel %vm3762, %v3805, %v3814
        %v3817 = vsel %vm493, %v3779, 0
        %v3820 = vsel %vm493, %v3788, 0
        %v3823 = vsel %vm493, %v3797, 0
        %v3826 = vsel %vm493, %v3806, 0
        %v3829 = vsel %vm493, %v3815, 0
        %v3832 = vsel %vm509, %v3758, 0
        %3834 = vmatprep.subr.bf16.mxu0 0
        %3835 = vmatpush1.bf16.msra.mxu0 0
        %3836 = vmatprep.subr.bf16.mxu0 0
        %3837 = vmatpush1.bf16.msra.mxu0 0
        %3838 = vmatprep.subr.bf16.mxu0 0
        %3839 = vmatpush1.bf16.msra.mxu0 0
        %3840 = vmatprep.subr.bf16.mxu0 0
        %3841 = vmatpush1.bf16.msra.mxu0 0
        %3842 = vmatprep.subr.bf16.mxu0 0
        %3843 = vmatpush1.bf16.msra.mxu0 0
        %3844 = vmatprep.subr.bf16.mxu0 0
        %3845 = vmatpush1.bf16.msra.mxu0 0
        %3846 = vmatprep.subr.bf16.mxu0 0
        %3847 = vmatpush1.bf16.msra.mxu0 0
        %3848 = vmatprep.subr.bf16.mxu0 0
        %3849 = vmatpush1.bf16.msra.mxu0 %v3832
        %3850 = vmatprep.subr.bf16.mxu0 0
        %3851 = vmatpush2.bf16.msra.mxu0 0
        %3852 = vmatprep.subr.bf16.mxu0 0
        %3853 = vmatpush2.bf16.msra.mxu0 0
        %3854 = vmatprep.subr.bf16.mxu0 0
        %3855 = vmatpush2.bf16.msra.mxu0 0
        %3856 = vmatprep.subr.bf16.mxu0 0
        %3857 = vmatpush2.bf16.msra.mxu0 0
        %3858 = vmatprep.subr.bf16.mxu0 0
        %3859 = vmatpush2.bf16.msra.mxu0 0
        %3860 = vmatprep.subr.bf16.mxu0 0
        %3861 = vmatpush2.bf16.msra.mxu0 0
        %3862 = vmatprep.subr.bf16.mxu0 0
        %3863 = vmatpush2.bf16.msra.mxu0 0
        %3864 = vmatprep.subr.bf16.mxu0 0
        %3865 = vmatpush2.bf16.msra.mxu0 0
        %3866 = vmatprep.mubr.bf16.mxu0 0
        %3867 = vmatmul.mubr.bf16.gmra.mxu0 %v3817
        %v3868 = vpop.f32.mrf.mxu0
        %v3869 = vadd.f32 0.0, %v3868
        %v3870 = vpop.f32.mrf.mxu0
        %v3871 = vpop.f32.mrf.mxu0
        %v3872 = vadd.f32 0.0, %v3871
        %v3873 = vpop.f32.mrf.mxu0
        %3874 = vmatprep.mubr.bf16.mxu0 0
        %3875 = vmatmul.mubr.bf16.gmra.mxu0 %v3820
        %v3876 = vpop.f32.mrf.mxu0
        %v3877 = vadd.f32 0.0, %v3876
        %v3878 = vpop.f32.mrf.mxu0
        %v3879 = vpop.f32.mrf.mxu0
        %v3880 = vadd.f32 0.0, %v3879
        %v3881 = vpop.f32.mrf.mxu0
        %3882 = vmatprep.mubr.bf16.mxu0 0
        %3883 = vmatmul.mubr.bf16.gmra.mxu0 %v3823
        %v3884 = vpop.f32.mrf.mxu0
        %v3885 = vadd.f32 0.0, %v3884
        %v3886 = vpop.f32.mrf.mxu0
        %v3887 = vpop.f32.mrf.mxu0
        %v3888 = vadd.f32 0.0, %v3887
        %v3889 = vpop.f32.mrf.mxu0
        %3890 = vmatprep.mubr.bf16.mxu0 0
        %3891 = vmatmul.mubr.bf16.gmra.mxu0 %v3826
        %v3892 = vpop.f32.mrf.mxu0
        %v3893 = vadd.f32 0.0, %v3892
        %v3894 = vpop.f32.mrf.mxu0
        %v3895 = vpop.f32.mrf.mxu0
        %v3896 = vadd.f32 0.0, %v3895
        %v3897 = vpop.f32.mrf.mxu0
        %3898 = vmatprep.mubr.bf16.mxu0 0
        %3899 = vmatmul.mubr.bf16.gmra.mxu0 %v3829
        %v3900 = vpop.f32.mrf.mxu0
        %v3901 = vadd.f32 0.0, %v3900
        %v3902 = vpop.f32.mrf.mxu0
        %v3903 = vpop.f32.mrf.mxu0
        %v3904 = vadd.f32 0.0, %v3903
        %v3905 = vpop.f32.mrf.mxu0
        %3906 = vdwg.mxu0
        %v3907 = vadd.f32 %v3746, %v3869
        %v3908 = vadd.f32 %v3747, %v3872
        %v3909 = vadd.f32 %v3748, %v3877
        %v3910 = vadd.f32 %v3749, %v3880
        %v3911 = vadd.f32 %v3750, %v3885
        %v3912 = vadd.f32 %v3751, %v3888
        %v3913 = vadd.f32 %v3752, %v3893
        %v3914 = vadd.f32 %v3753, %v3896
        %v3915 = vadd.f32 %v3754, %v3901
        %v3916 = vadd.f32 %v3755, %v3904
        %v3917 = vld [vmem:[%s433 + $0x30] sm:$0x7]
        %s3918 = scalar_lea.vmem %s4, 46
        %v3919 = vld [vmem:[%s3918] sm:$0x3]
        %v3921 = vunpack.c.l.b16 %v3917
        %v3922 = vpack.c.b16 %v3921, %v3921
        %v3924 = vshrl.u32 %v3638, 16
        %v3926 = vrot.slane %v3924, 2
        %v3927 = vshll.u32 %v3638, 16
        %v3929 = vrot.slane %v3927, 3
        %v3930 = vor.u32 %v3926, %v3929
        %v3932 = vshrl.u32 %v3639, 16
        %v3934 = vrot.slane %v3932, 2
        %v3935 = vshll.u32 %v3639, 16
        %v3937 = vrot.slane %v3935, 3
        %v3938 = vor.u32 %v3934, %v3937
        %v3939 = vsel %vm3762, %v3930, %v3938
        %v3941 = vshrl.u32 %v3640, 16
        %v3943 = vrot.slane %v3941, 2
        %v3944 = vshll.u32 %v3640, 16
        %v3946 = vrot.slane %v3944, 3
        %v3947 = vor.u32 %v3943, %v3946
        %v3948 = vsel %vm3762, %v3938, %v3947
        %v3950 = vshrl.u32 %v3641, 16
        %v3952 = vrot.slane %v3950, 2
        %v3953 = vshll.u32 %v3641, 16
        %v3955 = vrot.slane %v3953, 3
        %v3956 = vor.u32 %v3952, %v3955
        %v3957 = vsel %vm3762, %v3947, %v3956
        %v3959 = vshrl.u32 %v3642, 16
        %v3961 = vrot.slane %v3959, 2
        %v3962 = vshll.u32 %v3642, 16
        %v3964 = vrot.slane %v3962, 3
        %v3965 = vor.u32 %v3961, %v3964
        %v3966 = vsel %vm3762, %v3956, %v3965
        %v3968 = vshrl.u32 %v3922, 16
        %v3970 = vrot.slane %v3968, 2
        %v3971 = vshll.u32 %v3922, 16
        %v3973 = vrot.slane %v3971, 3
        %v3974 = vor.u32 %v3970, %v3973
        %v3975 = vsel %vm3762, %v3965, %v3974
        %v3977 = vsel %vm493, %v3939, 0
        %v3980 = vsel %vm493, %v3948, 0
        %v3983 = vsel %vm493, %v3957, 0
        %v3986 = vsel %vm493, %v3966, 0
        %v3989 = vsel %vm493, %v3975, 0
        %v3992 = vsel %vm509, %v3919, 0
        %3994 = vmatprep.subr.bf16.mxu0 0
        %3995 = vmatpush1.bf16.msra.mxu0 0
        %3996 = vmatprep.subr.bf16.mxu0 0
        %3997 = vmatpush1.bf16.msra.mxu0 0
        %3998 = vmatprep.subr.bf16.mxu0 0
        %3999 = vmatpush1.bf16.msra.mxu0 0
        %4000 = vmatprep.subr.bf16.mxu0 0
        %4001 = vmatpush1.bf16.msra.mxu0 0
        %4002 = vmatprep.subr.bf16.mxu0 0
        %4003 = vmatpush1.bf16.msra.mxu0 0
        %4004 = vmatprep.subr.bf16.mxu0 0
        %4005 = vmatpush1.bf16.msra.mxu0 0
        %4006 = vmatprep.subr.bf16.mxu0 0
        %4007 = vmatpush1.bf16.msra.mxu0 0
        %4008 = vmatprep.subr.bf16.mxu0 0
        %4009 = vmatpush1.bf16.msra.mxu0 %v3992
        %4010 = vmatprep.subr.bf16.mxu0 0
        %4011 = vmatpush2.bf16.msra.mxu0 0
        %4012 = vmatprep.subr.bf16.mxu0 0
        %4013 = vmatpush2.bf16.msra.mxu0 0
        %4014 = vmatprep.subr.bf16.mxu0 0
        %4015 = vmatpush2.bf16.msra.mxu0 0
        %4016 = vmatprep.subr.bf16.mxu0 0
        %4017 = vmatpush2.bf16.msra.mxu0 0
        %4018 = vmatprep.subr.bf16.mxu0 0
        %4019 = vmatpush2.bf16.msra.mxu0 0
        %4020 = vmatprep.subr.bf16.mxu0 0
        %4021 = vmatpush2.bf16.msra.mxu0 0
        %4022 = vmatprep.subr.bf16.mxu0 0
        %4023 = vmatpush2.bf16.msra.mxu0 0
        %4024 = vmatprep.subr.bf16.mxu0 0
        %4025 = vmatpush2.bf16.msra.mxu0 0
        %4026 = vmatprep.mubr.bf16.mxu0 0
        %4027 = vmatmul.mubr.bf16.gmra.mxu0 %v3977
        %v4028 = vpop.f32.mrf.mxu0
        %v4029 = vadd.f32 0.0, %v4028
        %v4030 = vpop.f32.mrf.mxu0
        %v4031 = vpop.f32.mrf.mxu0
        %v4032 = vadd.f32 0.0, %v4031
        %v4033 = vpop.f32.mrf.mxu0
        %4034 = vmatprep.mubr.bf16.mxu0 0
        %4035 = vmatmul.mubr.bf16.gmra.mxu0 %v3980
        %v4036 = vpop.f32.mrf.mxu0
        %v4037 = vadd.f32 0.0, %v4036
        %v4038 = vpop.f32.mrf.mxu0
        %v4039 = vpop.f32.mrf.mxu0
        %v4040 = vadd.f32 0.0, %v4039
        %v4041 = vpop.f32.mrf.mxu0
        %4042 = vmatprep.mubr.bf16.mxu0 0
        %4043 = vmatmul.mubr.bf16.gmra.mxu0 %v3983
        %v4044 = vpop.f32.mrf.mxu0
        %v4045 = vadd.f32 0.0, %v4044
        %v4046 = vpop.f32.mrf.mxu0
        %v4047 = vpop.f32.mrf.mxu0
        %v4048 = vadd.f32 0.0, %v4047
        %v4049 = vpop.f32.mrf.mxu0
        %4050 = vmatprep.mubr.bf16.mxu0 0
        %4051 = vmatmul.mubr.bf16.gmra.mxu0 %v3986
        %v4052 = vpop.f32.mrf.mxu0
        %v4053 = vadd.f32 0.0, %v4052
        %v4054 = vpop.f32.mrf.mxu0
        %v4055 = vpop.f32.mrf.mxu0
        %v4056 = vadd.f32 0.0, %v4055
        %v4057 = vpop.f32.mrf.mxu0
        %4058 = vmatprep.mubr.bf16.mxu0 0
        %4059 = vmatmul.mubr.bf16.gmra.mxu0 %v3989
        %v4060 = vpop.f32.mrf.mxu0
        %v4061 = vadd.f32 0.0, %v4060
        %v4062 = vpop.f32.mrf.mxu0
        %v4063 = vpop.f32.mrf.mxu0
        %v4064 = vadd.f32 0.0, %v4063
        %v4065 = vpop.f32.mrf.mxu0
        %4066 = vdwg.mxu0
        %v4067 = vadd.f32 %v3907, %v4029
        %v4068 = vadd.f32 %v3908, %v4032
        %v4069 = vadd.f32 %v3909, %v4037
        %v4070 = vadd.f32 %v3910, %v4040
        %v4071 = vadd.f32 %v3911, %v4045
        %v4072 = vadd.f32 %v3912, %v4048
        %v4073 = vadd.f32 %v3913, %v4053
        %v4074 = vadd.f32 %v3914, %v4056
        %v4075 = vadd.f32 %v3915, %v4061
        %v4076 = vadd.f32 %v3916, %v4064
        %v4077 = vld [vmem:[%s428 + $0x8] sm:$0x8]
        %s4078 = scalar_lea.vmem %s4, 48
        %v4079 = vld [vmem:[%s4078] sm:$0x3]
        %v4081 = vunpack.c.l.b16 %v4077
        %v4082 = vpack.c.b16 %v3475, %v4081
        %vm4083 = vcmask 1044480
        %v4084 = vrot.slane %v4082, 3
        %v4085 = vrot.slane %v3486, 3
        %v4086 = vsel %vm4083, %v4084, %v4085
        %v4087 = vrot.slane %v3487, 3
        %v4088 = vsel %vm4083, %v4085, %v4087
        %v4089 = vrot.slane %v3488, 3
        %v4090 = vsel %vm4083, %v4087, %v4089
        %v4091 = vrot.slane %v3489, 3
        %v4092 = vsel %vm4083, %v4089, %v4091
        %v4093 = vrot.slane %v3761, 3
        %v4094 = vsel %vm4083, %v4091, %v4093
        %v4096 = vsel %vm493, %v4086, 0
        %v4099 = vsel %vm493, %v4088, 0
        %v4102 = vsel %vm493, %v4090, 0
        %v4105 = vsel %vm493, %v4092, 0
        %v4108 = vsel %vm493, %v4094, 0
        %v4111 = vsel %vm509, %v4079, 0
        %4113 = vmatprep.subr.bf16.mxu0 0
        %4114 = vmatpush1.bf16.msra.mxu0 0
        %4115 = vmatprep.subr.bf16.mxu0 0
        %4116 = vmatpush1.bf16.msra.mxu0 0
        %4117 = vmatprep.subr.bf16.mxu0 0
        %4118 = vmatpush1.bf16.msra.mxu0 0
        %4119 = vmatprep.subr.bf16.mxu0 0
        %4120 = vmatpush1.bf16.msra.mxu0 0
        %4121 = vmatprep.subr.bf16.mxu0 0
        %4122 = vmatpush1.bf16.msra.mxu0 0
        %4123 = vmatprep.subr.bf16.mxu0 0
        %4124 = vmatpush1.bf16.msra.mxu0 0
        %4125 = vmatprep.subr.bf16.mxu0 0
        %4126 = vmatpush1.bf16.msra.mxu0 0
        %4127 = vmatprep.subr.bf16.mxu0 0
        %4128 = vmatpush1.bf16.msra.mxu0 %v4111
        %4129 = vmatprep.subr.bf16.mxu0 0
        %4130 = vmatpush2.bf16.msra.mxu0 0
        %4131 = vmatprep.subr.bf16.mxu0 0
        %4132 = vmatpush2.bf16.msra.mxu0 0
        %4133 = vmatprep.subr.bf16.mxu0 0
        %4134 = vmatpush2.bf16.msra.mxu0 0
        %4135 = vmatprep.subr.bf16.mxu0 0
        %4136 = vmatpush2.bf16.msra.mxu0 0
        %4137 = vmatprep.subr.bf16.mxu0 0
        %4138 = vmatpush2.bf16.msra.mxu0 0
        %4139 = vmatprep.subr.bf16.mxu0 0
        %4140 = vmatpush2.bf16.msra.mxu0 0
        %4141 = vmatprep.subr.bf16.mxu0 0
        %4142 = vmatpush2.bf16.msra.mxu0 0
        %4143 = vmatprep.subr.bf16.mxu0 0
        %4144 = vmatpush2.bf16.msra.mxu0 0
        %4145 = vmatprep.mubr.bf16.mxu0 0
        %4146 = vmatmul.mubr.bf16.gmra.mxu0 %v4096
        %v4147 = vpop.f32.mrf.mxu0
        %v4148 = vadd.f32 0.0, %v4147
        %v4149 = vpop.f32.mrf.mxu0
        %v4150 = vpop.f32.mrf.mxu0
        %v4151 = vadd.f32 0.0, %v4150
        %v4152 = vpop.f32.mrf.mxu0
        %4153 = vmatprep.mubr.bf16.mxu0 0
        %4154 = vmatmul.mubr.bf16.gmra.mxu0 %v4099
        %v4155 = vpop.f32.mrf.mxu0
        %v4156 = vadd.f32 0.0, %v4155
        %v4157 = vpop.f32.mrf.mxu0
        %v4158 = vpop.f32.mrf.mxu0
        %v4159 = vadd.f32 0.0, %v4158
        %v4160 = vpop.f32.mrf.mxu0
        %4161 = vmatprep.mubr.bf16.mxu0 0
        %4162 = vmatmul.mubr.bf16.gmra.mxu0 %v4102
        %v4163 = vpop.f32.mrf.mxu0
        %v4164 = vadd.f32 0.0, %v4163
        %v4165 = vpop.f32.mrf.mxu0
        %v4166 = vpop.f32.mrf.mxu0
        %v4167 = vadd.f32 0.0, %v4166
        %v4168 = vpop.f32.mrf.mxu0
        %4169 = vmatprep.mubr.bf16.mxu0 0
        %4170 = vmatmul.mubr.bf16.gmra.mxu0 %v4105
        %v4171 = vpop.f32.mrf.mxu0
        %v4172 = vadd.f32 0.0, %v4171
        %v4173 = vpop.f32.mrf.mxu0
        %v4174 = vpop.f32.mrf.mxu0
        %v4175 = vadd.f32 0.0, %v4174
        %v4176 = vpop.f32.mrf.mxu0
        %4177 = vmatprep.mubr.bf16.mxu0 0
        %4178 = vmatmul.mubr.bf16.gmra.mxu0 %v4108
        %v4179 = vpop.f32.mrf.mxu0
        %v4180 = vadd.f32 0.0, %v4179
        %v4181 = vpop.f32.mrf.mxu0
        %v4182 = vpop.f32.mrf.mxu0
        %v4183 = vadd.f32 0.0, %v4182
        %v4184 = vpop.f32.mrf.mxu0
        %4185 = vdwg.mxu0
        %v4186 = vadd.f32 %v4067, %v4148
        %v4187 = vadd.f32 %v4068, %v4151
        %v4188 = vadd.f32 %v4069, %v4156
        %v4189 = vadd.f32 %v4070, %v4159
        %v4190 = vadd.f32 %v4071, %v4164
        %v4191 = vadd.f32 %v4072, %v4167
        %v4192 = vadd.f32 %v4073, %v4172
        %v4193 = vadd.f32 %v4074, %v4175
        %v4194 = vadd.f32 %v4075, %v4180
        %v4195 = vadd.f32 %v4076, %v4183
        %v4196 = vld [vmem:[%s5] sm:$0x1]
        %v4198 = vlaneseq
        %v4199 = vshrl.u32 %v4198, 7
        %v4200 = vsub.s32 0, %v4199
        %v4201 = vrot.slane %v4196, %v4200
        %v4203 = vadd.f32 %v4186, %v4201
        %v4204 = vadd.f32 %v4187, %v4201
        %v4205 = vadd.f32 %v4188, %v4201
        %v4206 = vadd.f32 %v4189, %v4201
        %v4207 = vadd.f32 %v4190, %v4201
        %v4208 = vadd.f32 %v4191, %v4201
        %v4209 = vadd.f32 %v4192, %v4201
        %v4210 = vadd.f32 %v4193, %v4201
        %v4211 = vadd.f32 %v4194, %v4201
        %v4212 = vadd.f32 %v4195, %v4201
        %v4213 = vmax.f32 %v4203, 0.0
        %v4214 = vmax.f32 %v4204, 0.0
        %v4215 = vmax.f32 %v4205, 0.0
        %v4216 = vmax.f32 %v4206, 0.0
        %v4217 = vmax.f32 %v4207, 0.0
        %v4218 = vmax.f32 %v4208, 0.0
        %v4219 = vmax.f32 %v4209, 0.0
        %v4220 = vmax.f32 %v4210, 0.0
        %v4221 = vmax.f32 %v4211, 0.0
        %v4222 = vmax.f32 %v4212, 0.0
        %v4223 = vld [vmem:[%s6] sm:$0x1]
        %v4225 = vlaneseq
        %v4226 = vshrl.u32 %v4225, 7
        %v4227 = vsub.s32 0, %v4226
        %v4228 = vrot.slane %v4223, %v4227
        %v4230 = vmul.f32 %v4213, %v4228
        %v4231 = vmul.f32 %v4214, %v4228
        %v4232 = vmul.f32 %v4215, %v4228
        %v4233 = vmul.f32 %v4216, %v4228
        %v4234 = vmul.f32 %v4217, %v4228
        %v4235 = vmul.f32 %v4218, %v4228
        %v4236 = vmul.f32 %v4219, %v4228
        %v4237 = vmul.f32 %v4220, %v4228
        %v4238 = vmul.f32 %v4221, %v4228
        %v4239 = vmul.f32 %v4222, %v4228
        %v4240 = vld [vmem:[%s7] sm:$0x1]
        %v4242 = vlaneseq
        %v4243 = vshrl.u32 %v4242, 7
        %v4244 = vsub.s32 0, %v4243
        %v4245 = vrot.slane %v4240, %v4244
        %v4247 = vadd.f32 %v4230, %v4245
        %v4248 = vadd.f32 %v4231, %v4245
        %v4249 = vadd.f32 %v4232, %v4245
        %v4250 = vadd.f32 %v4233, %v4245
        %v4251 = vadd.f32 %v4234, %v4245
        %v4252 = vadd.f32 %v4235, %v4245
        %v4253 = vadd.f32 %v4236, %v4245
        %v4254 = vadd.f32 %v4237, %v4245
        %v4255 = vadd.f32 %v4238, %v4245
        %v4256 = vadd.f32 %v4239, %v4245
        %v4257 = vld [vmem:[%s8] sm:$0xff]
        %v4258 = vld [vmem:[%s8 + $0x8] sm:$0xff]
        %v4259 = vld [vmem:[%s8 + $0x10] sm:$0xff]
        %v4260 = vld [vmem:[%s8 + $0x18] sm:$0xff]
        %v4261 = vld [vmem:[%s8 + $0x20] sm:$0xff]
        %v4262 = vld [vmem:[%s8 + $0x28] sm:$0xff]
        %v4263 = vld [vmem:[%s8 + $0x30] sm:$0xff]
        %v4264 = vld [vmem:[%s8 + $0x38] sm:$0xff]
        %v4265 = vld [vmem:[%s8 + $0x40] sm:$0xff]
        %v4266 = vld [vmem:[%s8 + $0x48] sm:$0xff]
        %4268 = vset.pattern.permute.xlu0 0
        %4269 = vperm.xlu0 %4268, %v4257
        %v4270 = vpop.permute.xlu0 %4269
        %4273 = vset.pattern.permute.xlu0 0
        %4274 = vperm.xlu0 %4273, %v4258
        %v4275 = vpop.permute.xlu0 %4274
        %4278 = vset.pattern.permute.xlu0 0
        %4279 = vperm.xlu0 %4278, %v4259
        %v4280 = vpop.permute.xlu0 %4279
        %4283 = vset.pattern.permute.xlu0 0
        %4284 = vperm.xlu0 %4283, %v4260
        %v4285 = vpop.permute.xlu0 %4284
        %4288 = vset.pattern.permute.xlu0 0
        %4289 = vperm.xlu0 %4288, %v4261
        %v4290 = vpop.permute.xlu0 %4289
        %4293 = vset.pattern.permute.xlu0 0
        %4294 = vperm.xlu0 %4293, %v4262
        %v4295 = vpop.permute.xlu0 %4294
        %4298 = vset.pattern.permute.xlu0 0
        %4299 = vperm.xlu0 %4298, %v4263
        %v4300 = vpop.permute.xlu0 %4299
        %4303 = vset.pattern.permute.xlu0 0
        %4304 = vperm.xlu0 %4303, %v4264
        %v4305 = vpop.permute.xlu0 %4304
        %4308 = vset.pattern.permute.xlu0 0
        %4309 = vperm.xlu0 %4308, %v4265
        %v4310 = vpop.permute.xlu0 %4309
        %4313 = vset.pattern.permute.xlu0 0
        %4314 = vperm.xlu0 %4313, %v4266
        %v4315 = vpop.permute.xlu0 %4314
        %v4317 = vmul.f32 %v4247, %v4270
        %v4318 = vmul.f32 %v4248, %v4275
        %v4319 = vmul.f32 %v4249, %v4280
        %v4320 = vmul.f32 %v4250, %v4285
        %v4321 = vmul.f32 %v4251, %v4290
        %v4322 = vmul.f32 %v4252, %v4295
        %v4323 = vmul.f32 %v4253, %v4300
        %v4324 = vmul.f32 %v4254, %v4305
        %v4325 = vmul.f32 %v4255, %v4310
        %v4326 = vmul.f32 %v4256, %v4315
        %v4327 = vadd.f32 %v4317, %v4318
        %v4328 = vadd.f32 %v4327, %v4319
        %v4329 = vadd.f32 %v4328, %v4320
        %v4330 = vadd.f32 %v4329, %v4321
        %v4331 = vadd.f32 %v4330, %v4322
        %v4332 = vadd.f32 %v4331, %v4323
        %v4333 = vadd.f32 %v4332, %v4324
        %v4334 = vadd.f32 %v4333, %v4325
        %v4335 = vadd.f32 %v4334, %v4326
        %v4336 = vrot.slane %v4335, 4
        %v4337 = vadd.f32 %v4335, %v4336
        %v4338 = vrot.slane %v4337, 2
        %v4339 = vadd.f32 %v4337, %v4338
        %v4340 = vrot.slane %v4339, 1
        %v4341 = vadd.f32 %v4339, %v4340
        %v4342 = vmul.f32 %v4341, 0.015625
        %v4343 = vpack.c.bf16 %v4342, %v4342
        %v4344 = vld [vmem:[%s9] sm:$0xf]
        %v4345 = vld [vmem:[%s9 + $0x4] sm:$0xf]
        %v4346 = vld [vmem:[%s9 + $0x8] sm:$0xf]
        %v4347 = vld [vmem:[%s9 + $0xc] sm:$0xf]
        %v4348 = vld [vmem:[%s9 + $0x10] sm:$0xf]
        %v4349 = vld [vmem:[%s9 + $0x14] sm:$0xf]
        %v4350 = vld [vmem:[%s9 + $0x18] sm:$0xf]
        %v4351 = vld [vmem:[%s9 + $0x1c] sm:$0xf]
        %v4352 = vld [vmem:[%s9 + $0x20] sm:$0xf]
        %v4353 = vld [vmem:[%s9 + $0x24] sm:$0xf]
        %v4354 = vld [vmem:[%s9 + $0x28] sm:$0xf]
        %v4355 = vld [vmem:[%s9 + $0x2c] sm:$0xf]
        %v4356 = vld [vmem:[%s9 + $0x30] sm:$0xf]
        %v4357 = vld [vmem:[%s9 + $0x34] sm:$0xf]
        %v4358 = vld [vmem:[%s9 + $0x38] sm:$0xf]
        %v4359 = vld [vmem:[%s9 + $0x3c] sm:$0xf]
        %v4360 = vld [vmem:[%s10] sm:$0x1]
        %v4377 = vunpack.c.l.b16 %v4344
        %v4378 = vunpack.c.l.b16 %v4345
        %v4379 = vunpack.c.l.b16 %v4346
        %v4380 = vunpack.c.l.b16 %v4347
        %v4381 = vunpack.c.l.b16 %v4348
        %v4382 = vunpack.c.l.b16 %v4349
        %v4383 = vunpack.c.l.b16 %v4350
        %v4384 = vunpack.c.l.b16 %v4351
        %v4385 = vunpack.c.l.b16 %v4352
        %v4386 = vunpack.c.l.b16 %v4353
        %v4387 = vunpack.c.l.b16 %v4354
        %v4388 = vunpack.c.l.b16 %v4355
        %v4389 = vunpack.c.l.b16 %v4356
        %v4390 = vunpack.c.l.b16 %v4357
        %v4391 = vunpack.c.l.b16 %v4358
        %v4392 = vunpack.c.l.b16 %v4359
        %v4393 = vpack.c.b16 %v4378, %v4377
        %v4394 = vpack.c.b16 %v4380, %v4379
        %v4395 = vpack.c.b16 %v4382, %v4381
        %v4396 = vpack.c.b16 %v4384, %v4383
        %v4397 = vpack.c.b16 %v4386, %v4385
        %v4398 = vpack.c.b16 %v4388, %v4387
        %v4399 = vpack.c.b16 %v4390, %v4389
        %v4400 = vpack.c.b16 %v4392, %v4391
        %4409 = vmatprep.subr.bf16.mxu0 0
        %4410 = vmatpush1.bf16.msra.mxu0 %v4400
        %4411 = vmatprep.subr.bf16.mxu0 0
        %4412 = vmatpush1.bf16.msra.mxu0 %v4399
        %4413 = vmatprep.subr.bf16.mxu0 0
        %4414 = vmatpush1.bf16.msra.mxu0 %v4398
        %4415 = vmatprep.subr.bf16.mxu0 0
        %4416 = vmatpush1.bf16.msra.mxu0 %v4397
        %4417 = vmatprep.subr.bf16.mxu0 0
        %4418 = vmatpush1.bf16.msra.mxu0 %v4396
        %4419 = vmatprep.subr.bf16.mxu0 0
        %4420 = vmatpush1.bf16.msra.mxu0 %v4395
        %4421 = vmatprep.subr.bf16.mxu0 0
        %4422 = vmatpush1.bf16.msra.mxu0 %v4394
        %4423 = vmatprep.subr.bf16.mxu0 0
        %4424 = vmatpush1.bf16.msra.mxu0 %v4393
        %4425 = vmatprep.subr.bf16.mxu0 0
        %4426 = vmatpush2.bf16.msra.mxu0 0
        %4427 = vmatprep.subr.bf16.mxu0 0
        %4428 = vmatpush2.bf16.msra.mxu0 0
        %4429 = vmatprep.subr.bf16.mxu0 0
        %4430 = vmatpush2.bf16.msra.mxu0 0
        %4431 = vmatprep.subr.bf16.mxu0 0
        %4432 = vmatpush2.bf16.msra.mxu0 0
        %4433 = vmatprep.subr.bf16.mxu0 0
        %4434 = vmatpush2.bf16.msra.mxu0 0
        %4435 = vmatprep.subr.bf16.mxu0 0
        %4436 = vmatpush2.bf16.msra.mxu0 0
        %4437 = vmatprep.subr.bf16.mxu0 0
        %4438 = vmatpush2.bf16.msra.mxu0 0
        %4439 = vmatprep.subr.bf16.mxu0 0
        %4440 = vmatpush2.bf16.msra.mxu0 0
        %4441 = vmatprep.mubr.bf16.mxu0 0
        %4442 = vmatmul.mubr.bf16.gmra.mxu0 %v4343
        %v4443 = vpop.f32.mrf.mxu0
        %v4444 = vadd.f32 %v4360, %v4443
        %v4445 = vpop.f32.mrf.mxu0
        %v4446 = vpop.f32.mrf.mxu0
        %v4447 = vpop.f32.mrf.mxu0
        %4448 = vdwg.mxu0
        %4449 = vst [vmem:[%s423] sm:$0x1] %v4444
        %s4450 = sand.u32 %s284, 1
        %s4451 = scalar_lea.sflag [#allocation3], %s4450
        %s4452 = sand.u32 %s284, 1
        %s4453 = scalar_lea.vmem [#allocation2], %s4452
        // Predicated region
        $region65: #{foo_forward.1} parent=63 // pred_check
          %p4454 = pneg %p294
        $region66: #{foo_forward.1} parent=63 // pred_check_branch
          %4456 = sbr.rel (%p4454) target = $region68
        $region67: #{foo_forward.1} parent=63 // pred_region
          %s4458 = ssub.s32 16, 16
          %4459 = vsyncadd %s4451, %s4458
          %s4460 = smul.addr %s25, 16
          %s4461 = scalar_lea.hbm %s11, %s4460
          %s4463 = sshll.u32 %s4453, 4
          %s4464 = int_to_ptr.vmem [resolvable:$true] %s4463
          %4466 = dma.vmem_to_hbm [thread:$0]  %s4464, 16, %s4461, %s4451
        $region68: #{foo_forward.1} parent=63 // pred_fallthru
          _
      $region64: #{foo_forward.1} parent=5 // pred_fallthru
        _
      %p4467 = scmp.le.s32.totalorder 2, %s20
      // Predicated region
      $region69: #{foo_forward.1} parent=5 // pred_check
        %p4468 = pneg %p4467
      $region70: #{foo_forward.1} parent=5 // pred_check_branch
        %4470 = sbr.rel (%p4468) target = $region72
      $region71: #{foo_forward.1} parent=5 // pred_region
        %s4471 = ssub.s32 %s20, 2
        // Predicated region
        $region73: #{foo_forward.1} parent=71 // pred_check
          %p4472 = pneg %p300
        $region74: #{foo_forward.1} parent=71 // pred_check_branch
          %4474 = sbr.rel (%p4472) target = $region76
        $region75: #{foo_forward.1} parent=71 // pred_region
          %s4475 = sand.u32 %s285, 1
          %s4476 = scalar_lea.sflag [#allocation3], %s4475
          %s4477 = sand.u32 %s285, 1
          %s4478 = scalar_lea.vmem [#allocation2], %s4477
          %4479 = dma.done %s4476, 16
        $region76: #{foo_forward.1} parent=71 // pred_fallthru
          _
      $region72: #{foo_forward.1} parent=5 // pred_fallthru
        _
    $region6: #{foo_forward.1} parent=1 // loop_footer
      %s24 = sadd.s32 1, %s20
    $region7: #{foo_forward.1} parent=1 // loop_footer_branch
      %19 = sbr.rel target = $region3
    $region8: #{foo_forward.1} parent=1 // loop_exit
      _
    %4480 = vsyncpa [#allocation3], 1
    %s4481 = scalar_lea.sflag [#allocation3], 1
    %4482 = vsyncpa %s4481, 1

</llo_original>
